<compile_context>
chip_gen: v7x
topology: tpu7x:2x2x1
jax: 0.10.0
libtpu: 0.0.40
codegen_flags: <defaults>
</compile_context>

<pallas_src>
import functools
import math

import numpy as np

import jax
import jax.numpy as jnp
from jax import lax
from jax.experimental import pallas as pl
from jax.experimental.pallas import tpu as pltpu

KSIZE = 3
EPS = 1e-5


def _is_pow2(n):
    return n >= 1 and (n & (n - 1)) == 0


# --------------------------- fused Pallas kernel ----------------------------

def _make_cnn_kernel(conv_dims, n_fc):
    """conv_dims: tuple of (H, W, Cin, Cout) per conv layer (static)."""
    n_conv = len(conv_dims)

    def kernel(*refs):
        # refs = (x, [w, shift] * n_conv, [w, shift] * n_fc, out,
        #         [tap_buf, pool_buf, cmp_buf] * n_conv)
        x_ref = refs[0]
        pos = 1
        conv_refs = []
        for _ in range(n_conv):
            conv_refs.append((refs[pos], refs[pos + 1]))
            pos += 2
        fc_refs = []
        for _ in range(n_fc):
            fc_refs.append((refs[pos], refs[pos + 1]))
            pos += 2
        o_ref = refs[pos]
        scratch = refs[pos + 1:]

        x = x_ref[0]  # (H*W, Cin) f32 — one image per grid step
        for li, ((H, W, Cin, Cout), (w_ref, sh_ref)) in enumerate(
                zip(conv_dims, conv_refs)):
            tap_ref, pool_ref, cmp_ref = scratch[3 * li: 3 * li + 3]
            M = H * W
            Ho, Wo = H // 2, W // 2
            log2w = int(math.log2(W))

            # Hoisted boundary predicates: one (M, 1) iota, 3 row + 3 col masks.
            pidx = lax.broadcasted_iota(jnp.int32, (M, 1), 0)
            hh = pidx >> log2w                      # row h of this flat row
            ww = pidx & (W - 1)                     # col w of this flat row
            row_ok = {-1: hh >= 1, 0: None, 1: hh < (H - 1)}
            col_ok = {-1: ww >= 1, 0: None, 1: ww < (W - 1)}

            # im2col: 9 shifted/masked taps written into the VMEM tap buffer,
            # then ONE (M, 9*Cin) x (9*Cin, Cout) bf16 MXU dot.
            for dy in range(KSIZE):
                for dx in range(KSIZE):
                    sy, sx = dy - 1, dx - 1
                    s = sy * W + sx                 # flat shift of this tap
                    xt = x if s == 0 else pltpu.roll(x, (-s) % M, axis=0)
                    rm, cm = row_ok[sy], col_ok[sx]
                    if rm is None and cm is None:
                        mask = None
                    elif rm is None:
                        mask = cm
                    elif cm is None:
                        mask = rm
                    else:
                        mask = jnp.logical_and(rm, cm)
                    if mask is not None:
                        xt = jnp.where(mask, xt, 0.0)
                    t = dy * KSIZE + dx
                    tap_ref[:, pl.ds(t * Cin, Cin)] = xt
            acc = jnp.dot(tap_ref[...].astype(jnp.bfloat16), w_ref[...],
                          preferred_element_type=jnp.float32)

            # folded-BN shift + ReLU (BN scale is pre-folded into the weights).
            y = jnp.maximum(acc + sh_ref[...], 0.0)          # (M, Cout) f32

            # fused 2x2/stride-2 maxpool: two rolls + max (taps +0,+1,+W,+W+1
            # anchored at even (h, w)), then compact the anchor rows with
            # strided sublane reads from a VMEM scratch buffer.
            rowpair = jnp.maximum(y, pltpu.roll(y, M - 1, axis=0))
            m = jnp.maximum(rowpair, pltpu.roll(rowpair, M - W, axis=0))
            pool_ref[...] = m
            for ho in range(Ho):
                src = (pl.ds(2 * ho * W, Wo, stride=2) if Wo > 1
                       else pl.ds(2 * ho * W, 1))
                cmp_ref[pl.ds(ho * Wo, Wo), :] = pool_ref[src, :]
            x = cmp_ref[...]                                 # (Ho*Wo, Cout)

        # Final spatial map is 1x1, so x already equals torch.flatten(x, 1)
        # for this image.
        for li, (w_ref, sh_ref) in enumerate(fc_refs):
            x = jnp.dot(x.astype(jnp.bfloat16), w_ref[...],
                        preferred_element_type=jnp.float32) + sh_ref[...]
            if li < n_fc - 1:
                x = jnp.maximum(x, 0.0)
            # TODO(synk): nn.Dropout(p=0.3) is the inference-mode identity here.
        o_ref[0] = x.astype(o_ref.dtype)

    return kernel


# ------------------------------ host-side glue ------------------------------

def _fold_params(params, H, W, Cin):
    """Fold BN into bf16 weights / f32 shifts and build the operand list."""
    conv_inputs, conv_dims = [], []
    h, w, cin = H, W, Cin
    for (wconv, b, gamma, beta, mean, var) in params["convs"]:
        assert _is_pow2(h) and _is_pow2(w) and h >= 2 and w >= 2
        cout = wconv.shape[-1]
        scale = gamma / jnp.sqrt(var + EPS)
        w_f = (wconv * scale).reshape(KSIZE * KSIZE * cin, cout)
        shift = (beta + (b - mean) * scale)[None, :]
        conv_inputs += [w_f.astype(jnp.bfloat16), shift.astype(jnp.float32)]
        conv_dims.append((h, w, cin, cout))
        h, w, cin = h // 2, w // 2, cout

    fc_inputs = []
    for (wfc, b, gamma, beta, mean, var) in params["fcs"][:-1]:
        scale = gamma / jnp.sqrt(var + EPS)
        fc_inputs += [(wfc * scale).astype(jnp.bfloat16),
                      ((beta + (b - mean) * scale)[None, :]).astype(jnp.float32)]
    w_last, b_last = params["fcs"][-1]
    fc_inputs += [w_last.astype(jnp.bfloat16),
                  b_last[None, :].astype(jnp.float32)]

    return conv_inputs, fc_inputs, tuple(conv_dims), (h, w, cin)


def _const_index_map(ndim):
    def index_map(n):
        return (0,) * ndim
    return index_map


def cnn_forward(x_nchw, params):
    """x_nchw: (N, Ch, H, W) -> logits (N, n_classes). Single fused pallas_call."""
    x = jnp.transpose(x_nchw, (0, 2, 3, 1)).astype(jnp.float32)  # NCHW -> NHWC
    N, H, W, Cin = x.shape
    x3d = x.reshape(N, H * W, Cin)                               # one image per grid step

    conv_inputs, fc_inputs, conv_dims, (hf, wf, _) = _fold_params(params, H, W, Cin)
    # torch.flatten(x, 1) on NCHW; with a 1x1 final map the per-image (1, C)
    # result of the conv stack is already the flattened tensor.
    assert hf == 1 and wf == 1, "fused flatten assumes a 1x1 final feature map"
    # TODO(synk): a >1x1 final map would need a CHW permutation of fc1's rows.

    n_classes = params["fcs"][-1][0].shape[1]
    n_fc = len(params["fcs"])
    param_inputs = conv_inputs + fc_inputs
    kernel = _make_cnn_kernel(conv_dims, n_fc)

    scratch_shapes = []
    for (h, w, cin, cout) in conv_dims:
        scratch_shapes += [
            pltpu.VMEM((h * w, KSIZE * KSIZE * cin), jnp.float32),  # im2col taps
            pltpu.VMEM((h * w, cout), jnp.float32),                 # pre-compaction pool
            pltpu.VMEM((h * w // 4, cout), jnp.float32),            # compacted pool
        ]

    grid_spec = pltpu.PrefetchScalarGridSpec(
        num_scalar_prefetch=0,
        grid=(N,),                                                  # one image per step
        in_specs=[pl.BlockSpec((1, H * W, Cin), lambda n: (n, 0, 0))]
        + [pl.BlockSpec(a.shape, _const_index_map(a.ndim)) for a in param_inputs],
        out_specs=pl.BlockSpec((1, 1, n_classes), lambda n: (n, 0, 0)),
        scratch_shapes=scratch_shapes,
    )
    out = pl.pallas_call(
        kernel,
        grid_spec=grid_spec,
        out_shape=jax.ShapeDtypeStruct((N, 1, n_classes), jnp.float32),
        compiler_params=pltpu.CompilerParams(
            dimension_semantics=("parallel",),      # images are independent (v7x: both TCs)
            vmem_limit_bytes=32 * 1024 * 1024),
    )(x3d, *param_inputs)
    return out.reshape(N, n_classes)


# ----------------------- pure-XLA reference (validation) --------------------

def cnn_reference(x_nchw, params):
    """Same math, unfused; matmul/conv operands in bf16 like the kernel."""
    x = x_nchw.astype(jnp.float32)
    for (w, b, gamma, beta, mean, var) in params["convs"]:
        x = lax.conv_general_dilated(
            x.astype(jnp.bfloat16), w.astype(jnp.bfloat16),
            window_strides=(1, 1), padding="SAME",
            dimension_numbers=("NCHW", "HWIO", "NCHW"),
            preferred_element_type=jnp.float32)
        x = x + b[None, :, None, None]
        x = (x - mean[None, :, None, None]) / jnp.sqrt(var[None, :, None, None] + EPS)
        x = x * gamma[None, :, None, None] + beta[None, :, None, None]
        x = jnp.maximum(x, 0.0)
        x = lax.reduce_window(x, -jnp.inf, lax.max,
                              (1, 1, 2, 2), (1, 1, 2, 2), "VALID")
    x = x.reshape(x.shape[0], -1)
    for (w, b, gamma, beta, mean, var) in params["fcs"][:-1]:
        x = jnp.dot(x.astype(jnp.bfloat16), w.astype(jnp.bfloat16),
                    preferred_element_type=jnp.float32) + b
        x = (x - mean) / jnp.sqrt(var + EPS) * gamma + beta
        x = jnp.maximum(x, 0.0)
    w3, b3 = params["fcs"][-1]
    return jnp.dot(x.astype(jnp.bfloat16), w3.astype(jnp.bfloat16),
                   preferred_element_type=jnp.float32) + b3


# --------------------------------- params ------------------------------------

def init_params(key, input_channels, n_classes, filters, features):
    keys = iter(jax.random.split(key, 64))

    def nrm(shape, s=0.05):
        return s * jax.random.normal(next(keys), shape, jnp.float32)

    convs = []
    cin = input_channels
    for f in filters:
        w = nrm((KSIZE, KSIZE, cin, f))                 # HWIO
        b = nrm((f,))
        gamma = 1.0 + nrm((f,), 0.1)
        beta = nrm((f,), 0.1)
        mean = nrm((f,), 0.1)
        var = jnp.abs(jax.random.normal(next(keys), (f,), jnp.float32)) + 0.5
        convs.append((w, b, gamma, beta, mean, var))
        cin = f

    # Module: dim = dim_x // (kernel_size - 1)**4; for dim_x = 16 the final map
    # is 1x1, so in_features == filters[-1].
    fcs = []
    d = filters[-1]
    for f in features:
        w = nrm((d, f))
        b = nrm((f,))
        gamma = 1.0 + nrm((f,), 0.1)
        beta = nrm((f,), 0.1)
        mean = nrm((f,), 0.1)
        var = jnp.abs(jax.random.normal(next(keys), (f,), jnp.float32)) + 0.5
        fcs.append((w, b, gamma, beta, mean, var))
        d = f
    fcs.append((nrm((d, n_classes)), nrm((n_classes,))))  # fc3: plain linear
    return {"convs": convs, "fcs": fcs}


if __name__ == "__main__":
    key = jax.random.PRNGKey(0)
    kx, kp = jax.random.split(key)

    N, C, H, W = 2, 4, 16, 16
    filters = (8, 16, 32, 64)
    features = (32, 16)
    n_classes = 10

    x = jax.random.normal(kx, (N, C, H, W), jnp.float32)
    params = init_params(kp, C, n_classes, filters, features)

    fwd = jax.jit(functools.partial(cnn_forward, params=params))
    logits = fwd(x)
    jax.block_until_ready(logits)
    assert logits.shape == (N, n_classes), logits.shape

    ref = jax.jit(functools.partial(cnn_reference, params=params))(x)
    np.testing.assert_allclose(np.asarray(logits), np.asarray(ref),
                               rtol=5e-2, atol=2e-2)

    print("KERNEL_OK")
</pallas_src>

<mosaic_0001>
module attributes {stable_mosaic.version = 11 : i64} {
  func.func @kernel(%arg0: i32, %arg1: memref<1x256x4xf32, #tpu.memory_space<vmem>>, %arg2: memref<36x8xbf16, #tpu.memory_space<vmem>>, %arg3: memref<1x8xf32, #tpu.memory_space<vmem>>, %arg4: memref<72x16xbf16, #tpu.memory_space<vmem>>, %arg5: memref<1x16xf32, #tpu.memory_space<vmem>>, %arg6: memref<144x32xbf16, #tpu.memory_space<vmem>>, %arg7: memref<1x32xf32, #tpu.memory_space<vmem>>, %arg8: memref<288x64xbf16, #tpu.memory_space<vmem>>, %arg9: memref<1x64xf32, #tpu.memory_space<vmem>>, %arg10: memref<64x32xbf16, #tpu.memory_space<vmem>>, %arg11: memref<1x32xf32, #tpu.memory_space<vmem>>, %arg12: memref<32x16xbf16, #tpu.memory_space<vmem>>, %arg13: memref<1x16xf32, #tpu.memory_space<vmem>>, %arg14: memref<16x10xbf16, #tpu.memory_space<vmem>>, %arg15: memref<1x10xf32, #tpu.memory_space<vmem>>, %arg16: memref<1x1x10xf32, #tpu.memory_space<vmem>>, %arg17: memref<256x36xf32, #tpu.memory_space<vmem>>, %arg18: memref<256x8xf32, #tpu.memory_space<vmem>>, %arg19: memref<64x8xf32, #tpu.memory_space<vmem>>, %arg20: memref<64x72xf32, #tpu.memory_space<vmem>>, %arg21: memref<64x16xf32, #tpu.memory_space<vmem>>, %arg22: memref<16x16xf32, #tpu.memory_space<vmem>>, %arg23: memref<16x144xf32, #tpu.memory_space<vmem>>, %arg24: memref<16x32xf32, #tpu.memory_space<vmem>>, %arg25: memref<4x32xf32, #tpu.memory_space<vmem>>, %arg26: memref<4x288xf32, #tpu.memory_space<vmem>>, %arg27: memref<4x64xf32, #tpu.memory_space<vmem>>, %arg28: memref<1x64xf32, #tpu.memory_space<vmem>>) attributes {dimension_semantics = [#tpu.dimension_semantics<parallel>], iteration_bounds = array<i64: 2>, scalar_prefetch = 0 : i64, scratch_operands = 12 : i64, tpu.core_type = #tpu.core_type<tc>, window_params = [{transform_indices = @transform_0, window_bounds = array<i64: 1, 256, 4>}, {pipeline_mode = #tpu.pipeline_mode<synchronous>, transform_indices = @transform_1, window_bounds = array<i64: 36, 8>}, {pipeline_mode = #tpu.pipeline_mode<synchronous>, transform_indices = @transform_2, window_bounds = array<i64: 1, 8>}, {pipeline_mode = #tpu.pipeline_mode<synchronous>, transform_indices = @transform_3, window_bounds = array<i64: 72, 16>}, {pipeline_mode = #tpu.pipeline_mode<synchronous>, transform_indices = @transform_4, window_bounds = array<i64: 1, 16>}, {pipeline_mode = #tpu.pipeline_mode<synchronous>, transform_indices = @transform_5, window_bounds = array<i64: 144, 32>}, {pipeline_mode = #tpu.pipeline_mode<synchronous>, transform_indices = @transform_6, window_bounds = array<i64: 1, 32>}, {pipeline_mode = #tpu.pipeline_mode<synchronous>, transform_indices = @transform_7, window_bounds = array<i64: 288, 64>}, {pipeline_mode = #tpu.pipeline_mode<synchronous>, transform_indices = @transform_8, window_bounds = array<i64: 1, 64>}, {pipeline_mode = #tpu.pipeline_mode<synchronous>, transform_indices = @transform_9, window_bounds = array<i64: 64, 32>}, {pipeline_mode = #tpu.pipeline_mode<synchronous>, transform_indices = @transform_10, window_bounds = array<i64: 1, 32>}, {pipeline_mode = #tpu.pipeline_mode<synchronous>, transform_indices = @transform_11, window_bounds = array<i64: 32, 16>}, {pipeline_mode = #tpu.pipeline_mode<synchronous>, transform_indices = @transform_12, window_bounds = array<i64: 1, 16>}, {pipeline_mode = #tpu.pipeline_mode<synchronous>, transform_indices = @transform_13, window_bounds = array<i64: 16, 10>}, {pipeline_mode = #tpu.pipeline_mode<synchronous>, transform_indices = @transform_14, window_bounds = array<i64: 1, 10>}, {transform_indices = @transform_15, window_bounds = array<i64: 1, 1, 10>}]} {
    %c0 = arith.constant 0 : index
    %c0_0 = arith.constant 0 : index
    %c0_1 = arith.constant 0 : index
    %0 = vector.load %arg1[%c0, %c0_0, %c0_1] : memref<1x256x4xf32, #tpu.memory_space<vmem>>, vector<1x256x4xf32>
    %1 = vector.shape_cast %0 : vector<1x256x4xf32> to vector<256x4xf32>
    %2 = tpu.iota {dimensions = array<i32: 0>} : vector<256x1xi32>
    %c4_i32 = arith.constant 4 : i32
    %3 = vector.broadcast %c4_i32 : i32 to vector<256x1xi32>
    %4 = arith.shrsi %2, %3 : vector<256x1xi32>
    %c15_i32 = arith.constant 15 : i32
    %5 = vector.broadcast %c15_i32 : i32 to vector<256x1xi32>
    %6 = arith.andi %2, %5 : vector<256x1xi32>
    %c1_i32 = arith.constant 1 : i32
    %7 = vector.broadcast %c1_i32 : i32 to vector<256x1xi32>
    %8 = arith.cmpi sge, %4, %7 : vector<256x1xi32>
    %c15_i32_2 = arith.constant 15 : i32
    %9 = vector.broadcast %c15_i32_2 : i32 to vector<256x1xi32>
    %10 = arith.cmpi slt, %4, %9 : vector<256x1xi32>
    %c1_i32_3 = arith.constant 1 : i32
    %11 = vector.broadcast %c1_i32_3 : i32 to vector<256x1xi32>
    %12 = arith.cmpi sge, %6, %11 : vector<256x1xi32>
    %c15_i32_4 = arith.constant 15 : i32
    %13 = vector.broadcast %c15_i32_4 : i32 to vector<256x1xi32>
    %14 = arith.cmpi slt, %6, %13 : vector<256x1xi32>
    %c17_i32 = arith.constant 17 : i32
    %15 = tpu.dynamic_rotate %1 by %c17_i32 dim 0 : vector<256x4xf32>, i32 -> vector<256x4xf32>
    %16 = arith.andi %8, %12 : vector<256x1xi1>
    %cst = arith.constant 0.000000e+00 : f32
    %17 = vector.shape_cast %16 : vector<256x1xi1> to vector<256x1xi1>
    %18 = vector.broadcast %17 : vector<256x1xi1> to vector<256x4xi1>
    %19 = vector.broadcast %cst : f32 to vector<256x4xf32>
    %20 = arith.select %18, %15, %19 : vector<256x4xi1>, vector<256x4xf32>
    %c0_5 = arith.constant 0 : index
    %c0_6 = arith.constant 0 : index
    %21 = vector.load %arg17[%c0_5, %c0_6] : memref<256x36xf32, #tpu.memory_space<vmem>>, vector<256x4xf32>
    tpu.vector_store %arg17[%c0_5, %c0_6], %20 {strides = array<i32>} : memref<256x36xf32, #tpu.memory_space<vmem>>, vector<256x4xf32>,
    %c16_i32 = arith.constant 16 : i32
    %22 = tpu.dynamic_rotate %1 by %c16_i32 dim 0 : vector<256x4xf32>, i32 -> vector<256x4xf32>
    %cst_7 = arith.constant 0.000000e+00 : f32
    %23 = vector.shape_cast %8 : vector<256x1xi1> to vector<256x1xi1>
    %24 = vector.broadcast %23 : vector<256x1xi1> to vector<256x4xi1>
    %25 = vector.broadcast %cst_7 : f32 to vector<256x4xf32>
    %26 = arith.select %24, %22, %25 : vector<256x4xi1>, vector<256x4xf32>
    %c0_8 = arith.constant 0 : index
    %c4 = arith.constant 4 : index
    %27 = vector.load %arg17[%c0_8, %c4] : memref<256x36xf32, #tpu.memory_space<vmem>>, vector<256x4xf32>
    tpu.vector_store %arg17[%c0_8, %c4], %26 {strides = array<i32>} : memref<256x36xf32, #tpu.memory_space<vmem>>, vector<256x4xf32>,
    %c15_i32_9 = arith.constant 15 : i32
    %28 = tpu.dynamic_rotate %1 by %c15_i32_9 dim 0 : vector<256x4xf32>, i32 -> vector<256x4xf32>
    %29 = arith.andi %8, %14 : vector<256x1xi1>
    %cst_10 = arith.constant 0.000000e+00 : f32
    %30 = vector.shape_cast %29 : vector<256x1xi1> to vector<256x1xi1>
    %31 = vector.broadcast %30 : vector<256x1xi1> to vector<256x4xi1>
    %32 = vector.broadcast %cst_10 : f32 to vector<256x4xf32>
    %33 = arith.select %31, %28, %32 : vector<256x4xi1>, vector<256x4xf32>
    %c0_11 = arith.constant 0 : index
    %c8 = arith.constant 8 : index
    %34 = vector.load %arg17[%c0_11, %c8] : memref<256x36xf32, #tpu.memory_space<vmem>>, vector<256x4xf32>
    tpu.vector_store %arg17[%c0_11, %c8], %33 {strides = array<i32>} : memref<256x36xf32, #tpu.memory_space<vmem>>, vector<256x4xf32>,
    %c1_i32_12 = arith.constant 1 : i32
    %35 = tpu.dynamic_rotate %1 by %c1_i32_12 dim 0 : vector<256x4xf32>, i32 -> vector<256x4xf32>
    %cst_13 = arith.constant 0.000000e+00 : f32
    %36 = vector.shape_cast %12 : vector<256x1xi1> to vector<256x1xi1>
    %37 = vector.broadcast %36 : vector<256x1xi1> to vector<256x4xi1>
    %38 = vector.broadcast %cst_13 : f32 to vector<256x4xf32>
    %39 = arith.select %37, %35, %38 : vector<256x4xi1>, vector<256x4xf32>
    %c0_14 = arith.constant 0 : index
    %c12 = arith.constant 12 : index
    %40 = vector.load %arg17[%c0_14, %c12] : memref<256x36xf32, #tpu.memory_space<vmem>>, vector<256x4xf32>
    tpu.vector_store %arg17[%c0_14, %c12], %39 {strides = array<i32>} : memref<256x36xf32, #tpu.memory_space<vmem>>, vector<256x4xf32>,
    %c0_15 = arith.constant 0 : index
    %c16 = arith.constant 16 : index
    %41 = vector.load %arg17[%c0_15, %c16] : memref<256x36xf32, #tpu.memory_space<vmem>>, vector<256x4xf32>
    tpu.vector_store %arg17[%c0_15, %c16], %1 {strides = array<i32>} : memref<256x36xf32, #tpu.memory_space<vmem>>, vector<256x4xf32>,
    %c255_i32 = arith.constant 255 : i32
    %42 = tpu.dynamic_rotate %1 by %c255_i32 dim 0 : vector<256x4xf32>, i32 -> vector<256x4xf32>
    %cst_16 = arith.constant 0.000000e+00 : f32
    %43 = vector.shape_cast %14 : vector<256x1xi1> to vector<256x1xi1>
    %44 = vector.broadcast %43 : vector<256x1xi1> to vector<256x4xi1>
    %45 = vector.broadcast %cst_16 : f32 to vector<256x4xf32>
    %46 = arith.select %44, %42, %45 : vector<256x4xi1>, vector<256x4xf32>
    %c0_17 = arith.constant 0 : index
    %c20 = arith.constant 20 : index
    %47 = vector.load %arg17[%c0_17, %c20] : memref<256x36xf32, #tpu.memory_space<vmem>>, vector<256x4xf32>
    tpu.vector_store %arg17[%c0_17, %c20], %46 {strides = array<i32>} : memref<256x36xf32, #tpu.memory_space<vmem>>, vector<256x4xf32>,
    %c241_i32 = arith.constant 241 : i32
    %48 = tpu.dynamic_rotate %1 by %c241_i32 dim 0 : vector<256x4xf32>, i32 -> vector<256x4xf32>
    %49 = arith.andi %10, %12 : vector<256x1xi1>
    %cst_18 = arith.constant 0.000000e+00 : f32
    %50 = vector.shape_cast %49 : vector<256x1xi1> to vector<256x1xi1>
    %51 = vector.broadcast %50 : vector<256x1xi1> to vector<256x4xi1>
    %52 = vector.broadcast %cst_18 : f32 to vector<256x4xf32>
    %53 = arith.select %51, %48, %52 : vector<256x4xi1>, vector<256x4xf32>
    %c0_19 = arith.constant 0 : index
    %c24 = arith.constant 24 : index
    %54 = vector.load %arg17[%c0_19, %c24] : memref<256x36xf32, #tpu.memory_space<vmem>>, vector<256x4xf32>
    tpu.vector_store %arg17[%c0_19, %c24], %53 {strides = array<i32>} : memref<256x36xf32, #tpu.memory_space<vmem>>, vector<256x4xf32>,
    %c240_i32 = arith.constant 240 : i32
    %55 = tpu.dynamic_rotate %1 by %c240_i32 dim 0 : vector<256x4xf32>, i32 -> vector<256x4xf32>
    %cst_20 = arith.constant 0.000000e+00 : f32
    %56 = vector.shape_cast %10 : vector<256x1xi1> to vector<256x1xi1>
    %57 = vector.broadcast %56 : vector<256x1xi1> to vector<256x4xi1>
    %58 = vector.broadcast %cst_20 : f32 to vector<256x4xf32>
    %59 = arith.select %57, %55, %58 : vector<256x4xi1>, vector<256x4xf32>
    %c0_21 = arith.constant 0 : index
    %c28 = arith.constant 28 : index
    %60 = vector.load %arg17[%c0_21, %c28] : memref<256x36xf32, #tpu.memory_space<vmem>>, vector<256x4xf32>
    tpu.vector_store %arg17[%c0_21, %c28], %59 {strides = array<i32>} : memref<256x36xf32, #tpu.memory_space<vmem>>, vector<256x4xf32>,
    %c239_i32 = arith.constant 239 : i32
    %61 = tpu.dynamic_rotate %1 by %c239_i32 dim 0 : vector<256x4xf32>, i32 -> vector<256x4xf32>
    %62 = arith.andi %10, %14 : vector<256x1xi1>
    %cst_22 = arith.constant 0.000000e+00 : f32
    %63 = vector.shape_cast %62 : vector<256x1xi1> to vector<256x1xi1>
    %64 = vector.broadcast %63 : vector<256x1xi1> to vector<256x4xi1>
    %65 = vector.broadcast %cst_22 : f32 to vector<256x4xf32>
    %66 = arith.select %64, %61, %65 : vector<256x4xi1>, vector<256x4xf32>
    %c0_23 = arith.constant 0 : index
    %c32 = arith.constant 32 : index
    %67 = vector.load %arg17[%c0_23, %c32] : memref<256x36xf32, #tpu.memory_space<vmem>>, vector<256x4xf32>
    tpu.vector_store %arg17[%c0_23, %c32], %66 {strides = array<i32>} : memref<256x36xf32, #tpu.memory_space<vmem>>, vector<256x4xf32>,
    %c0_24 = arith.constant 0 : index
    %c0_25 = arith.constant 0 : index
    %68 = vector.load %arg17[%c0_24, %c0_25] : memref<256x36xf32, #tpu.memory_space<vmem>>, vector<256x36xf32>
    %69 = arith.truncf %68 : vector<256x36xf32> to vector<256x36xbf16>
    %c0_26 = arith.constant 0 : index
    %c0_27 = arith.constant 0 : index
    %70 = vector.load %arg2[%c0_26, %c0_27] : memref<36x8xbf16, #tpu.memory_space<vmem>>, vector<36x8xbf16>
    %cst_28 = arith.constant dense<0.000000e+00> : vector<256x8xf32>
    %71 = tpu.matmul %69, %70, %cst_28 {dimension_numbers = #tpu.dot_dimension_numbers<[1], [0], [0], [1], [0, 0, 1, 1], [], []>} : vector<256x36xbf16>, vector<36x8xbf16>, vector<256x8xf32> -> vector<256x8xf32>
    %c0_29 = arith.constant 0 : index
    %c0_30 = arith.constant 0 : index
    %72 = vector.load %arg3[%c0_29, %c0_30] : memref<1x8xf32, #tpu.memory_space<vmem>>, vector<1x8xf32>
    %73 = vector.broadcast %72 : vector<1x8xf32> to vector<256x8xf32>
    %74 = arith.addf %71, %73 : vector<256x8xf32>
    %cst_31 = arith.constant 0.000000e+00 : f32
    %75 = vector.broadcast %cst_31 : f32 to vector<256x8xf32>
    %76 = arith.maximumf %74, %75 : vector<256x8xf32>
    %c255_i32_32 = arith.constant 255 : i32
    %77 = tpu.dynamic_rotate %76 by %c255_i32_32 dim 0 : vector<256x8xf32>, i32 -> vector<256x8xf32>
    %78 = arith.maximumf %76, %77 : vector<256x8xf32>
    %c240_i32_33 = arith.constant 240 : i32
    %79 = tpu.dynamic_rotate %78 by %c240_i32_33 dim 0 : vector<256x8xf32>, i32 -> vector<256x8xf32>
    %80 = arith.maximumf %78, %79 : vector<256x8xf32>
    %c0_34 = arith.constant 0 : index
    %c0_35 = arith.constant 0 : index
    %81 = vector.load %arg18[%c0_34, %c0_35] : memref<256x8xf32, #tpu.memory_space<vmem>>, vector<256x8xf32>
    tpu.vector_store %arg18[%c0_34, %c0_35], %80 {strides = array<i32>} : memref<256x8xf32, #tpu.memory_space<vmem>>, vector<256x8xf32>,
    %c0_36 = arith.constant 0 : index
    %c0_37 = arith.constant 0 : index
    %82 = tpu.strided_load %arg18[%c0_36, %c0_37] {strides = array<i32: 2, 1>} : memref<256x8xf32, #tpu.memory_space<vmem>>, vector<8x8xf32>
    %c0_38 = arith.constant 0 : index
    %c0_39 = arith.constant 0 : index
    %83 = vector.load %arg19[%c0_38, %c0_39] : memref<64x8xf32, #tpu.memory_space<vmem>>, vector<8x8xf32>
    tpu.vector_store %arg19[%c0_38, %c0_39], %82 {strides = array<i32>} : memref<64x8xf32, #tpu.memory_space<vmem>>, vector<8x8xf32>,
    %c32_40 = arith.constant 32 : index
    %c0_41 = arith.constant 0 : index
    %84 = tpu.strided_load %arg18[%c32_40, %c0_41] {strides = array<i32: 2, 1>} : memref<256x8xf32, #tpu.memory_space<vmem>>, vector<8x8xf32>
    %c8_42 = arith.constant 8 : index
    %c0_43 = arith.constant 0 : index
    %85 = vector.load %arg19[%c8_42, %c0_43] : memref<64x8xf32, #tpu.memory_space<vmem>>, vector<8x8xf32>
    tpu.vector_store %arg19[%c8_42, %c0_43], %84 {strides = array<i32>} : memref<64x8xf32, #tpu.memory_space<vmem>>, vector<8x8xf32>,
    %c64 = arith.constant 64 : index
    %c0_44 = arith.constant 0 : index
    %86 = tpu.strided_load %arg18[%c64, %c0_44] {strides = array<i32: 2, 1>} : memref<256x8xf32, #tpu.memory_space<vmem>>, vector<8x8xf32>
    %c16_45 = arith.constant 16 : index
    %c0_46 = arith.constant 0 : index
    %87 = vector.load %arg19[%c16_45, %c0_46] : memref<64x8xf32, #tpu.memory_space<vmem>>, vector<8x8xf32>
    tpu.vector_store %arg19[%c16_45, %c0_46], %86 {strides = array<i32>} : memref<64x8xf32, #tpu.memory_space<vmem>>, vector<8x8xf32>,
    %c96 = arith.constant 96 : index
    %c0_47 = arith.constant 0 : index
    %88 = tpu.strided_load %arg18[%c96, %c0_47] {strides = array<i32: 2, 1>} : memref<256x8xf32, #tpu.memory_space<vmem>>, vector<8x8xf32>
    %c24_48 = arith.constant 24 : index
    %c0_49 = arith.constant 0 : index
    %89 = vector.load %arg19[%c24_48, %c0_49] : memref<64x8xf32, #tpu.memory_space<vmem>>, vector<8x8xf32>
    tpu.vector_store %arg19[%c24_48, %c0_49], %88 {strides = array<i32>} : memref<64x8xf32, #tpu.memory_space<vmem>>, vector<8x8xf32>,
    %c128 = arith.constant 128 : index
    %c0_50 = arith.constant 0 : index
    %90 = tpu.strided_load %arg18[%c128, %c0_50] {strides = array<i32: 2, 1>} : memref<256x8xf32, #tpu.memory_space<vmem>>, vector<8x8xf32>
    %c32_51 = arith.constant 32 : index
    %c0_52 = arith.constant 0 : index
    %91 = vector.load %arg19[%c32_51, %c0_52] : memref<64x8xf32, #tpu.memory_space<vmem>>, vector<8x8xf32>
    tpu.vector_store %arg19[%c32_51, %c0_52], %90 {strides = array<i32>} : memref<64x8xf32, #tpu.memory_space<vmem>>, vector<8x8xf32>,
    %c160 = arith.constant 160 : index
    %c0_53 = arith.constant 0 : index
    %92 = tpu.strided_load %arg18[%c160, %c0_53] {strides = array<i32: 2, 1>} : memref<256x8xf32, #tpu.memory_space<vmem>>, vector<8x8xf32>
    %c40 = arith.constant 40 : index
    %c0_54 = arith.constant 0 : index
    %93 = vector.load %arg19[%c40, %c0_54] : memref<64x8xf32, #tpu.memory_space<vmem>>, vector<8x8xf32>
    tpu.vector_store %arg19[%c40, %c0_54], %92 {strides = array<i32>} : memref<64x8xf32, #tpu.memory_space<vmem>>, vector<8x8xf32>,
    %c192 = arith.constant 192 : index
    %c0_55 = arith.constant 0 : index
    %94 = tpu.strided_load %arg18[%c192, %c0_55] {strides = array<i32: 2, 1>} : memref<256x8xf32, #tpu.memory_space<vmem>>, vector<8x8xf32>
    %c48 = arith.constant 48 : index
    %c0_56 = arith.constant 0 : index
    %95 = vector.load %arg19[%c48, %c0_56] : memref<64x8xf32, #tpu.memory_space<vmem>>, vector<8x8xf32>
    tpu.vector_store %arg19[%c48, %c0_56], %94 {strides = array<i32>} : memref<64x8xf32, #tpu.memory_space<vmem>>, vector<8x8xf32>,
    %c224 = arith.constant 224 : index
    %c0_57 = arith.constant 0 : index
    %96 = tpu.strided_load %arg18[%c224, %c0_57] {strides = array<i32: 2, 1>} : memref<256x8xf32, #tpu.memory_space<vmem>>, vector<8x8xf32>
    %c56 = arith.constant 56 : index
    %c0_58 = arith.constant 0 : index
    %97 = vector.load %arg19[%c56, %c0_58] : memref<64x8xf32, #tpu.memory_space<vmem>>, vector<8x8xf32>
    tpu.vector_store %arg19[%c56, %c0_58], %96 {strides = array<i32>} : memref<64x8xf32, #tpu.memory_space<vmem>>, vector<8x8xf32>,
    %c0_59 = arith.constant 0 : index
    %c0_60 = arith.constant 0 : index
    %98 = vector.load %arg19[%c0_59, %c0_60] : memref<64x8xf32, #tpu.memory_space<vmem>>, vector<64x8xf32>
    %99 = tpu.iota {dimensions = array<i32: 0>} : vector<64x1xi32>
    %c3_i32 = arith.constant 3 : i32
    %100 = vector.broadcast %c3_i32 : i32 to vector<64x1xi32>
    %101 = arith.shrsi %99, %100 : vector<64x1xi32>
    %c7_i32 = arith.constant 7 : i32
    %102 = vector.broadcast %c7_i32 : i32 to vector<64x1xi32>
    %103 = arith.andi %99, %102 : vector<64x1xi32>
    %c1_i32_61 = arith.constant 1 : i32
    %104 = vector.broadcast %c1_i32_61 : i32 to vector<64x1xi32>
    %105 = arith.cmpi sge, %101, %104 : vector<64x1xi32>
    %c7_i32_62 = arith.constant 7 : i32
    %106 = vector.broadcast %c7_i32_62 : i32 to vector<64x1xi32>
    %107 = arith.cmpi slt, %101, %106 : vector<64x1xi32>
    %c1_i32_63 = arith.constant 1 : i32
    %108 = vector.broadcast %c1_i32_63 : i32 to vector<64x1xi32>
    %109 = arith.cmpi sge, %103, %108 : vector<64x1xi32>
    %c7_i32_64 = arith.constant 7 : i32
    %110 = vector.broadcast %c7_i32_64 : i32 to vector<64x1xi32>
    %111 = arith.cmpi slt, %103, %110 : vector<64x1xi32>
    %c9_i32 = arith.constant 9 : i32
    %112 = tpu.dynamic_rotate %98 by %c9_i32 dim 0 : vector<64x8xf32>, i32 -> vector<64x8xf32>
    %113 = arith.andi %105, %109 : vector<64x1xi1>
    %cst_65 = arith.constant 0.000000e+00 : f32
    %114 = vector.shape_cast %113 : vector<64x1xi1> to vector<64x1xi1>
    %115 = vector.broadcast %114 : vector<64x1xi1> to vector<64x8xi1>
    %116 = vector.broadcast %cst_65 : f32 to vector<64x8xf32>
    %117 = arith.select %115, %112, %116 : vector<64x8xi1>, vector<64x8xf32>
    %c0_66 = arith.constant 0 : index
    %c0_67 = arith.constant 0 : index
    %118 = vector.load %arg20[%c0_66, %c0_67] : memref<64x72xf32, #tpu.memory_space<vmem>>, vector<64x8xf32>
    tpu.vector_store %arg20[%c0_66, %c0_67], %117 {strides = array<i32>} : memref<64x72xf32, #tpu.memory_space<vmem>>, vector<64x8xf32>,
    %c8_i32 = arith.constant 8 : i32
    %119 = tpu.dynamic_rotate %98 by %c8_i32 dim 0 : vector<64x8xf32>, i32 -> vector<64x8xf32>
    %cst_68 = arith.constant 0.000000e+00 : f32
    %120 = vector.shape_cast %105 : vector<64x1xi1> to vector<64x1xi1>
    %121 = vector.broadcast %120 : vector<64x1xi1> to vector<64x8xi1>
    %122 = vector.broadcast %cst_68 : f32 to vector<64x8xf32>
    %123 = arith.select %121, %119, %122 : vector<64x8xi1>, vector<64x8xf32>
    %c0_69 = arith.constant 0 : index
    %c8_70 = arith.constant 8 : index
    %124 = vector.load %arg20[%c0_69, %c8_70] : memref<64x72xf32, #tpu.memory_space<vmem>>, vector<64x8xf32>
    tpu.vector_store %arg20[%c0_69, %c8_70], %123 {strides = array<i32>} : memref<64x72xf32, #tpu.memory_space<vmem>>, vector<64x8xf32>,
    %c7_i32_71 = arith.constant 7 : i32
    %125 = tpu.dynamic_rotate %98 by %c7_i32_71 dim 0 : vector<64x8xf32>, i32 -> vector<64x8xf32>
    %126 = arith.andi %105, %111 : vector<64x1xi1>
    %cst_72 = arith.constant 0.000000e+00 : f32
    %127 = vector.shape_cast %126 : vector<64x1xi1> to vector<64x1xi1>
    %128 = vector.broadcast %127 : vector<64x1xi1> to vector<64x8xi1>
    %129 = vector.broadcast %cst_72 : f32 to vector<64x8xf32>
    %130 = arith.select %128, %125, %129 : vector<64x8xi1>, vector<64x8xf32>
    %c0_73 = arith.constant 0 : index
    %c16_74 = arith.constant 16 : index
    %131 = vector.load %arg20[%c0_73, %c16_74] : memref<64x72xf32, #tpu.memory_space<vmem>>, vector<64x8xf32>
    tpu.vector_store %arg20[%c0_73, %c16_74], %130 {strides = array<i32>} : memref<64x72xf32, #tpu.memory_space<vmem>>, vector<64x8xf32>,
    %c1_i32_75 = arith.constant 1 : i32
    %132 = tpu.dynamic_rotate %98 by %c1_i32_75 dim 0 : vector<64x8xf32>, i32 -> vector<64x8xf32>
    %cst_76 = arith.constant 0.000000e+00 : f32
    %133 = vector.shape_cast %109 : vector<64x1xi1> to vector<64x1xi1>
    %134 = vector.broadcast %133 : vector<64x1xi1> to vector<64x8xi1>
    %135 = vector.broadcast %cst_76 : f32 to vector<64x8xf32>
    %136 = arith.select %134, %132, %135 : vector<64x8xi1>, vector<64x8xf32>
    %c0_77 = arith.constant 0 : index
    %c24_78 = arith.constant 24 : index
    %137 = vector.load %arg20[%c0_77, %c24_78] : memref<64x72xf32, #tpu.memory_space<vmem>>, vector<64x8xf32>
    tpu.vector_store %arg20[%c0_77, %c24_78], %136 {strides = array<i32>} : memref<64x72xf32, #tpu.memory_space<vmem>>, vector<64x8xf32>,
    %c0_79 = arith.constant 0 : index
    %c32_80 = arith.constant 32 : index
    %138 = vector.load %arg20[%c0_79, %c32_80] : memref<64x72xf32, #tpu.memory_space<vmem>>, vector<64x8xf32>
    tpu.vector_store %arg20[%c0_79, %c32_80], %98 {strides = array<i32>} : memref<64x72xf32, #tpu.memory_space<vmem>>, vector<64x8xf32>,
    %c63_i32 = arith.constant 63 : i32
    %139 = tpu.dynamic_rotate %98 by %c63_i32 dim 0 : vector<64x8xf32>, i32 -> vector<64x8xf32>
    %cst_81 = arith.constant 0.000000e+00 : f32
    %140 = vector.shape_cast %111 : vector<64x1xi1> to vector<64x1xi1>
    %141 = vector.broadcast %140 : vector<64x1xi1> to vector<64x8xi1>
    %142 = vector.broadcast %cst_81 : f32 to vector<64x8xf32>
    %143 = arith.select %141, %139, %142 : vector<64x8xi1>, vector<64x8xf32>
    %c0_82 = arith.constant 0 : index
    %c40_83 = arith.constant 40 : index
    %144 = vector.load %arg20[%c0_82, %c40_83] : memref<64x72xf32, #tpu.memory_space<vmem>>, vector<64x8xf32>
    tpu.vector_store %arg20[%c0_82, %c40_83], %143 {strides = array<i32>} : memref<64x72xf32, #tpu.memory_space<vmem>>, vector<64x8xf32>,
    %c57_i32 = arith.constant 57 : i32
    %145 = tpu.dynamic_rotate %98 by %c57_i32 dim 0 : vector<64x8xf32>, i32 -> vector<64x8xf32>
    %146 = arith.andi %107, %109 : vector<64x1xi1>
    %cst_84 = arith.constant 0.000000e+00 : f32
    %147 = vector.shape_cast %146 : vector<64x1xi1> to vector<64x1xi1>
    %148 = vector.broadcast %147 : vector<64x1xi1> to vector<64x8xi1>
    %149 = vector.broadcast %cst_84 : f32 to vector<64x8xf32>
    %150 = arith.select %148, %145, %149 : vector<64x8xi1>, vector<64x8xf32>
    %c0_85 = arith.constant 0 : index
    %c48_86 = arith.constant 48 : index
    %151 = vector.load %arg20[%c0_85, %c48_86] : memref<64x72xf32, #tpu.memory_space<vmem>>, vector<64x8xf32>
    tpu.vector_store %arg20[%c0_85, %c48_86], %150 {strides = array<i32>} : memref<64x72xf32, #tpu.memory_space<vmem>>, vector<64x8xf32>,
    %c56_i32 = arith.constant 56 : i32
    %152 = tpu.dynamic_rotate %98 by %c56_i32 dim 0 : vector<64x8xf32>, i32 -> vector<64x8xf32>
    %cst_87 = arith.constant 0.000000e+00 : f32
    %153 = vector.shape_cast %107 : vector<64x1xi1> to vector<64x1xi1>
    %154 = vector.broadcast %153 : vector<64x1xi1> to vector<64x8xi1>
    %155 = vector.broadcast %cst_87 : f32 to vector<64x8xf32>
    %156 = arith.select %154, %152, %155 : vector<64x8xi1>, vector<64x8xf32>
    %c0_88 = arith.constant 0 : index
    %c56_89 = arith.constant 56 : index
    %157 = vector.load %arg20[%c0_88, %c56_89] : memref<64x72xf32, #tpu.memory_space<vmem>>, vector<64x8xf32>
    tpu.vector_store %arg20[%c0_88, %c56_89], %156 {strides = array<i32>} : memref<64x72xf32, #tpu.memory_space<vmem>>, vector<64x8xf32>,
    %c55_i32 = arith.constant 55 : i32
    %158 = tpu.dynamic_rotate %98 by %c55_i32 dim 0 : vector<64x8xf32>, i32 -> vector<64x8xf32>
    %159 = arith.andi %107, %111 : vector<64x1xi1>
    %cst_90 = arith.constant 0.000000e+00 : f32
    %160 = vector.shape_cast %159 : vector<64x1xi1> to vector<64x1xi1>
    %161 = vector.broadcast %160 : vector<64x1xi1> to vector<64x8xi1>
    %162 = vector.broadcast %cst_90 : f32 to vector<64x8xf32>
    %163 = arith.select %161, %158, %162 : vector<64x8xi1>, vector<64x8xf32>
    %c0_91 = arith.constant 0 : index
    %c64_92 = arith.constant 64 : index
    %164 = vector.load %arg20[%c0_91, %c64_92] : memref<64x72xf32, #tpu.memory_space<vmem>>, vector<64x8xf32>
    tpu.vector_store %arg20[%c0_91, %c64_92], %163 {strides = array<i32>} : memref<64x72xf32, #tpu.memory_space<vmem>>, vector<64x8xf32>,
    %c0_93 = arith.constant 0 : index
    %c0_94 = arith.constant 0 : index
    %165 = vector.load %arg20[%c0_93, %c0_94] : memref<64x72xf32, #tpu.memory_space<vmem>>, vector<64x72xf32>
    %166 = arith.truncf %165 : vector<64x72xf32> to vector<64x72xbf16>
    %c0_95 = arith.constant 0 : index
    %c0_96 = arith.constant 0 : index
    %167 = vector.load %arg4[%c0_95, %c0_96] : memref<72x16xbf16, #tpu.memory_space<vmem>>, vector<72x16xbf16>
    %cst_97 = arith.constant dense<0.000000e+00> : vector<64x16xf32>
    %168 = tpu.matmul %166, %167, %cst_97 {dimension_numbers = #tpu.dot_dimension_numbers<[1], [0], [0], [1], [0, 0, 1, 1], [], []>} : vector<64x72xbf16>, vector<72x16xbf16>, vector<64x16xf32> -> vector<64x16xf32>
    %c0_98 = arith.constant 0 : index
    %c0_99 = arith.constant 0 : index
    %169 = vector.load %arg5[%c0_98, %c0_99] : memref<1x16xf32, #tpu.memory_space<vmem>>, vector<1x16xf32>
    %170 = vector.broadcast %169 : vector<1x16xf32> to vector<64x16xf32>
    %171 = arith.addf %168, %170 : vector<64x16xf32>
    %cst_100 = arith.constant 0.000000e+00 : f32
    %172 = vector.broadcast %cst_100 : f32 to vector<64x16xf32>
    %173 = arith.maximumf %171, %172 : vector<64x16xf32>
    %c63_i32_101 = arith.constant 63 : i32
    %174 = tpu.dynamic_rotate %173 by %c63_i32_101 dim 0 : vector<64x16xf32>, i32 -> vector<64x16xf32>
    %175 = arith.maximumf %173, %174 : vector<64x16xf32>
    %c56_i32_102 = arith.constant 56 : i32
    %176 = tpu.dynamic_rotate %175 by %c56_i32_102 dim 0 : vector<64x16xf32>, i32 -> vector<64x16xf32>
    %177 = arith.maximumf %175, %176 : vector<64x16xf32>
    %c0_103 = arith.constant 0 : index
    %c0_104 = arith.constant 0 : index
    %178 = vector.load %arg21[%c0_103, %c0_104] : memref<64x16xf32, #tpu.memory_space<vmem>>, vector<64x16xf32>
    tpu.vector_store %arg21[%c0_103, %c0_104], %177 {strides = array<i32>} : memref<64x16xf32, #tpu.memory_space<vmem>>, vector<64x16xf32>,
    %c0_105 = arith.constant 0 : index
    %c0_106 = arith.constant 0 : index
    %179 = tpu.strided_load %arg21[%c0_105, %c0_106] {strides = array<i32: 2, 1>} : memref<64x16xf32, #tpu.memory_space<vmem>>, vector<4x16xf32>
    %c0_107 = arith.constant 0 : index
    %c0_108 = arith.constant 0 : index
    %180 = vector.load %arg22[%c0_107, %c0_108] : memref<16x16xf32, #tpu.memory_space<vmem>>, vector<4x16xf32>
    tpu.vector_store %arg22[%c0_107, %c0_108], %179 {strides = array<i32>} : memref<16x16xf32, #tpu.memory_space<vmem>>, vector<4x16xf32>,
    %c16_109 = arith.constant 16 : index
    %c0_110 = arith.constant 0 : index
    %181 = tpu.strided_load %arg21[%c16_109, %c0_110] {strides = array<i32: 2, 1>} : memref<64x16xf32, #tpu.memory_space<vmem>>, vector<4x16xf32>
    %c4_111 = arith.constant 4 : index
    %c0_112 = arith.constant 0 : index
    %182 = vector.load %arg22[%c4_111, %c0_112] : memref<16x16xf32, #tpu.memory_space<vmem>>, vector<4x16xf32>
    tpu.vector_store %arg22[%c4_111, %c0_112], %181 {strides = array<i32>} : memref<16x16xf32, #tpu.memory_space<vmem>>, vector<4x16xf32>,
    %c32_113 = arith.constant 32 : index
    %c0_114 = arith.constant 0 : index
    %183 = tpu.strided_load %arg21[%c32_113, %c0_114] {strides = array<i32: 2, 1>} : memref<64x16xf32, #tpu.memory_space<vmem>>, vector<4x16xf32>
    %c8_115 = arith.constant 8 : index
    %c0_116 = arith.constant 0 : index
    %184 = vector.load %arg22[%c8_115, %c0_116] : memref<16x16xf32, #tpu.memory_space<vmem>>, vector<4x16xf32>
    tpu.vector_store %arg22[%c8_115, %c0_116], %183 {strides = array<i32>} : memref<16x16xf32, #tpu.memory_space<vmem>>, vector<4x16xf32>,
    %c48_117 = arith.constant 48 : index
    %c0_118 = arith.constant 0 : index
    %185 = tpu.strided_load %arg21[%c48_117, %c0_118] {strides = array<i32: 2, 1>} : memref<64x16xf32, #tpu.memory_space<vmem>>, vector<4x16xf32>
    %c12_119 = arith.constant 12 : index
    %c0_120 = arith.constant 0 : index
    %186 = vector.load %arg22[%c12_119, %c0_120] : memref<16x16xf32, #tpu.memory_space<vmem>>, vector<4x16xf32>
    tpu.vector_store %arg22[%c12_119, %c0_120], %185 {strides = array<i32>} : memref<16x16xf32, #tpu.memory_space<vmem>>, vector<4x16xf32>,
    %c0_121 = arith.constant 0 : index
    %c0_122 = arith.constant 0 : index
    %187 = vector.load %arg22[%c0_121, %c0_122] : memref<16x16xf32, #tpu.memory_space<vmem>>, vector<16x16xf32>
    %188 = tpu.iota {dimensions = array<i32: 0>} : vector<16x1xi32>
    %c2_i32 = arith.constant 2 : i32
    %189 = vector.broadcast %c2_i32 : i32 to vector<16x1xi32>
    %190 = arith.shrsi %188, %189 : vector<16x1xi32>
    %c3_i32_123 = arith.constant 3 : i32
    %191 = vector.broadcast %c3_i32_123 : i32 to vector<16x1xi32>
    %192 = arith.andi %188, %191 : vector<16x1xi32>
    %c1_i32_124 = arith.constant 1 : i32
    %193 = vector.broadcast %c1_i32_124 : i32 to vector<16x1xi32>
    %194 = arith.cmpi sge, %190, %193 : vector<16x1xi32>
    %c3_i32_125 = arith.constant 3 : i32
    %195 = vector.broadcast %c3_i32_125 : i32 to vector<16x1xi32>
    %196 = arith.cmpi slt, %190, %195 : vector<16x1xi32>
    %c1_i32_126 = arith.constant 1 : i32
    %197 = vector.broadcast %c1_i32_126 : i32 to vector<16x1xi32>
    %198 = arith.cmpi sge, %192, %197 : vector<16x1xi32>
    %c3_i32_127 = arith.constant 3 : i32
    %199 = vector.broadcast %c3_i32_127 : i32 to vector<16x1xi32>
    %200 = arith.cmpi slt, %192, %199 : vector<16x1xi32>
    %c5_i32 = arith.constant 5 : i32
    %201 = tpu.dynamic_rotate %187 by %c5_i32 dim 0 : vector<16x16xf32>, i32 -> vector<16x16xf32>
    %202 = arith.andi %194, %198 : vector<16x1xi1>
    %cst_128 = arith.constant 0.000000e+00 : f32
    %203 = vector.shape_cast %202 : vector<16x1xi1> to vector<16x1xi1>
    %204 = vector.broadcast %203 : vector<16x1xi1> to vector<16x16xi1>
    %205 = vector.broadcast %cst_128 : f32 to vector<16x16xf32>
    %206 = arith.select %204, %201, %205 : vector<16x16xi1>, vector<16x16xf32>
    %c0_129 = arith.constant 0 : index
    %c0_130 = arith.constant 0 : index
    %207 = vector.load %arg23[%c0_129, %c0_130] : memref<16x144xf32, #tpu.memory_space<vmem>>, vector<16x16xf32>
    tpu.vector_store %arg23[%c0_129, %c0_130], %206 {strides = array<i32>} : memref<16x144xf32, #tpu.memory_space<vmem>>, vector<16x16xf32>,
    %c4_i32_131 = arith.constant 4 : i32
    %208 = tpu.dynamic_rotate %187 by %c4_i32_131 dim 0 : vector<16x16xf32>, i32 -> vector<16x16xf32>
    %cst_132 = arith.constant 0.000000e+00 : f32
    %209 = vector.shape_cast %194 : vector<16x1xi1> to vector<16x1xi1>
    %210 = vector.broadcast %209 : vector<16x1xi1> to vector<16x16xi1>
    %211 = vector.broadcast %cst_132 : f32 to vector<16x16xf32>
    %212 = arith.select %210, %208, %211 : vector<16x16xi1>, vector<16x16xf32>
    %c0_133 = arith.constant 0 : index
    %c16_134 = arith.constant 16 : index
    %213 = vector.load %arg23[%c0_133, %c16_134] : memref<16x144xf32, #tpu.memory_space<vmem>>, vector<16x16xf32>
    tpu.vector_store %arg23[%c0_133, %c16_134], %212 {strides = array<i32>} : memref<16x144xf32, #tpu.memory_space<vmem>>, vector<16x16xf32>,
    %c3_i32_135 = arith.constant 3 : i32
    %214 = tpu.dynamic_rotate %187 by %c3_i32_135 dim 0 : vector<16x16xf32>, i32 -> vector<16x16xf32>
    %215 = arith.andi %194, %200 : vector<16x1xi1>
    %cst_136 = arith.constant 0.000000e+00 : f32
    %216 = vector.shape_cast %215 : vector<16x1xi1> to vector<16x1xi1>
    %217 = vector.broadcast %216 : vector<16x1xi1> to vector<16x16xi1>
    %218 = vector.broadcast %cst_136 : f32 to vector<16x16xf32>
    %219 = arith.select %217, %214, %218 : vector<16x16xi1>, vector<16x16xf32>
    %c0_137 = arith.constant 0 : index
    %c32_138 = arith.constant 32 : index
    %220 = vector.load %arg23[%c0_137, %c32_138] : memref<16x144xf32, #tpu.memory_space<vmem>>, vector<16x16xf32>
    tpu.vector_store %arg23[%c0_137, %c32_138], %219 {strides = array<i32>} : memref<16x144xf32, #tpu.memory_space<vmem>>, vector<16x16xf32>,
    %c1_i32_139 = arith.constant 1 : i32
    %221 = tpu.dynamic_rotate %187 by %c1_i32_139 dim 0 : vector<16x16xf32>, i32 -> vector<16x16xf32>
    %cst_140 = arith.constant 0.000000e+00 : f32
    %222 = vector.shape_cast %198 : vector<16x1xi1> to vector<16x1xi1>
    %223 = vector.broadcast %222 : vector<16x1xi1> to vector<16x16xi1>
    %224 = vector.broadcast %cst_140 : f32 to vector<16x16xf32>
    %225 = arith.select %223, %221, %224 : vector<16x16xi1>, vector<16x16xf32>
    %c0_141 = arith.constant 0 : index
    %c48_142 = arith.constant 48 : index
    %226 = vector.load %arg23[%c0_141, %c48_142] : memref<16x144xf32, #tpu.memory_space<vmem>>, vector<16x16xf32>
    tpu.vector_store %arg23[%c0_141, %c48_142], %225 {strides = array<i32>} : memref<16x144xf32, #tpu.memory_space<vmem>>, vector<16x16xf32>,
    %c0_143 = arith.constant 0 : index
    %c64_144 = arith.constant 64 : index
    %227 = vector.load %arg23[%c0_143, %c64_144] : memref<16x144xf32, #tpu.memory_space<vmem>>, vector<16x16xf32>
    tpu.vector_store %arg23[%c0_143, %c64_144], %187 {strides = array<i32>} : memref<16x144xf32, #tpu.memory_space<vmem>>, vector<16x16xf32>,
    %c15_i32_145 = arith.constant 15 : i32
    %228 = tpu.dynamic_rotate %187 by %c15_i32_145 dim 0 : vector<16x16xf32>, i32 -> vector<16x16xf32>
    %cst_146 = arith.constant 0.000000e+00 : f32
    %229 = vector.shape_cast %200 : vector<16x1xi1> to vector<16x1xi1>
    %230 = vector.broadcast %229 : vector<16x1xi1> to vector<16x16xi1>
    %231 = vector.broadcast %cst_146 : f32 to vector<16x16xf32>
    %232 = arith.select %230, %228, %231 : vector<16x16xi1>, vector<16x16xf32>
    %c0_147 = arith.constant 0 : index
    %c80 = arith.constant 80 : index
    %233 = vector.load %arg23[%c0_147, %c80] : memref<16x144xf32, #tpu.memory_space<vmem>>, vector<16x16xf32>
    tpu.vector_store %arg23[%c0_147, %c80], %232 {strides = array<i32>} : memref<16x144xf32, #tpu.memory_space<vmem>>, vector<16x16xf32>,
    %c13_i32 = arith.constant 13 : i32
    %234 = tpu.dynamic_rotate %187 by %c13_i32 dim 0 : vector<16x16xf32>, i32 -> vector<16x16xf32>
    %235 = arith.andi %196, %198 : vector<16x1xi1>
    %cst_148 = arith.constant 0.000000e+00 : f32
    %236 = vector.shape_cast %235 : vector<16x1xi1> to vector<16x1xi1>
    %237 = vector.broadcast %236 : vector<16x1xi1> to vector<16x16xi1>
    %238 = vector.broadcast %cst_148 : f32 to vector<16x16xf32>
    %239 = arith.select %237, %234, %238 : vector<16x16xi1>, vector<16x16xf32>
    %c0_149 = arith.constant 0 : index
    %c96_150 = arith.constant 96 : index
    %240 = vector.load %arg23[%c0_149, %c96_150] : memref<16x144xf32, #tpu.memory_space<vmem>>, vector<16x16xf32>
    tpu.vector_store %arg23[%c0_149, %c96_150], %239 {strides = array<i32>} : memref<16x144xf32, #tpu.memory_space<vmem>>, vector<16x16xf32>,
    %c12_i32 = arith.constant 12 : i32
    %241 = tpu.dynamic_rotate %187 by %c12_i32 dim 0 : vector<16x16xf32>, i32 -> vector<16x16xf32>
    %cst_151 = arith.constant 0.000000e+00 : f32
    %242 = vector.shape_cast %196 : vector<16x1xi1> to vector<16x1xi1>
    %243 = vector.broadcast %242 : vector<16x1xi1> to vector<16x16xi1>
    %244 = vector.broadcast %cst_151 : f32 to vector<16x16xf32>
    %245 = arith.select %243, %241, %244 : vector<16x16xi1>, vector<16x16xf32>
    %c0_152 = arith.constant 0 : index
    %c112 = arith.constant 112 : index
    %246 = vector.load %arg23[%c0_152, %c112] : memref<16x144xf32, #tpu.memory_space<vmem>>, vector<16x16xf32>
    tpu.vector_store %arg23[%c0_152, %c112], %245 {strides = array<i32>} : memref<16x144xf32, #tpu.memory_space<vmem>>, vector<16x16xf32>,
    %c11_i32 = arith.constant 11 : i32
    %247 = tpu.dynamic_rotate %187 by %c11_i32 dim 0 : vector<16x16xf32>, i32 -> vector<16x16xf32>
    %248 = arith.andi %196, %200 : vector<16x1xi1>
    %cst_153 = arith.constant 0.000000e+00 : f32
    %249 = vector.shape_cast %248 : vector<16x1xi1> to vector<16x1xi1>
    %250 = vector.broadcast %249 : vector<16x1xi1> to vector<16x16xi1>
    %251 = vector.broadcast %cst_153 : f32 to vector<16x16xf32>
    %252 = arith.select %250, %247, %251 : vector<16x16xi1>, vector<16x16xf32>
    %c0_154 = arith.constant 0 : index
    %c128_155 = arith.constant 128 : index
    %253 = vector.load %arg23[%c0_154, %c128_155] : memref<16x144xf32, #tpu.memory_space<vmem>>, vector<16x16xf32>
    tpu.vector_store %arg23[%c0_154, %c128_155], %252 {strides = array<i32>} : memref<16x144xf32, #tpu.memory_space<vmem>>, vector<16x16xf32>,
    %c0_156 = arith.constant 0 : index
    %c0_157 = arith.constant 0 : index
    %254 = vector.load %arg23[%c0_156, %c0_157] : memref<16x144xf32, #tpu.memory_space<vmem>>, vector<16x144xf32>
    %255 = arith.truncf %254 : vector<16x144xf32> to vector<16x144xbf16>
    %c0_158 = arith.constant 0 : index
    %c0_159 = arith.constant 0 : index
    %256 = vector.load %arg6[%c0_158, %c0_159] : memref<144x32xbf16, #tpu.memory_space<vmem>>, vector<144x32xbf16>
    %cst_160 = arith.constant dense<0.000000e+00> : vector<16x32xf32>
    %257 = tpu.matmul %255, %256, %cst_160 {dimension_numbers = #tpu.dot_dimension_numbers<[1], [0], [0], [1], [0, 0, 1, 1], [], []>} : vector<16x144xbf16>, vector<144x32xbf16>, vector<16x32xf32> -> vector<16x32xf32>
    %c0_161 = arith.constant 0 : index
    %c0_162 = arith.constant 0 : index
    %258 = vector.load %arg7[%c0_161, %c0_162] : memref<1x32xf32, #tpu.memory_space<vmem>>, vector<1x32xf32>
    %259 = vector.broadcast %258 : vector<1x32xf32> to vector<16x32xf32>
    %260 = arith.addf %257, %259 : vector<16x32xf32>
    %cst_163 = arith.constant 0.000000e+00 : f32
    %261 = vector.broadcast %cst_163 : f32 to vector<16x32xf32>
    %262 = arith.maximumf %260, %261 : vector<16x32xf32>
    %c15_i32_164 = arith.constant 15 : i32
    %263 = tpu.dynamic_rotate %262 by %c15_i32_164 dim 0 : vector<16x32xf32>, i32 -> vector<16x32xf32>
    %264 = arith.maximumf %262, %263 : vector<16x32xf32>
    %c12_i32_165 = arith.constant 12 : i32
    %265 = tpu.dynamic_rotate %264 by %c12_i32_165 dim 0 : vector<16x32xf32>, i32 -> vector<16x32xf32>
    %266 = arith.maximumf %264, %265 : vector<16x32xf32>
    %c0_166 = arith.constant 0 : index
    %c0_167 = arith.constant 0 : index
    %267 = vector.load %arg24[%c0_166, %c0_167] : memref<16x32xf32, #tpu.memory_space<vmem>>, vector<16x32xf32>
    tpu.vector_store %arg24[%c0_166, %c0_167], %266 {strides = array<i32>} : memref<16x32xf32, #tpu.memory_space<vmem>>, vector<16x32xf32>,
    %c0_168 = arith.constant 0 : index
    %c0_169 = arith.constant 0 : index
    %268 = tpu.strided_load %arg24[%c0_168, %c0_169] {strides = array<i32: 2, 1>} : memref<16x32xf32, #tpu.memory_space<vmem>>, vector<2x32xf32>
    %c0_170 = arith.constant 0 : index
    %c0_171 = arith.constant 0 : index
    %269 = vector.load %arg25[%c0_170, %c0_171] : memref<4x32xf32, #tpu.memory_space<vmem>>, vector<2x32xf32>
    tpu.vector_store %arg25[%c0_170, %c0_171], %268 {strides = array<i32>} : memref<4x32xf32, #tpu.memory_space<vmem>>, vector<2x32xf32>,
    %c8_172 = arith.constant 8 : index
    %c0_173 = arith.constant 0 : index
    %270 = tpu.strided_load %arg24[%c8_172, %c0_173] {strides = array<i32: 2, 1>} : memref<16x32xf32, #tpu.memory_space<vmem>>, vector<2x32xf32>
    %c2 = arith.constant 2 : index
    %c0_174 = arith.constant 0 : index
    %271 = vector.load %arg25[%c2, %c0_174] : memref<4x32xf32, #tpu.memory_space<vmem>>, vector<2x32xf32>
    tpu.vector_store %arg25[%c2, %c0_174], %270 {strides = array<i32>} : memref<4x32xf32, #tpu.memory_space<vmem>>, vector<2x32xf32>,
    %c0_175 = arith.constant 0 : index
    %c0_176 = arith.constant 0 : index
    %272 = vector.load %arg25[%c0_175, %c0_176] : memref<4x32xf32, #tpu.memory_space<vmem>>, vector<4x32xf32>
    %273 = tpu.iota {dimensions = array<i32: 0>} : vector<4x1xi32>
    %c1_i32_177 = arith.constant 1 : i32
    %274 = vector.broadcast %c1_i32_177 : i32 to vector<4x1xi32>
    %275 = arith.shrsi %273, %274 : vector<4x1xi32>
    %c1_i32_178 = arith.constant 1 : i32
    %276 = vector.broadcast %c1_i32_178 : i32 to vector<4x1xi32>
    %277 = arith.andi %273, %276 : vector<4x1xi32>
    %c1_i32_179 = arith.constant 1 : i32
    %278 = vector.broadcast %c1_i32_179 : i32 to vector<4x1xi32>
    %279 = arith.cmpi sge, %275, %278 : vector<4x1xi32>
    %c1_i32_180 = arith.constant 1 : i32
    %280 = vector.broadcast %c1_i32_180 : i32 to vector<4x1xi32>
    %281 = arith.cmpi slt, %275, %280 : vector<4x1xi32>
    %c1_i32_181 = arith.constant 1 : i32
    %282 = vector.broadcast %c1_i32_181 : i32 to vector<4x1xi32>
    %283 = arith.cmpi sge, %277, %282 : vector<4x1xi32>
    %c1_i32_182 = arith.constant 1 : i32
    %284 = vector.broadcast %c1_i32_182 : i32 to vector<4x1xi32>
    %285 = arith.cmpi slt, %277, %284 : vector<4x1xi32>
    %c3_i32_183 = arith.constant 3 : i32
    %286 = tpu.dynamic_rotate %272 by %c3_i32_183 dim 0 : vector<4x32xf32>, i32 -> vector<4x32xf32>
    %287 = arith.andi %279, %283 : vector<4x1xi1>
    %cst_184 = arith.constant 0.000000e+00 : f32
    %288 = vector.shape_cast %287 : vector<4x1xi1> to vector<4x1xi1>
    %289 = vector.broadcast %288 : vector<4x1xi1> to vector<4x32xi1>
    %290 = vector.broadcast %cst_184 : f32 to vector<4x32xf32>
    %291 = arith.select %289, %286, %290 : vector<4x32xi1>, vector<4x32xf32>
    %c0_185 = arith.constant 0 : index
    %c0_186 = arith.constant 0 : index
    %292 = vector.load %arg26[%c0_185, %c0_186] : memref<4x288xf32, #tpu.memory_space<vmem>>, vector<4x32xf32>
    tpu.vector_store %arg26[%c0_185, %c0_186], %291 {strides = array<i32>} : memref<4x288xf32, #tpu.memory_space<vmem>>, vector<4x32xf32>,
    %c2_i32_187 = arith.constant 2 : i32
    %293 = tpu.dynamic_rotate %272 by %c2_i32_187 dim 0 : vector<4x32xf32>, i32 -> vector<4x32xf32>
    %cst_188 = arith.constant 0.000000e+00 : f32
    %294 = vector.shape_cast %279 : vector<4x1xi1> to vector<4x1xi1>
    %295 = vector.broadcast %294 : vector<4x1xi1> to vector<4x32xi1>
    %296 = vector.broadcast %cst_188 : f32 to vector<4x32xf32>
    %297 = arith.select %295, %293, %296 : vector<4x32xi1>, vector<4x32xf32>
    %c0_189 = arith.constant 0 : index
    %c32_190 = arith.constant 32 : index
    %298 = vector.load %arg26[%c0_189, %c32_190] : memref<4x288xf32, #tpu.memory_space<vmem>>, vector<4x32xf32>
    tpu.vector_store %arg26[%c0_189, %c32_190], %297 {strides = array<i32>} : memref<4x288xf32, #tpu.memory_space<vmem>>, vector<4x32xf32>,
    %c1_i32_191 = arith.constant 1 : i32
    %299 = tpu.dynamic_rotate %272 by %c1_i32_191 dim 0 : vector<4x32xf32>, i32 -> vector<4x32xf32>
    %300 = arith.andi %279, %285 : vector<4x1xi1>
    %cst_192 = arith.constant 0.000000e+00 : f32
    %301 = vector.shape_cast %300 : vector<4x1xi1> to vector<4x1xi1>
    %302 = vector.broadcast %301 : vector<4x1xi1> to vector<4x32xi1>
    %303 = vector.broadcast %cst_192 : f32 to vector<4x32xf32>
    %304 = arith.select %302, %299, %303 : vector<4x32xi1>, vector<4x32xf32>
    %c0_193 = arith.constant 0 : index
    %c64_194 = arith.constant 64 : index
    %305 = vector.load %arg26[%c0_193, %c64_194] : memref<4x288xf32, #tpu.memory_space<vmem>>, vector<4x32xf32>
    tpu.vector_store %arg26[%c0_193, %c64_194], %304 {strides = array<i32>} : memref<4x288xf32, #tpu.memory_space<vmem>>, vector<4x32xf32>,
    %c1_i32_195 = arith.constant 1 : i32
    %306 = tpu.dynamic_rotate %272 by %c1_i32_195 dim 0 : vector<4x32xf32>, i32 -> vector<4x32xf32>
    %cst_196 = arith.constant 0.000000e+00 : f32
    %307 = vector.shape_cast %283 : vector<4x1xi1> to vector<4x1xi1>
    %308 = vector.broadcast %307 : vector<4x1xi1> to vector<4x32xi1>
    %309 = vector.broadcast %cst_196 : f32 to vector<4x32xf32>
    %310 = arith.select %308, %306, %309 : vector<4x32xi1>, vector<4x32xf32>
    %c0_197 = arith.constant 0 : index
    %c96_198 = arith.constant 96 : index
    %311 = vector.load %arg26[%c0_197, %c96_198] : memref<4x288xf32, #tpu.memory_space<vmem>>, vector<4x32xf32>
    tpu.vector_store %arg26[%c0_197, %c96_198], %310 {strides = array<i32>} : memref<4x288xf32, #tpu.memory_space<vmem>>, vector<4x32xf32>,
    %c0_199 = arith.constant 0 : index
    %c128_200 = arith.constant 128 : index
    %312 = vector.load %arg26[%c0_199, %c128_200] : memref<4x288xf32, #tpu.memory_space<vmem>>, vector<4x32xf32>
    tpu.vector_store %arg26[%c0_199, %c128_200], %272 {strides = array<i32>} : memref<4x288xf32, #tpu.memory_space<vmem>>, vector<4x32xf32>,
    %c3_i32_201 = arith.constant 3 : i32
    %313 = tpu.dynamic_rotate %272 by %c3_i32_201 dim 0 : vector<4x32xf32>, i32 -> vector<4x32xf32>
    %cst_202 = arith.constant 0.000000e+00 : f32
    %314 = vector.shape_cast %285 : vector<4x1xi1> to vector<4x1xi1>
    %315 = vector.broadcast %314 : vector<4x1xi1> to vector<4x32xi1>
    %316 = vector.broadcast %cst_202 : f32 to vector<4x32xf32>
    %317 = arith.select %315, %313, %316 : vector<4x32xi1>, vector<4x32xf32>
    %c0_203 = arith.constant 0 : index
    %c160_204 = arith.constant 160 : index
    %318 = vector.load %arg26[%c0_203, %c160_204] : memref<4x288xf32, #tpu.memory_space<vmem>>, vector<4x32xf32>
    tpu.vector_store %arg26[%c0_203, %c160_204], %317 {strides = array<i32>} : memref<4x288xf32, #tpu.memory_space<vmem>>, vector<4x32xf32>,
    %c3_i32_205 = arith.constant 3 : i32
    %319 = tpu.dynamic_rotate %272 by %c3_i32_205 dim 0 : vector<4x32xf32>, i32 -> vector<4x32xf32>
    %320 = arith.andi %281, %283 : vector<4x1xi1>
    %cst_206 = arith.constant 0.000000e+00 : f32
    %321 = vector.shape_cast %320 : vector<4x1xi1> to vector<4x1xi1>
    %322 = vector.broadcast %321 : vector<4x1xi1> to vector<4x32xi1>
    %323 = vector.broadcast %cst_206 : f32 to vector<4x32xf32>
    %324 = arith.select %322, %319, %323 : vector<4x32xi1>, vector<4x32xf32>
    %c0_207 = arith.constant 0 : index
    %c192_208 = arith.constant 192 : index
    %325 = vector.load %arg26[%c0_207, %c192_208] : memref<4x288xf32, #tpu.memory_space<vmem>>, vector<4x32xf32>
    tpu.vector_store %arg26[%c0_207, %c192_208], %324 {strides = array<i32>} : memref<4x288xf32, #tpu.memory_space<vmem>>, vector<4x32xf32>,
    %c2_i32_209 = arith.constant 2 : i32
    %326 = tpu.dynamic_rotate %272 by %c2_i32_209 dim 0 : vector<4x32xf32>, i32 -> vector<4x32xf32>
    %cst_210 = arith.constant 0.000000e+00 : f32
    %327 = vector.shape_cast %281 : vector<4x1xi1> to vector<4x1xi1>
    %328 = vector.broadcast %327 : vector<4x1xi1> to vector<4x32xi1>
    %329 = vector.broadcast %cst_210 : f32 to vector<4x32xf32>
    %330 = arith.select %328, %326, %329 : vector<4x32xi1>, vector<4x32xf32>
    %c0_211 = arith.constant 0 : index
    %c224_212 = arith.constant 224 : index
    %331 = vector.load %arg26[%c0_211, %c224_212] : memref<4x288xf32, #tpu.memory_space<vmem>>, vector<4x32xf32>
    tpu.vector_store %arg26[%c0_211, %c224_212], %330 {strides = array<i32>} : memref<4x288xf32, #tpu.memory_space<vmem>>, vector<4x32xf32>,
    %c1_i32_213 = arith.constant 1 : i32
    %332 = tpu.dynamic_rotate %272 by %c1_i32_213 dim 0 : vector<4x32xf32>, i32 -> vector<4x32xf32>
    %333 = arith.andi %281, %285 : vector<4x1xi1>
    %cst_214 = arith.constant 0.000000e+00 : f32
    %334 = vector.shape_cast %333 : vector<4x1xi1> to vector<4x1xi1>
    %335 = vector.broadcast %334 : vector<4x1xi1> to vector<4x32xi1>
    %336 = vector.broadcast %cst_214 : f32 to vector<4x32xf32>
    %337 = arith.select %335, %332, %336 : vector<4x32xi1>, vector<4x32xf32>
    %c0_215 = arith.constant 0 : index
    %c256 = arith.constant 256 : index
    %338 = vector.load %arg26[%c0_215, %c256] : memref<4x288xf32, #tpu.memory_space<vmem>>, vector<4x32xf32>
    tpu.vector_store %arg26[%c0_215, %c256], %337 {strides = array<i32>} : memref<4x288xf32, #tpu.memory_space<vmem>>, vector<4x32xf32>,
    %c0_216 = arith.constant 0 : index
    %c0_217 = arith.constant 0 : index
    %339 = vector.load %arg26[%c0_216, %c0_217] : memref<4x288xf32, #tpu.memory_space<vmem>>, vector<4x288xf32>
    %340 = arith.truncf %339 : vector<4x288xf32> to vector<4x288xbf16>
    %c0_218 = arith.constant 0 : index
    %c0_219 = arith.constant 0 : index
    %341 = vector.load %arg8[%c0_218, %c0_219] : memref<288x64xbf16, #tpu.memory_space<vmem>>, vector<288x64xbf16>
    %cst_220 = arith.constant dense<0.000000e+00> : vector<4x64xf32>
    %342 = tpu.matmul %340, %341, %cst_220 {dimension_numbers = #tpu.dot_dimension_numbers<[1], [0], [0], [1], [0, 0, 1, 1], [], []>} : vector<4x288xbf16>, vector<288x64xbf16>, vector<4x64xf32> -> vector<4x64xf32>
    %c0_221 = arith.constant 0 : index
    %c0_222 = arith.constant 0 : index
    %343 = vector.load %arg9[%c0_221, %c0_222] : memref<1x64xf32, #tpu.memory_space<vmem>>, vector<1x64xf32>
    %344 = vector.broadcast %343 : vector<1x64xf32> to vector<4x64xf32>
    %345 = arith.addf %342, %344 : vector<4x64xf32>
    %cst_223 = arith.constant 0.000000e+00 : f32
    %346 = vector.broadcast %cst_223 : f32 to vector<4x64xf32>
    %347 = arith.maximumf %345, %346 : vector<4x64xf32>
    %c3_i32_224 = arith.constant 3 : i32
    %348 = tpu.dynamic_rotate %347 by %c3_i32_224 dim 0 : vector<4x64xf32>, i32 -> vector<4x64xf32>
    %349 = arith.maximumf %347, %348 : vector<4x64xf32>
    %c2_i32_225 = arith.constant 2 : i32
    %350 = tpu.dynamic_rotate %349 by %c2_i32_225 dim 0 : vector<4x64xf32>, i32 -> vector<4x64xf32>
    %351 = arith.maximumf %349, %350 : vector<4x64xf32>
    %c0_226 = arith.constant 0 : index
    %c0_227 = arith.constant 0 : index
    %352 = vector.load %arg27[%c0_226, %c0_227] : memref<4x64xf32, #tpu.memory_space<vmem>>, vector<4x64xf32>
    tpu.vector_store %arg27[%c0_226, %c0_227], %351 {strides = array<i32>} : memref<4x64xf32, #tpu.memory_space<vmem>>, vector<4x64xf32>,
    %c0_228 = arith.constant 0 : index
    %c0_229 = arith.constant 0 : index
    %353 = vector.load %arg27[%c0_228, %c0_229] : memref<4x64xf32, #tpu.memory_space<vmem>>, vector<1x64xf32>
    %c0_230 = arith.constant 0 : index
    %c0_231 = arith.constant 0 : index
    %354 = vector.load %arg28[%c0_230, %c0_231] : memref<1x64xf32, #tpu.memory_space<vmem>>, vector<1x64xf32>
    tpu.vector_store %arg28[%c0_230, %c0_231], %353 {strides = array<i32>} : memref<1x64xf32, #tpu.memory_space<vmem>>, vector<1x64xf32>,
    %c0_232 = arith.constant 0 : index
    %c0_233 = arith.constant 0 : index
    %355 = vector.load %arg28[%c0_232, %c0_233] : memref<1x64xf32, #tpu.memory_space<vmem>>, vector<1x64xf32>
    %356 = arith.truncf %355 : vector<1x64xf32> to vector<1x64xbf16>
    %c0_234 = arith.constant 0 : index
    %c0_235 = arith.constant 0 : index
    %357 = vector.load %arg10[%c0_234, %c0_235] : memref<64x32xbf16, #tpu.memory_space<vmem>>, vector<64x32xbf16>
    %cst_236 = arith.constant dense<0.000000e+00> : vector<1x32xf32>
    %358 = tpu.matmul %356, %357, %cst_236 {dimension_numbers = #tpu.dot_dimension_numbers<[1], [0], [0], [1], [0, 0, 1, 1], [], []>} : vector<1x64xbf16>, vector<64x32xbf16>, vector<1x32xf32> -> vector<1x32xf32>
    %c0_237 = arith.constant 0 : index
    %c0_238 = arith.constant 0 : index
    %359 = vector.load %arg11[%c0_237, %c0_238] : memref<1x32xf32, #tpu.memory_space<vmem>>, vector<1x32xf32>
    %360 = arith.addf %358, %359 : vector<1x32xf32>
    %cst_239 = arith.constant 0.000000e+00 : f32
    %361 = vector.broadcast %cst_239 : f32 to vector<1x32xf32>
    %362 = arith.maximumf %360, %361 : vector<1x32xf32>
    %363 = arith.truncf %362 : vector<1x32xf32> to vector<1x32xbf16>
    %c0_240 = arith.constant 0 : index
    %c0_241 = arith.constant 0 : index
    %364 = vector.load %arg12[%c0_240, %c0_241] : memref<32x16xbf16, #tpu.memory_space<vmem>>, vector<32x16xbf16>
    %cst_242 = arith.constant dense<0.000000e+00> : vector<1x16xf32>
    %365 = tpu.matmul %363, %364, %cst_242 {dimension_numbers = #tpu.dot_dimension_numbers<[1], [0], [0], [1], [0, 0, 1, 1], [], []>} : vector<1x32xbf16>, vector<32x16xbf16>, vector<1x16xf32> -> vector<1x16xf32>
    %c0_243 = arith.constant 0 : index
    %c0_244 = arith.constant 0 : index
    %366 = vector.load %arg13[%c0_243, %c0_244] : memref<1x16xf32, #tpu.memory_space<vmem>>, vector<1x16xf32>
    %367 = arith.addf %365, %366 : vector<1x16xf32>
    %cst_245 = arith.constant 0.000000e+00 : f32
    %368 = vector.broadcast %cst_245 : f32 to vector<1x16xf32>
    %369 = arith.maximumf %367, %368 : vector<1x16xf32>
    %370 = arith.truncf %369 : vector<1x16xf32> to vector<1x16xbf16>
    %c0_246 = arith.constant 0 : index
    %c0_247 = arith.constant 0 : index
    %371 = vector.load %arg14[%c0_246, %c0_247] : memref<16x10xbf16, #tpu.memory_space<vmem>>, vector<16x10xbf16>
    %cst_248 = arith.constant dense<0.000000e+00> : vector<1x10xf32>
    %372 = tpu.matmul %370, %371, %cst_248 {dimension_numbers = #tpu.dot_dimension_numbers<[1], [0], [0], [1], [0, 0, 1, 1], [], []>} : vector<1x16xbf16>, vector<16x10xbf16>, vector<1x10xf32> -> vector<1x10xf32>
    %c0_249 = arith.constant 0 : index
    %c0_250 = arith.constant 0 : index
    %373 = vector.load %arg15[%c0_249, %c0_250] : memref<1x10xf32, #tpu.memory_space<vmem>>, vector<1x10xf32>
    %374 = arith.addf %372, %373 : vector<1x10xf32>
    %c0_251 = arith.constant 0 : index
    %c0_252 = arith.constant 0 : index
    %c0_253 = arith.constant 0 : index
    %375 = vector.load %arg16[%c0_251, %c0_252, %c0_253] : memref<1x1x10xf32, #tpu.memory_space<vmem>>, vector<1x1x10xf32>
    %376 = vector.shape_cast %375 : vector<1x1x10xf32> to vector<1x10xf32>
    %377 = vector.shape_cast %374 : vector<1x10xf32> to vector<1x1x10xf32>
    tpu.vector_store %arg16[%c0_251, %c0_252, %c0_253], %377 {strides = array<i32>} : memref<1x1x10xf32, #tpu.memory_space<vmem>>, vector<1x1x10xf32>,
    return
  }
  func.func @transform_0(%arg0: i32) -> (i32, i32, i32) {
    %c0_i32 = arith.constant 0 : i32
    %c0_i32_0 = arith.constant 0 : i32
    %c0_i32_1 = arith.constant 0 : i32
    return %arg0, %c0_i32, %c0_i32_0 : i32, i32, i32
  }
  func.func @transform_1(%arg0: i32) -> (i32, i32) {
    %c0_i32 = arith.constant 0 : i32
    %c0_i32_0 = arith.constant 0 : i32
    %c0_i32_1 = arith.constant 0 : i32
    return %c0_i32, %c0_i32_0 : i32, i32
  }
  func.func @transform_2(%arg0: i32) -> (i32, i32) {
    %c0_i32 = arith.constant 0 : i32
    %c0_i32_0 = arith.constant 0 : i32
    %c0_i32_1 = arith.constant 0 : i32
    return %c0_i32, %c0_i32_0 : i32, i32
  }
  func.func @transform_3(%arg0: i32) -> (i32, i32) {
    %c0_i32 = arith.constant 0 : i32
    %c0_i32_0 = arith.constant 0 : i32
    %c0_i32_1 = arith.constant 0 : i32
    return %c0_i32, %c0_i32_0 : i32, i32
  }
  func.func @transform_4(%arg0: i32) -> (i32, i32) {
    %c0_i32 = arith.constant 0 : i32
    %c0_i32_0 = arith.constant 0 : i32
    %c0_i32_1 = arith.constant 0 : i32
    return %c0_i32, %c0_i32_0 : i32, i32
  }
  func.func @transform_5(%arg0: i32) -> (i32, i32) {
    %c0_i32 = arith.constant 0 : i32
    %c0_i32_0 = arith.constant 0 : i32
    %c0_i32_1 = arith.constant 0 : i32
    return %c0_i32, %c0_i32_0 : i32, i32
  }
  func.func @transform_6(%arg0: i32) -> (i32, i32) {
    %c0_i32 = arith.constant 0 : i32
    %c0_i32_0 = arith.constant 0 : i32
    %c0_i32_1 = arith.constant 0 : i32
    return %c0_i32, %c0_i32_0 : i32, i32
  }
  func.func @transform_7(%arg0: i32) -> (i32, i32) {
    %c0_i32 = arith.constant 0 : i32
    %c0_i32_0 = arith.constant 0 : i32
    %c0_i32_1 = arith.constant 0 : i32
    return %c0_i32, %c0_i32_0 : i32, i32
  }
  func.func @transform_8(%arg0: i32) -> (i32, i32) {
    %c0_i32 = arith.constant 0 : i32
    %c0_i32_0 = arith.constant 0 : i32
    %c0_i32_1 = arith.constant 0 : i32
    return %c0_i32, %c0_i32_0 : i32, i32
  }
  func.func @transform_9(%arg0: i32) -> (i32, i32) {
    %c0_i32 = arith.constant 0 : i32
    %c0_i32_0 = arith.constant 0 : i32
    %c0_i32_1 = arith.constant 0 : i32
    return %c0_i32, %c0_i32_0 : i32, i32
  }
  func.func @transform_10(%arg0: i32) -> (i32, i32) {
    %c0_i32 = arith.constant 0 : i32
    %c0_i32_0 = arith.constant 0 : i32
    %c0_i32_1 = arith.constant 0 : i32
    return %c0_i32, %c0_i32_0 : i32, i32
  }
  func.func @transform_11(%arg0: i32) -> (i32, i32) {
    %c0_i32 = arith.constant 0 : i32
    %c0_i32_0 = arith.constant 0 : i32
    %c0_i32_1 = arith.constant 0 : i32
    return %c0_i32, %c0_i32_0 : i32, i32
  }
  func.func @transform_12(%arg0: i32) -> (i32, i32) {
    %c0_i32 = arith.constant 0 : i32
    %c0_i32_0 = arith.constant 0 : i32
    %c0_i32_1 = arith.constant 0 : i32
    return %c0_i32, %c0_i32_0 : i32, i32
  }
  func.func @transform_13(%arg0: i32) -> (i32, i32) {
    %c0_i32 = arith.constant 0 : i32
    %c0_i32_0 = arith.constant 0 : i32
    %c0_i32_1 = arith.constant 0 : i32
    return %c0_i32, %c0_i32_0 : i32, i32
  }
  func.func @transform_14(%arg0: i32) -> (i32, i32) {
    %c0_i32 = arith.constant 0 : i32
    %c0_i32_0 = arith.constant 0 : i32
    %c0_i32_1 = arith.constant 0 : i32
    return %c0_i32, %c0_i32_0 : i32, i32
  }
  func.func @transform_15(%arg0: i32) -> (i32, i32, i32) {
    %c0_i32 = arith.constant 0 : i32
    %c0_i32_0 = arith.constant 0 : i32
    %c0_i32_1 = arith.constant 0 : i32
    return %arg0, %c0_i32, %c0_i32_0 : i32, i32, i32
  }
}

</mosaic_0001>

<llo_original>
// kernel: cnn_forward.1
$region0: #{cnn_forward.1}
  #allocation0 [shape = 'u32[]', space=smem, size = 0x4, offset = 0x4, fixed_abs, tag = 'smem constant byte address 0x4 - core index']
  #allocation1 [shape = 'u32[144,128]{1,0:T(1,128)}', space=vmem, size = 0x12000, scoped, tag = 'internal scratch']
  #allocation2 [shape = 'f32[256,36]{1,0:T(8,128)}', space=vmem, size = 0x20000, scoped, tag = 'scratch operand']
  #allocation3 [shape = 'f32[256,8]{1,0:T(8,128)}', space=vmem, size = 0x20000, scoped, tag = 'scratch operand']
  #allocation4 [shape = 'f32[64,8]{1,0:T(8,128)}', space=vmem, size = 0x8000, scoped, tag = 'scratch operand']
  #allocation5 [shape = 'f32[64,72]{1,0:T(8,128)}', space=vmem, size = 0x8000, scoped, tag = 'scratch operand']
  #allocation6 [shape = 'f32[64,16]{1,0:T(8,128)}', space=vmem, size = 0x8000, scoped, tag = 'scratch operand']
  #allocation7 [shape = 'f32[16,16]{1,0:T(8,128)}', space=vmem, size = 0x2000, scoped, tag = 'scratch operand']
  #allocation8 [shape = 'f32[16,144]{1,0:T(8,128)}', space=vmem, size = 0x4000, scoped, tag = 'scratch operand']
  #allocation9 [shape = 'f32[16,32]{1,0:T(8,128)}', space=vmem, size = 0x2000, scoped, tag = 'scratch operand']
  #allocation10 [shape = 'f32[4,32]{1,0:T(4,128)}', space=vmem, size = 0x800, scoped, tag = 'scratch operand']
  #allocation11 [shape = 'f32[4,288]{1,0:T(4,128)}', space=vmem, size = 0x1800, scoped, tag = 'scratch operand']
  #allocation12 [shape = 'f32[4,64]{1,0:T(4,128)}', space=vmem, size = 0x800, scoped, tag = 'scratch operand']
  #allocation13 [shape = 'f32[1,64]{1,0:T(1,128)}', space=vmem, size = 0x200, scoped, tag = 'scratch operand']
  %s0 = inlined_call_operand.vmem [shape: f32[2,256,4], index: 0, kind: input, shape index: {}]
  %s1 = inlined_call_operand.vmem [shape: bf16[36,8], index: 1, kind: input, shape index: {}]
  %s2 = inlined_call_operand.vmem [shape: f32[1,8], index: 2, kind: input, shape index: {}]
  %s3 = inlined_call_operand.vmem [shape: bf16[72,16], index: 3, kind: input, shape index: {}]
  %s4 = inlined_call_operand.vmem [shape: f32[1,16], index: 4, kind: input, shape index: {}]
  %s5 = inlined_call_operand.vmem [shape: bf16[144,32], index: 5, kind: input, shape index: {}]
  %s6 = inlined_call_operand.vmem [shape: f32[1,32], index: 6, kind: input, shape index: {}]
  %s7 = inlined_call_operand.vmem [shape: bf16[288,64], index: 7, kind: input, shape index: {}]
  %s8 = inlined_call_operand.vmem [shape: f32[1,64], index: 8, kind: input, shape index: {}]
  %s9 = inlined_call_operand.vmem [shape: bf16[64,32], index: 9, kind: input, shape index: {}]
  %s10 = inlined_call_operand.vmem [shape: f32[1,32], index: 10, kind: input, shape index: {}]
  %s11 = inlined_call_operand.vmem [shape: bf16[32,16], index: 11, kind: input, shape index: {}]
  %s12 = inlined_call_operand.vmem [shape: f32[1,16], index: 12, kind: input, shape index: {}]
  %s13 = inlined_call_operand.vmem [shape: bf16[16,10], index: 13, kind: input, shape index: {}]
  %s14 = inlined_call_operand.vmem [shape: f32[1,10], index: 14, kind: input, shape index: {}]
  %s15 = inlined_call_operand.hbm [shape: f32[2,1,10], index: 15, kind: output, shape index: {}]
  %s16 = sld [smem:[#allocation0]]
  $region93: #{cnn_forward.1} parent=0
    _
  %s18 = ssub.s32 1, %s16
  %s19 = scalar_select 0, %s18, %s16
  $region1: #{cnn_forward.1} parent=0
    #allocation14 [shape = 'u8[1024]{0}', space=vmem, size = 0x400, scoped, tag = 'output window, operand 0']
    #allocation15 [shape = 's32[2]{0}', space=sflag, size = 0x8, scoped, tag = 'scoped memory for cnn_forward.1']
    %20 = vsyncpa [#allocation15], 0
    %s21 = scalar_lea.sflag [#allocation15], 1
    %22 = vsyncpa %s21, 0
    loop: start=0, step=1, limit=4
    $region2: #{cnn_forward.1} parent=1 // loop_pre_header
      _
    $region3: #{cnn_forward.1} parent=1 // loop_header
      %s24 = sphi 0, %s28
      %p25 = scmp.ge.s32.totalorder %s24, 4
      %s34 = sphi 0, %s36
      %s37 = sphi 0, %s34
      %s38 = sphi 0, %s37
      %s54 = sphi 0, %s38
      %s58 = sphi 0, %s58
      %s60 = sphi 0, %s58
      %s61 = sphi 0, %s60
      %s75 = sphi 0, %s61
      %s79 = sphi 0, %s79
      %s81 = sphi 0, %s79
      %s82 = sphi 0, %s81
      %s96 = sphi 0, %s82
      %s100 = sphi 0, %s100
      %s102 = sphi 0, %s100
      %s103 = sphi 0, %s102
      %s117 = sphi 0, %s103
      %s121 = sphi 0, %s121
      %s123 = sphi 0, %s121
      %s124 = sphi 0, %s123
      %s138 = sphi 0, %s124
      %s142 = sphi 0, %s142
      %s144 = sphi 0, %s142
      %s145 = sphi 0, %s144
      %s159 = sphi 0, %s145
      %s163 = sphi 0, %s163
      %s165 = sphi 0, %s163
      %s166 = sphi 0, %s165
      %s180 = sphi 0, %s166
      %s184 = sphi 0, %s184
      %s186 = sphi 0, %s184
      %s187 = sphi 0, %s186
      %s201 = sphi 0, %s187
      %s205 = sphi 0, %s205
      %s207 = sphi 0, %s205
      %s208 = sphi 0, %s207
      %s222 = sphi 0, %s208
      %s226 = sphi 0, %s226
      %s228 = sphi 0, %s226
      %s229 = sphi 0, %s228
      %s243 = sphi 0, %s229
      %s247 = sphi 0, %s247
      %s249 = sphi 0, %s247
      %s250 = sphi 0, %s249
      %s264 = sphi 0, %s250
      %s268 = sphi 0, %s268
      %s270 = sphi 0, %s268
      %s271 = sphi 0, %s270
      %s285 = sphi 0, %s271
      %s289 = sphi 0, %s289
      %s291 = sphi 0, %s289
      %s292 = sphi 0, %s291
      %s306 = sphi 0, %s292
      %s310 = sphi 0, %s310
      %s312 = sphi 0, %s310
      %s313 = sphi 0, %s312
      %s327 = sphi 0, %s313
      %s331 = sphi 0, %s331
      %s333 = sphi 0, %s331
      %s334 = sphi 0, %s333
      %s348 = sphi 0, %s334
      %s354 = sphi 0, %s356
      %s357 = sphi 0, %s354
      %s358 = sphi 0, %s357
      %s374 = sphi 0, %s358
    $region4: #{cnn_forward.1} parent=1 // loop_header_branch
      %27 = sbr.rel (%p25) target = $region8
    $region5: #{cnn_forward.1} parent=1 // loop_body
      %s29 = ssub.s32 %s24, 1
      %s30 = ssub.s32 %s24, 2
      %s31 = sadd.s32 %s24, 1
      %s32 = ssub.s32 %s24, %s31
      %p33 = scmp.eq.s32.totalorder %s32, 0
      %s35 = sadd.s32 %s34, 1
      %s36 = scalar_select %p33, %s34, %s35
      %p39 = pneg %p33
      %p40 = scmp.eq.s32.totalorder %s24, 1
      %p41 = por %p39, %p40
      %p42 = scmp.ne.s32.totalorder %s34, %s37
      %p43 = scmp.eq.s32.totalorder %s24, 0
      %p44 = por %p42, %p43
      %p45 = scmp.ne.s32.totalorder %s34, %s37
      %p46 = scmp.eq.s32.totalorder %s29, 1
      %p47 = por %p45, %p46
      %p48 = scmp.ne.s32.totalorder %s37, %s38
      %p49 = scmp.eq.s32.totalorder %s29, 0
      %p50 = por %p48, %p49
      %p51 = scmp.ne.s32.totalorder %s37, %s38
      %p52 = scmp.eq.s32.totalorder %s30, 1
      %p53 = por %p51, %p52
      %p55 = scmp.ne.s32.totalorder %s38, %s54
      %p56 = scmp.eq.s32.totalorder %s30, 0
      %p57 = por %p55, %p56
      %s59 = sadd.s32 %s58, 1
      %p62 = scmp.eq.s32.totalorder %s24, 1
      %p63 = scmp.ne.s32.totalorder %s58, %s60
      %p64 = scmp.eq.s32.totalorder %s24, 0
      %p65 = por %p63, %p64
      %p66 = scmp.ne.s32.totalorder %s58, %s60
      %p67 = scmp.eq.s32.totalorder %s29, 1
      %p68 = por %p66, %p67
      %p69 = scmp.ne.s32.totalorder %s60, %s61
      %p70 = scmp.eq.s32.totalorder %s29, 0
      %p71 = por %p69, %p70
      %p72 = scmp.ne.s32.totalorder %s60, %s61
      %p73 = scmp.eq.s32.totalorder %s30, 1
      %p74 = por %p72, %p73
      %p76 = scmp.ne.s32.totalorder %s61, %s75
      %p77 = scmp.eq.s32.totalorder %s30, 0
      %p78 = por %p76, %p77
      %s80 = sadd.s32 %s79, 1
      %p83 = scmp.eq.s32.totalorder %s24, 1
      %p84 = scmp.ne.s32.totalorder %s79, %s81
      %p85 = scmp.eq.s32.totalorder %s24, 0
      %p86 = por %p84, %p85
      %p87 = scmp.ne.s32.totalorder %s79, %s81
      %p88 = scmp.eq.s32.totalorder %s29, 1
      %p89 = por %p87, %p88
      %p90 = scmp.ne.s32.totalorder %s81, %s82
      %p91 = scmp.eq.s32.totalorder %s29, 0
      %p92 = por %p90, %p91
      %p93 = scmp.ne.s32.totalorder %s81, %s82
      %p94 = scmp.eq.s32.totalorder %s30, 1
      %p95 = por %p93, %p94
      %p97 = scmp.ne.s32.totalorder %s82, %s96
      %p98 = scmp.eq.s32.totalorder %s30, 0
      %p99 = por %p97, %p98
      %s101 = sadd.s32 %s100, 1
      %p104 = scmp.eq.s32.totalorder %s24, 1
      %p105 = scmp.ne.s32.totalorder %s100, %s102
      %p106 = scmp.eq.s32.totalorder %s24, 0
      %p107 = por %p105, %p106
      %p108 = scmp.ne.s32.totalorder %s100, %s102
      %p109 = scmp.eq.s32.totalorder %s29, 1
      %p110 = por %p108, %p109
      %p111 = scmp.ne.s32.totalorder %s102, %s103
      %p112 = scmp.eq.s32.totalorder %s29, 0
      %p113 = por %p111, %p112
      %p114 = scmp.ne.s32.totalorder %s102, %s103
      %p115 = scmp.eq.s32.totalorder %s30, 1
      %p116 = por %p114, %p115
      %p118 = scmp.ne.s32.totalorder %s103, %s117
      %p119 = scmp.eq.s32.totalorder %s30, 0
      %p120 = por %p118, %p119
      %s122 = sadd.s32 %s121, 1
      %p125 = scmp.eq.s32.totalorder %s24, 1
      %p126 = scmp.ne.s32.totalorder %s121, %s123
      %p127 = scmp.eq.s32.totalorder %s24, 0
      %p128 = por %p126, %p127
      %p129 = scmp.ne.s32.totalorder %s121, %s123
      %p130 = scmp.eq.s32.totalorder %s29, 1
      %p131 = por %p129, %p130
      %p132 = scmp.ne.s32.totalorder %s123, %s124
      %p133 = scmp.eq.s32.totalorder %s29, 0
      %p134 = por %p132, %p133
      %p135 = scmp.ne.s32.totalorder %s123, %s124
      %p136 = scmp.eq.s32.totalorder %s30, 1
      %p137 = por %p135, %p136
      %p139 = scmp.ne.s32.totalorder %s124, %s138
      %p140 = scmp.eq.s32.totalorder %s30, 0
      %p141 = por %p139, %p140
      %s143 = sadd.s32 %s142, 1
      %p146 = scmp.eq.s32.totalorder %s24, 1
      %p147 = scmp.ne.s32.totalorder %s142, %s144
      %p148 = scmp.eq.s32.totalorder %s24, 0
      %p149 = por %p147, %p148
      %p150 = scmp.ne.s32.totalorder %s142, %s144
      %p151 = scmp.eq.s32.totalorder %s29, 1
      %p152 = por %p150, %p151
      %p153 = scmp.ne.s32.totalorder %s144, %s145
      %p154 = scmp.eq.s32.totalorder %s29, 0
      %p155 = por %p153, %p154
      %p156 = scmp.ne.s32.totalorder %s144, %s145
      %p157 = scmp.eq.s32.totalorder %s30, 1
      %p158 = por %p156, %p157
      %p160 = scmp.ne.s32.totalorder %s145, %s159
      %p161 = scmp.eq.s32.totalorder %s30, 0
      %p162 = por %p160, %p161
      %s164 = sadd.s32 %s163, 1
      %p167 = scmp.eq.s32.totalorder %s24, 1
      %p168 = scmp.ne.s32.totalorder %s163, %s165
      %p169 = scmp.eq.s32.totalorder %s24, 0
      %p170 = por %p168, %p169
      %p171 = scmp.ne.s32.totalorder %s163, %s165
      %p172 = scmp.eq.s32.totalorder %s29, 1
      %p173 = por %p171, %p172
      %p174 = scmp.ne.s32.totalorder %s165, %s166
      %p175 = scmp.eq.s32.totalorder %s29, 0
      %p176 = por %p174, %p175
      %p177 = scmp.ne.s32.totalorder %s165, %s166
      %p178 = scmp.eq.s32.totalorder %s30, 1
      %p179 = por %p177, %p178
      %p181 = scmp.ne.s32.totalorder %s166, %s180
      %p182 = scmp.eq.s32.totalorder %s30, 0
      %p183 = por %p181, %p182
      %s185 = sadd.s32 %s184, 1
      %p188 = scmp.eq.s32.totalorder %s24, 1
      %p189 = scmp.ne.s32.totalorder %s184, %s186
      %p190 = scmp.eq.s32.totalorder %s24, 0
      %p191 = por %p189, %p190
      %p192 = scmp.ne.s32.totalorder %s184, %s186
      %p193 = scmp.eq.s32.totalorder %s29, 1
      %p194 = por %p192, %p193
      %p195 = scmp.ne.s32.totalorder %s186, %s187
      %p196 = scmp.eq.s32.totalorder %s29, 0
      %p197 = por %p195, %p196
      %p198 = scmp.ne.s32.totalorder %s186, %s187
      %p199 = scmp.eq.s32.totalorder %s30, 1
      %p200 = por %p198, %p199
      %p202 = scmp.ne.s32.totalorder %s187, %s201
      %p203 = scmp.eq.s32.totalorder %s30, 0
      %p204 = por %p202, %p203
      %s206 = sadd.s32 %s205, 1
      %p209 = scmp.eq.s32.totalorder %s24, 1
      %p210 = scmp.ne.s32.totalorder %s205, %s207
      %p211 = scmp.eq.s32.totalorder %s24, 0
      %p212 = por %p210, %p211
      %p213 = scmp.ne.s32.totalorder %s205, %s207
      %p214 = scmp.eq.s32.totalorder %s29, 1
      %p215 = por %p213, %p214
      %p216 = scmp.ne.s32.totalorder %s207, %s208
      %p217 = scmp.eq.s32.totalorder %s29, 0
      %p218 = por %p216, %p217
      %p219 = scmp.ne.s32.totalorder %s207, %s208
      %p220 = scmp.eq.s32.totalorder %s30, 1
      %p221 = por %p219, %p220
      %p223 = scmp.ne.s32.totalorder %s208, %s222
      %p224 = scmp.eq.s32.totalorder %s30, 0
      %p225 = por %p223, %p224
      %s227 = sadd.s32 %s226, 1
      %p230 = scmp.eq.s32.totalorder %s24, 1
      %p231 = scmp.ne.s32.totalorder %s226, %s228
      %p232 = scmp.eq.s32.totalorder %s24, 0
      %p233 = por %p231, %p232
      %p234 = scmp.ne.s32.totalorder %s226, %s228
      %p235 = scmp.eq.s32.totalorder %s29, 1
      %p236 = por %p234, %p235
      %p237 = scmp.ne.s32.totalorder %s228, %s229
      %p238 = scmp.eq.s32.totalorder %s29, 0
      %p239 = por %p237, %p238
      %p240 = scmp.ne.s32.totalorder %s228, %s229
      %p241 = scmp.eq.s32.totalorder %s30, 1
      %p242 = por %p240, %p241
      %p244 = scmp.ne.s32.totalorder %s229, %s243
      %p245 = scmp.eq.s32.totalorder %s30, 0
      %p246 = por %p244, %p245
      %s248 = sadd.s32 %s247, 1
      %p251 = scmp.eq.s32.totalorder %s24, 1
      %p252 = scmp.ne.s32.totalorder %s247, %s249
      %p253 = scmp.eq.s32.totalorder %s24, 0
      %p254 = por %p252, %p253
      %p255 = scmp.ne.s32.totalorder %s247, %s249
      %p256 = scmp.eq.s32.totalorder %s29, 1
      %p257 = por %p255, %p256
      %p258 = scmp.ne.s32.totalorder %s249, %s250
      %p259 = scmp.eq.s32.totalorder %s29, 0
      %p260 = por %p258, %p259
      %p261 = scmp.ne.s32.totalorder %s249, %s250
      %p262 = scmp.eq.s32.totalorder %s30, 1
      %p263 = por %p261, %p262
      %p265 = scmp.ne.s32.totalorder %s250, %s264
      %p266 = scmp.eq.s32.totalorder %s30, 0
      %p267 = por %p265, %p266
      %s269 = sadd.s32 %s268, 1
      %p272 = scmp.eq.s32.totalorder %s24, 1
      %p273 = scmp.ne.s32.totalorder %s268, %s270
      %p274 = scmp.eq.s32.totalorder %s24, 0
      %p275 = por %p273, %p274
      %p276 = scmp.ne.s32.totalorder %s268, %s270
      %p277 = scmp.eq.s32.totalorder %s29, 1
      %p278 = por %p276, %p277
      %p279 = scmp.ne.s32.totalorder %s270, %s271
      %p280 = scmp.eq.s32.totalorder %s29, 0
      %p281 = por %p279, %p280
      %p282 = scmp.ne.s32.totalorder %s270, %s271
      %p283 = scmp.eq.s32.totalorder %s30, 1
      %p284 = por %p282, %p283
      %p286 = scmp.ne.s32.totalorder %s271, %s285
      %p287 = scmp.eq.s32.totalorder %s30, 0
      %p288 = por %p286, %p287
      %s290 = sadd.s32 %s289, 1
      %p293 = scmp.eq.s32.totalorder %s24, 1
      %p294 = scmp.ne.s32.totalorder %s289, %s291
      %p295 = scmp.eq.s32.totalorder %s24, 0
      %p296 = por %p294, %p295
      %p297 = scmp.ne.s32.totalorder %s289, %s291
      %p298 = scmp.eq.s32.totalorder %s29, 1
      %p299 = por %p297, %p298
      %p300 = scmp.ne.s32.totalorder %s291, %s292
      %p301 = scmp.eq.s32.totalorder %s29, 0
      %p302 = por %p300, %p301
      %p303 = scmp.ne.s32.totalorder %s291, %s292
      %p304 = scmp.eq.s32.totalorder %s30, 1
      %p305 = por %p303, %p304
      %p307 = scmp.ne.s32.totalorder %s292, %s306
      %p308 = scmp.eq.s32.totalorder %s30, 0
      %p309 = por %p307, %p308
      %s311 = sadd.s32 %s310, 1
      %p314 = scmp.eq.s32.totalorder %s24, 1
      %p315 = scmp.ne.s32.totalorder %s310, %s312
      %p316 = scmp.eq.s32.totalorder %s24, 0
      %p317 = por %p315, %p316
      %p318 = scmp.ne.s32.totalorder %s310, %s312
      %p319 = scmp.eq.s32.totalorder %s29, 1
      %p320 = por %p318, %p319
      %p321 = scmp.ne.s32.totalorder %s312, %s313
      %p322 = scmp.eq.s32.totalorder %s29, 0
      %p323 = por %p321, %p322
      %p324 = scmp.ne.s32.totalorder %s312, %s313
      %p325 = scmp.eq.s32.totalorder %s30, 1
      %p326 = por %p324, %p325
      %p328 = scmp.ne.s32.totalorder %s313, %s327
      %p329 = scmp.eq.s32.totalorder %s30, 0
      %p330 = por %p328, %p329
      %s332 = sadd.s32 %s331, 1
      %p335 = scmp.eq.s32.totalorder %s24, 1
      %p336 = scmp.ne.s32.totalorder %s331, %s333
      %p337 = scmp.eq.s32.totalorder %s24, 0
      %p338 = por %p336, %p337
      %p339 = scmp.ne.s32.totalorder %s331, %s333
      %p340 = scmp.eq.s32.totalorder %s29, 1
      %p341 = por %p339, %p340
      %p342 = scmp.ne.s32.totalorder %s333, %s334
      %p343 = scmp.eq.s32.totalorder %s29, 0
      %p344 = por %p342, %p343
      %p345 = scmp.ne.s32.totalorder %s333, %s334
      %p346 = scmp.eq.s32.totalorder %s30, 1
      %p347 = por %p345, %p346
      %p349 = scmp.ne.s32.totalorder %s334, %s348
      %p350 = scmp.eq.s32.totalorder %s30, 0
      %p351 = por %p349, %p350
      %s352 = ssub.s32 %s24, %s31
      %p353 = scmp.eq.s32.totalorder %s352, 0
      %s355 = sadd.s32 %s354, 1
      %s356 = scalar_select %p353, %s354, %s355
      %p359 = pneg %p353
      %p360 = scmp.eq.s32.totalorder %s24, 1
      %p361 = por %p359, %p360
      %p362 = scmp.ne.s32.totalorder %s354, %s357
      %p363 = scmp.eq.s32.totalorder %s24, 0
      %p364 = por %p362, %p363
      %p365 = scmp.ne.s32.totalorder %s354, %s357
      %p366 = scmp.eq.s32.totalorder %s29, 1
      %p367 = por %p365, %p366
      %p368 = scmp.ne.s32.totalorder %s357, %s358
      %p369 = scmp.eq.s32.totalorder %s29, 0
      %p370 = por %p368, %p369
      %p371 = scmp.ne.s32.totalorder %s357, %s358
      %p372 = scmp.eq.s32.totalorder %s30, 1
      %p373 = por %p371, %p372
      %p375 = scmp.ne.s32.totalorder %s358, %s374
      %p376 = scmp.eq.s32.totalorder %s30, 0
      %p377 = por %p375, %p376
      %p378 = scmp.le.s32.totalorder 1, %s24
      %p379 = scmp.lt.s32.totalorder %s24, 3
      %p380 = pnand %p378, %p379
      %p381 = pneg %p380
      // Predicated region
      $region9: #{cnn_forward.1} parent=5 // pred_check
        _
      $region10: #{cnn_forward.1} parent=5 // pred_check_branch
        %383 = sbr.rel (%p380) target = $region12
      $region11: #{cnn_forward.1} parent=5 // pred_region
        %s384 = ssub.s32 %s24, 1
        // Predicated region
        $region13: #{cnn_forward.1} parent=11 // pred_check
          %p385 = pneg %p71
        $region14: #{cnn_forward.1} parent=11 // pred_check_branch
          %387 = sbr.rel (%p385) target = $region16
        $region15: #{cnn_forward.1} parent=11 // pred_region
          _
        $region16: #{cnn_forward.1} parent=11 // pred_fallthru
          _
        // Predicated region
        $region17: #{cnn_forward.1} parent=11 // pred_check
          %p388 = pneg %p92
        $region18: #{cnn_forward.1} parent=11 // pred_check_branch
          %390 = sbr.rel (%p388) target = $region20
        $region19: #{cnn_forward.1} parent=11 // pred_region
          _
        $region20: #{cnn_forward.1} parent=11 // pred_fallthru
          _
        // Predicated region
        $region21: #{cnn_forward.1} parent=11 // pred_check
          %p391 = pneg %p113
        $region22: #{cnn_forward.1} parent=11 // pred_check_branch
          %393 = sbr.rel (%p391) target = $region24
        $region23: #{cnn_forward.1} parent=11 // pred_region
          _
        $region24: #{cnn_forward.1} parent=11 // pred_fallthru
          _
        // Predicated region
        $region25: #{cnn_forward.1} parent=11 // pred_check
          %p394 = pneg %p134
        $region26: #{cnn_forward.1} parent=11 // pred_check_branch
          %396 = sbr.rel (%p394) target = $region28
        $region27: #{cnn_forward.1} parent=11 // pred_region
          _
        $region28: #{cnn_forward.1} parent=11 // pred_fallthru
          _
        // Predicated region
        $region29: #{cnn_forward.1} parent=11 // pred_check
          %p397 = pneg %p155
        $region30: #{cnn_forward.1} parent=11 // pred_check_branch
          %399 = sbr.rel (%p397) target = $region32
        $region31: #{cnn_forward.1} parent=11 // pred_region
          _
        $region32: #{cnn_forward.1} parent=11 // pred_fallthru
          _
        // Predicated region
        $region33: #{cnn_forward.1} parent=11 // pred_check
          %p400 = pneg %p176
        $region34: #{cnn_forward.1} parent=11 // pred_check_branch
          %402 = sbr.rel (%p400) target = $region36
        $region35: #{cnn_forward.1} parent=11 // pred_region
          _
        $region36: #{cnn_forward.1} parent=11 // pred_fallthru
          _
        // Predicated region
        $region37: #{cnn_forward.1} parent=11 // pred_check
          %p403 = pneg %p197
        $region38: #{cnn_forward.1} parent=11 // pred_check_branch
          %405 = sbr.rel (%p403) target = $region40
        $region39: #{cnn_forward.1} parent=11 // pred_region
          _
        $region40: #{cnn_forward.1} parent=11 // pred_fallthru
          _
        // Predicated region
        $region41: #{cnn_forward.1} parent=11 // pred_check
          %p406 = pneg %p218
        $region42: #{cnn_forward.1} parent=11 // pred_check_branch
          %408 = sbr.rel (%p406) target = $region44
        $region43: #{cnn_forward.1} parent=11 // pred_region
          _
        $region44: #{cnn_forward.1} parent=11 // pred_fallthru
          _
        // Predicated region
        $region45: #{cnn_forward.1} parent=11 // pred_check
          %p409 = pneg %p239
        $region46: #{cnn_forward.1} parent=11 // pred_check_branch
          %411 = sbr.rel (%p409) target = $region48
        $region47: #{cnn_forward.1} parent=11 // pred_region
          _
        $region48: #{cnn_forward.1} parent=11 // pred_fallthru
          _
        // Predicated region
        $region49: #{cnn_forward.1} parent=11 // pred_check
          %p412 = pneg %p260
        $region50: #{cnn_forward.1} parent=11 // pred_check_branch
          %414 = sbr.rel (%p412) target = $region52
        $region51: #{cnn_forward.1} parent=11 // pred_region
          _
        $region52: #{cnn_forward.1} parent=11 // pred_fallthru
          _
        // Predicated region
        $region53: #{cnn_forward.1} parent=11 // pred_check
          %p415 = pneg %p281
        $region54: #{cnn_forward.1} parent=11 // pred_check_branch
          %417 = sbr.rel (%p415) target = $region56
        $region55: #{cnn_forward.1} parent=11 // pred_region
          _
        $region56: #{cnn_forward.1} parent=11 // pred_fallthru
          _
        // Predicated region
        $region57: #{cnn_forward.1} parent=11 // pred_check
          %p418 = pneg %p302
        $region58: #{cnn_forward.1} parent=11 // pred_check_branch
          %420 = sbr.rel (%p418) target = $region60
        $region59: #{cnn_forward.1} parent=11 // pred_region
          _
        $region60: #{cnn_forward.1} parent=11 // pred_fallthru
          _
        // Predicated region
        $region61: #{cnn_forward.1} parent=11 // pred_check
          %p421 = pneg %p323
        $region62: #{cnn_forward.1} parent=11 // pred_check_branch
          %423 = sbr.rel (%p421) target = $region64
        $region63: #{cnn_forward.1} parent=11 // pred_region
          _
        $region64: #{cnn_forward.1} parent=11 // pred_fallthru
          _
        // Predicated region
        $region65: #{cnn_forward.1} parent=11 // pred_check
          %p424 = pneg %p344
        $region66: #{cnn_forward.1} parent=11 // pred_check_branch
          %426 = sbr.rel (%p424) target = $region68
        $region67: #{cnn_forward.1} parent=11 // pred_region
          _
        $region68: #{cnn_forward.1} parent=11 // pred_fallthru
          _
      $region12: #{cnn_forward.1} parent=5 // pred_fallthru
        _
      %p427 = scmp.lt.s32.totalorder %s24, 2
      // Predicated region
      $region69: #{cnn_forward.1} parent=5 // pred_check
        %p428 = pneg %p427
      $region70: #{cnn_forward.1} parent=5 // pred_check_branch
        %430 = sbr.rel (%p428) target = $region72
      $region71: #{cnn_forward.1} parent=5 // pred_region
        // Predicated region
        $region73: #{cnn_forward.1} parent=71 // pred_check
          %p431 = pneg %p44
        $region74: #{cnn_forward.1} parent=71 // pred_check_branch
          %433 = sbr.rel (%p431) target = $region76
        $region75: #{cnn_forward.1} parent=71 // pred_region
          %p434 = scmp.lt.s32.totalorder %s24, 1
          %s435 = scalar_select %p434, %s24, 1
          %s436 = smul.addr %s435, 32
          %s437 = smul.addr %s436, 8
          %s438 = scalar_lea.vmem %s0, %s437
        $region76: #{cnn_forward.1} parent=71 // pred_fallthru
          _
      $region72: #{cnn_forward.1} parent=5 // pred_fallthru
        _
      %p439 = scmp.le.s32.totalorder 1, %s24
      %p440 = scmp.lt.s32.totalorder %s24, 3
      %p441 = pnand %p439, %p440
      %p442 = pneg %p441
      // Predicated region
      $region77: #{cnn_forward.1} parent=5 // pred_check
        _
      $region78: #{cnn_forward.1} parent=5 // pred_check_branch
        %444 = sbr.rel (%p441) target = $region80
      $region79: #{cnn_forward.1} parent=5 // pred_region
        %s445 = ssub.s32 %s24, 1
        %p446 = scmp.lt.s32.totalorder %s29, 1
        %s447 = scalar_select %p446, %s29, 1
        %s448 = smul.addr %s447, 32
        %s449 = smul.addr %s448, 8
        %s450 = scalar_lea.vmem %s0, %s449
        %p451 = pneg %p50
        %p452 = pneg %p47
        %p453 = pneg %p71
        %p454 = pneg %p68
        %p455 = pneg %p92
        %p456 = pneg %p89
        %p457 = pneg %p113
        %p458 = pneg %p110
        %p459 = pneg %p134
        %p460 = pneg %p131
        %p461 = pneg %p155
        %p462 = pneg %p152
        %p463 = pneg %p176
        %p464 = pneg %p173
        %p465 = pneg %p197
        %p466 = pneg %p194
        %p467 = pneg %p218
        %p468 = pneg %p215
        %p469 = pneg %p239
        %p470 = pneg %p236
        %p471 = pneg %p260
        %p472 = pneg %p257
        %p473 = pneg %p281
        %p474 = pneg %p278
        %p475 = pneg %p302
        %p476 = pneg %p299
        %p477 = pneg %p323
        %p478 = pneg %p320
        %p479 = pneg %p344
        %p480 = pneg %p341
        %p481 = pneg %p370
        %p482 = pneg %p367
        %s483 = sand.u32 %s357, 1
        %s484 = scalar_lea.sflag [#allocation15], %s483
        %s485 = sand.u32 %s357, 1
        %s486 = scalar_lea.vmem [#allocation14], %s485
        %p487 = scmp.lt.s32.totalorder %s29, 1
        %s488 = scalar_select %p487, %s29, 1
        %s489 = smul.addr %s488, 32
        %s490 = smul.addr %s489, 8
        %s491 = scalar_lea.vmem %s0, %s490
        %v493 = vld [vmem:[%s491] sm:$0xff]
        %v494 = vld [vmem:[%s491 + $0x8] sm:$0xff]
        %v495 = vld [vmem:[%s491 + $0x10] sm:$0xff]
        %v496 = vld [vmem:[%s491 + $0x18] sm:$0xff]
        %v497 = vld [vmem:[%s491 + $0x20] sm:$0xff]
        %v498 = vld [vmem:[%s491 + $0x28] sm:$0xff]
        %v499 = vld [vmem:[%s491 + $0x30] sm:$0xff]
        %v500 = vld [vmem:[%s491 + $0x38] sm:$0xff]
        %v501 = vld [vmem:[%s491 + $0x40] sm:$0xff]
        %v502 = vld [vmem:[%s491 + $0x48] sm:$0xff]
        %v503 = vld [vmem:[%s491 + $0x50] sm:$0xff]
        %v504 = vld [vmem:[%s491 + $0x58] sm:$0xff]
        %v505 = vld [vmem:[%s491 + $0x60] sm:$0xff]
        %v506 = vld [vmem:[%s491 + $0x68] sm:$0xff]
        %v507 = vld [vmem:[%s491 + $0x70] sm:$0xff]
        %v508 = vld [vmem:[%s491 + $0x78] sm:$0xff]
        %v509 = vld [vmem:[%s491 + $0x80] sm:$0xff]
        %v510 = vld [vmem:[%s491 + $0x88] sm:$0xff]
        %v511 = vld [vmem:[%s491 + $0x90] sm:$0xff]
        %v512 = vld [vmem:[%s491 + $0x98] sm:$0xff]
        %v513 = vld [vmem:[%s491 + $0xa0] sm:$0xff]
        %v514 = vld [vmem:[%s491 + $0xa8] sm:$0xff]
        %v515 = vld [vmem:[%s491 + $0xb0] sm:$0xff]
        %v516 = vld [vmem:[%s491 + $0xb8] sm:$0xff]
        %v517 = vld [vmem:[%s491 + $0xc0] sm:$0xff]
        %v518 = vld [vmem:[%s491 + $0xc8] sm:$0xff]
        %v519 = vld [vmem:[%s491 + $0xd0] sm:$0xff]
        %v520 = vld [vmem:[%s491 + $0xd8] sm:$0xff]
        %v521 = vld [vmem:[%s491 + $0xe0] sm:$0xff]
        %v522 = vld [vmem:[%s491 + $0xe8] sm:$0xff]
        %v523 = vld [vmem:[%s491 + $0xf0] sm:$0xff]
        %v524 = vld [vmem:[%s491 + $0xf8] sm:$0xff]
        %v525 = vlaneseq
        %v526 = vshrl.u32 %v525, 7
        %v527 = vadd.s32 %v526, 8
        %v528 = vadd.s32 %v526, 16
        %v529 = vadd.s32 %v526, 24
        %v530 = vadd.s32 %v526, 32
        %v531 = vadd.s32 %v526, 40
        %v532 = vadd.s32 %v526, 48
        %v533 = vadd.s32 %v526, 56
        %v534 = vadd.s32 %v526, 64
        %v535 = vadd.s32 %v526, 72
        %v536 = vadd.s32 %v526, 80
        %v537 = vadd.s32 %v526, 88
        %v538 = vadd.s32 %v526, 96
        %v539 = vadd.s32 %v526, 104
        %v540 = vadd.s32 %v526, 112
        %v541 = vadd.s32 %v526, 120
        %v542 = vadd.s32 %v526, 128
        %v543 = vadd.s32 %v526, 136
        %v544 = vadd.s32 %v526, 144
        %v545 = vadd.s32 %v526, 152
        %v546 = vadd.s32 %v526, 160
        %v547 = vadd.s32 %v526, 168
        %v548 = vadd.s32 %v526, 176
        %v549 = vadd.s32 %v526, 184
        %v550 = vadd.s32 %v526, 192
        %v551 = vadd.s32 %v526, 200
        %v552 = vadd.s32 %v526, 208
        %v553 = vadd.s32 %v526, 216
        %v554 = vadd.s32 %v526, 224
        %v555 = vadd.s32 %v526, 232
        %v556 = vadd.s32 %v526, 240
        %v557 = vadd.s32 %v526, 248
        %v558 = vshra.s32 %v526, 4
        %v559 = vshra.s32 %v527, 4
        %v560 = vshra.s32 %v528, 4
        %v561 = vshra.s32 %v529, 4
        %v562 = vshra.s32 %v530, 4
        %v563 = vshra.s32 %v531, 4
        %v564 = vshra.s32 %v532, 4
        %v565 = vshra.s32 %v533, 4
        %v566 = vshra.s32 %v534, 4
        %v567 = vshra.s32 %v535, 4
        %v568 = vshra.s32 %v536, 4
        %v569 = vshra.s32 %v537, 4
        %v570 = vshra.s32 %v538, 4
        %v571 = vshra.s32 %v539, 4
        %v572 = vshra.s32 %v540, 4
        %v573 = vshra.s32 %v541, 4
        %v574 = vshra.s32 %v542, 4
        %v575 = vshra.s32 %v543, 4
        %v576 = vshra.s32 %v544, 4
        %v577 = vshra.s32 %v545, 4
        %v578 = vshra.s32 %v546, 4
        %v579 = vshra.s32 %v547, 4
        %v580 = vshra.s32 %v548, 4
        %v581 = vshra.s32 %v549, 4
        %v582 = vshra.s32 %v550, 4
        %v583 = vshra.s32 %v551, 4
        %v584 = vshra.s32 %v552, 4
        %v585 = vshra.s32 %v553, 4
        %v586 = vshra.s32 %v554, 4
        %v587 = vshra.s32 %v555, 4
        %v588 = vshra.s32 %v556, 4
        %v589 = vshra.s32 %v557, 4
        %v590 = vand.u32 %v526, 15
        %v591 = vand.u32 %v527, 15
        %v592 = vand.u32 %v528, 15
        %v593 = vand.u32 %v529, 15
        %v594 = vand.u32 %v530, 15
        %v595 = vand.u32 %v531, 15
        %v596 = vand.u32 %v532, 15
        %v597 = vand.u32 %v533, 15
        %v598 = vand.u32 %v534, 15
        %v599 = vand.u32 %v535, 15
        %v600 = vand.u32 %v536, 15
        %v601 = vand.u32 %v537, 15
        %v602 = vand.u32 %v538, 15
        %v603 = vand.u32 %v539, 15
        %v604 = vand.u32 %v540, 15
        %v605 = vand.u32 %v541, 15
        %v606 = vand.u32 %v542, 15
        %v607 = vand.u32 %v543, 15
        %v608 = vand.u32 %v544, 15
        %v609 = vand.u32 %v545, 15
        %v610 = vand.u32 %v546, 15
        %v611 = vand.u32 %v547, 15
        %v612 = vand.u32 %v548, 15
        %v613 = vand.u32 %v549, 15
        %v614 = vand.u32 %v550, 15
        %v615 = vand.u32 %v551, 15
        %v616 = vand.u32 %v552, 15
        %v617 = vand.u32 %v553, 15
        %v618 = vand.u32 %v554, 15
        %v619 = vand.u32 %v555, 15
        %v620 = vand.u32 %v556, 15
        %v621 = vand.u32 %v557, 15
        %vm622 = vcmp.ge.s32.totalorder %v558, 1
        %vm623 = vcmp.ge.s32.totalorder %v559, 1
        %vm624 = vcmp.ge.s32.totalorder %v560, 1
        %vm625 = vcmp.ge.s32.totalorder %v561, 1
        %vm626 = vcmp.ge.s32.totalorder %v562, 1
        %vm627 = vcmp.ge.s32.totalorder %v563, 1
        %vm628 = vcmp.ge.s32.totalorder %v564, 1
        %vm629 = vcmp.ge.s32.totalorder %v565, 1
        %vm630 = vcmp.ge.s32.totalorder %v566, 1
        %vm631 = vcmp.ge.s32.totalorder %v567, 1
        %vm632 = vcmp.ge.s32.totalorder %v568, 1
        %vm633 = vcmp.ge.s32.totalorder %v569, 1
        %vm634 = vcmp.ge.s32.totalorder %v570, 1
        %vm635 = vcmp.ge.s32.totalorder %v571, 1
        %vm636 = vcmp.ge.s32.totalorder %v572, 1
        %vm637 = vcmp.ge.s32.totalorder %v573, 1
        %vm638 = vcmp.ge.s32.totalorder %v574, 1
        %vm639 = vcmp.ge.s32.totalorder %v575, 1
        %vm640 = vcmp.ge.s32.totalorder %v576, 1
        %vm641 = vcmp.ge.s32.totalorder %v577, 1
        %vm642 = vcmp.ge.s32.totalorder %v578, 1
        %vm643 = vcmp.ge.s32.totalorder %v579, 1
        %vm644 = vcmp.ge.s32.totalorder %v580, 1
        %vm645 = vcmp.ge.s32.totalorder %v581, 1
        %vm646 = vcmp.ge.s32.totalorder %v582, 1
        %vm647 = vcmp.ge.s32.totalorder %v583, 1
        %vm648 = vcmp.ge.s32.totalorder %v584, 1
        %vm649 = vcmp.ge.s32.totalorder %v585, 1
        %vm650 = vcmp.ge.s32.totalorder %v586, 1
        %vm651 = vcmp.ge.s32.totalorder %v587, 1
        %vm652 = vcmp.ge.s32.totalorder %v588, 1
        %vm653 = vcmp.ge.s32.totalorder %v589, 1
        %vm654 = vcmp.lt.s32.totalorder %v558, 15
        %vm655 = vcmp.lt.s32.totalorder %v559, 15
        %vm656 = vcmp.lt.s32.totalorder %v560, 15
        %vm657 = vcmp.lt.s32.totalorder %v561, 15
        %vm658 = vcmp.lt.s32.totalorder %v562, 15
        %vm659 = vcmp.lt.s32.totalorder %v563, 15
        %vm660 = vcmp.lt.s32.totalorder %v564, 15
        %vm661 = vcmp.lt.s32.totalorder %v565, 15
        %vm662 = vcmp.lt.s32.totalorder %v566, 15
        %vm663 = vcmp.lt.s32.totalorder %v567, 15
        %vm664 = vcmp.lt.s32.totalorder %v568, 15
        %vm665 = vcmp.lt.s32.totalorder %v569, 15
        %vm666 = vcmp.lt.s32.totalorder %v570, 15
        %vm667 = vcmp.lt.s32.totalorder %v571, 15
        %vm668 = vcmp.lt.s32.totalorder %v572, 15
        %vm669 = vcmp.lt.s32.totalorder %v573, 15
        %vm670 = vcmp.lt.s32.totalorder %v574, 15
        %vm671 = vcmp.lt.s32.totalorder %v575, 15
        %vm672 = vcmp.lt.s32.totalorder %v576, 15
        %vm673 = vcmp.lt.s32.totalorder %v577, 15
        %vm674 = vcmp.lt.s32.totalorder %v578, 15
        %vm675 = vcmp.lt.s32.totalorder %v579, 15
        %vm676 = vcmp.lt.s32.totalorder %v580, 15
        %vm677 = vcmp.lt.s32.totalorder %v581, 15
        %vm678 = vcmp.lt.s32.totalorder %v582, 15
        %vm679 = vcmp.lt.s32.totalorder %v583, 15
        %vm680 = vcmp.lt.s32.totalorder %v584, 15
        %vm681 = vcmp.lt.s32.totalorder %v585, 15
        %vm682 = vcmp.lt.s32.totalorder %v586, 15
        %vm683 = vcmp.lt.s32.totalorder %v587, 15
        %vm684 = vcmp.lt.s32.totalorder %v588, 15
        %vm685 = vcmp.lt.s32.totalorder %v589, 15
        %vm686 = vcmp.ge.s32.totalorder %v590, 1
        %vm687 = vcmp.ge.s32.totalorder %v591, 1
        %vm688 = vcmp.ge.s32.totalorder %v592, 1
        %vm689 = vcmp.ge.s32.totalorder %v593, 1
        %vm690 = vcmp.ge.s32.totalorder %v594, 1
        %vm691 = vcmp.ge.s32.totalorder %v595, 1
        %vm692 = vcmp.ge.s32.totalorder %v596, 1
        %vm693 = vcmp.ge.s32.totalorder %v597, 1
        %vm694 = vcmp.ge.s32.totalorder %v598, 1
        %vm695 = vcmp.ge.s32.totalorder %v599, 1
        %vm696 = vcmp.ge.s32.totalorder %v600, 1
        %vm697 = vcmp.ge.s32.totalorder %v601, 1
        %vm698 = vcmp.ge.s32.totalorder %v602, 1
        %vm699 = vcmp.ge.s32.totalorder %v603, 1
        %vm700 = vcmp.ge.s32.totalorder %v604, 1
        %vm701 = vcmp.ge.s32.totalorder %v605, 1
        %vm702 = vcmp.ge.s32.totalorder %v606, 1
        %vm703 = vcmp.ge.s32.totalorder %v607, 1
        %vm704 = vcmp.ge.s32.totalorder %v608, 1
        %vm705 = vcmp.ge.s32.totalorder %v609, 1
        %vm706 = vcmp.ge.s32.totalorder %v610, 1
        %vm707 = vcmp.ge.s32.totalorder %v611, 1
        %vm708 = vcmp.ge.s32.totalorder %v612, 1
        %vm709 = vcmp.ge.s32.totalorder %v613, 1
        %vm710 = vcmp.ge.s32.totalorder %v614, 1
        %vm711 = vcmp.ge.s32.totalorder %v615, 1
        %vm712 = vcmp.ge.s32.totalorder %v616, 1
        %vm713 = vcmp.ge.s32.totalorder %v617, 1
        %vm714 = vcmp.ge.s32.totalorder %v618, 1
        %vm715 = vcmp.ge.s32.totalorder %v619, 1
        %vm716 = vcmp.ge.s32.totalorder %v620, 1
        %vm717 = vcmp.ge.s32.totalorder %v621, 1
        %vm718 = vcmp.lt.s32.totalorder %v590, 15
        %vm719 = vcmp.lt.s32.totalorder %v591, 15
        %vm720 = vcmp.lt.s32.totalorder %v592, 15
        %vm721 = vcmp.lt.s32.totalorder %v593, 15
        %vm722 = vcmp.lt.s32.totalorder %v594, 15
        %vm723 = vcmp.lt.s32.totalorder %v595, 15
        %vm724 = vcmp.lt.s32.totalorder %v596, 15
        %vm725 = vcmp.lt.s32.totalorder %v597, 15
        %vm726 = vcmp.lt.s32.totalorder %v598, 15
        %vm727 = vcmp.lt.s32.totalorder %v599, 15
        %vm728 = vcmp.lt.s32.totalorder %v600, 15
        %vm729 = vcmp.lt.s32.totalorder %v601, 15
        %vm730 = vcmp.lt.s32.totalorder %v602, 15
        %vm731 = vcmp.lt.s32.totalorder %v603, 15
        %vm732 = vcmp.lt.s32.totalorder %v604, 15
        %vm733 = vcmp.lt.s32.totalorder %v605, 15
        %vm734 = vcmp.lt.s32.totalorder %v606, 15
        %vm735 = vcmp.lt.s32.totalorder %v607, 15
        %vm736 = vcmp.lt.s32.totalorder %v608, 15
        %vm737 = vcmp.lt.s32.totalorder %v609, 15
        %vm738 = vcmp.lt.s32.totalorder %v610, 15
        %vm739 = vcmp.lt.s32.totalorder %v611, 15
        %vm740 = vcmp.lt.s32.totalorder %v612, 15
        %vm741 = vcmp.lt.s32.totalorder %v613, 15
        %vm742 = vcmp.lt.s32.totalorder %v614, 15
        %vm743 = vcmp.lt.s32.totalorder %v615, 15
        %vm744 = vcmp.lt.s32.totalorder %v616, 15
        %vm745 = vcmp.lt.s32.totalorder %v617, 15
        %vm746 = vcmp.lt.s32.totalorder %v618, 15
        %vm747 = vcmp.lt.s32.totalorder %v619, 15
        %vm748 = vcmp.lt.s32.totalorder %v620, 15
        %vm749 = vcmp.lt.s32.totalorder %v621, 15
        %v750 = vrot.slane %v493, 7
        %v751 = vrot.slane %v494, 7
        %v752 = vrot.slane %v495, 7
        %v753 = vrot.slane %v496, 7
        %v754 = vrot.slane %v497, 7
        %v755 = vrot.slane %v498, 7
        %v756 = vrot.slane %v499, 7
        %v757 = vrot.slane %v500, 7
        %v758 = vrot.slane %v501, 7
        %v759 = vrot.slane %v502, 7
        %v760 = vrot.slane %v503, 7
        %v761 = vrot.slane %v504, 7
        %v762 = vrot.slane %v505, 7
        %v763 = vrot.slane %v506, 7
        %v764 = vrot.slane %v507, 7
        %v765 = vrot.slane %v508, 7
        %v766 = vrot.slane %v509, 7
        %v767 = vrot.slane %v510, 7
        %v768 = vrot.slane %v511, 7
        %v769 = vrot.slane %v512, 7
        %v770 = vrot.slane %v513, 7
        %v771 = vrot.slane %v514, 7
        %v772 = vrot.slane %v515, 7
        %v773 = vrot.slane %v516, 7
        %v774 = vrot.slane %v517, 7
        %v775 = vrot.slane %v518, 7
        %v776 = vrot.slane %v519, 7
        %v777 = vrot.slane %v520, 7
        %v778 = vrot.slane %v521, 7
        %v779 = vrot.slane %v522, 7
        %v780 = vrot.slane %v523, 7
        %v781 = vrot.slane %v524, 7
        %vm782 = vcmp.lt.s32.totalorder %v526, 1
        %v783 = vsel %vm782, %v780, %v781
        %v784 = vsel %vm782, %v779, %v780
        %v785 = vsel %vm782, %v778, %v779
        %v786 = vsel %vm782, %v777, %v778
        %v787 = vsel %vm782, %v776, %v777
        %v788 = vsel %vm782, %v775, %v776
        %v789 = vsel %vm782, %v774, %v775
        %v790 = vsel %vm782, %v773, %v774
        %v791 = vsel %vm782, %v772, %v773
        %v792 = vsel %vm782, %v771, %v772
        %v793 = vsel %vm782, %v770, %v771
        %v794 = vsel %vm782, %v769, %v770
        %v795 = vsel %vm782, %v768, %v769
        %v796 = vsel %vm782, %v767, %v768
        %v797 = vsel %vm782, %v766, %v767
        %v798 = vsel %vm782, %v765, %v766
        %v799 = vsel %vm782, %v764, %v765
        %v800 = vsel %vm782, %v763, %v764
        %v801 = vsel %vm782, %v762, %v763
        %v802 = vsel %vm782, %v761, %v762
        %v803 = vsel %vm782, %v760, %v761
        %v804 = vsel %vm782, %v759, %v760
        %v805 = vsel %vm782, %v758, %v759
        %v806 = vsel %vm782, %v757, %v758
        %v807 = vsel %vm782, %v756, %v757
        %v808 = vsel %vm782, %v755, %v756
        %v809 = vsel %vm782, %v754, %v755
        %v810 = vsel %vm782, %v753, %v754
        %v811 = vsel %vm782, %v752, %v753
        %v812 = vsel %vm782, %v751, %v752
        %v813 = vsel %vm782, %v750, %v751
        %v814 = vsel %vm782, %v781, %v750
        %vm815 = vmand %vm622, %vm686
        %vm816 = vmand %vm623, %vm687
        %vm817 = vmand %vm624, %vm688
        %vm818 = vmand %vm625, %vm689
        %vm819 = vmand %vm626, %vm690
        %vm820 = vmand %vm627, %vm691
        %vm821 = vmand %vm628, %vm692
        %vm822 = vmand %vm629, %vm693
        %vm823 = vmand %vm630, %vm694
        %vm824 = vmand %vm631, %vm695
        %vm825 = vmand %vm632, %vm696
        %vm826 = vmand %vm633, %vm697
        %vm827 = vmand %vm634, %vm698
        %vm828 = vmand %vm635, %vm699
        %vm829 = vmand %vm636, %vm700
        %vm830 = vmand %vm637, %vm701
        %vm831 = vmand %vm638, %vm702
        %vm832 = vmand %vm639, %vm703
        %vm833 = vmand %vm640, %vm704
        %vm834 = vmand %vm641, %vm705
        %vm835 = vmand %vm642, %vm706
        %vm836 = vmand %vm643, %vm707
        %vm837 = vmand %vm644, %vm708
        %vm838 = vmand %vm645, %vm709
        %vm839 = vmand %vm646, %vm710
        %vm840 = vmand %vm647, %vm711
        %vm841 = vmand %vm648, %vm712
        %vm842 = vmand %vm649, %vm713
        %vm843 = vmand %vm650, %vm714
        %vm844 = vmand %vm651, %vm715
        %vm845 = vmand %vm652, %vm716
        %vm846 = vmand %vm653, %vm717
        %v847 = vsel %vm815, 1, 0
        %v848 = vsel %vm816, 1, 0
        %v849 = vsel %vm817, 1, 0
        %v850 = vsel %vm818, 1, 0
        %v851 = vsel %vm819, 1, 0
        %v852 = vsel %vm820, 1, 0
        %v853 = vsel %vm821, 1, 0
        %v854 = vsel %vm822, 1, 0
        %v855 = vsel %vm823, 1, 0
        %v856 = vsel %vm824, 1, 0
        %v857 = vsel %vm825, 1, 0
        %v858 = vsel %vm826, 1, 0
        %v859 = vsel %vm827, 1, 0
        %v860 = vsel %vm828, 1, 0
        %v861 = vsel %vm829, 1, 0
        %v862 = vsel %vm830, 1, 0
        %v863 = vsel %vm831, 1, 0
        %v864 = vsel %vm832, 1, 0
        %v865 = vsel %vm833, 1, 0
        %v866 = vsel %vm834, 1, 0
        %v867 = vsel %vm835, 1, 0
        %v868 = vsel %vm836, 1, 0
        %v869 = vsel %vm837, 1, 0
        %v870 = vsel %vm838, 1, 0
        %v871 = vsel %vm839, 1, 0
        %v872 = vsel %vm840, 1, 0
        %v873 = vsel %vm841, 1, 0
        %v874 = vsel %vm842, 1, 0
        %v875 = vsel %vm843, 1, 0
        %v876 = vsel %vm844, 1, 0
        %v877 = vsel %vm845, 1, 0
        %v878 = vsel %vm846, 1, 0
        %vm879 = vcmp.eq.s32.totalorder %v847, 1
        %vm880 = vcmp.eq.s32.totalorder %v848, 1
        %vm881 = vcmp.eq.s32.totalorder %v849, 1
        %vm882 = vcmp.eq.s32.totalorder %v850, 1
        %vm883 = vcmp.eq.s32.totalorder %v851, 1
        %vm884 = vcmp.eq.s32.totalorder %v852, 1
        %vm885 = vcmp.eq.s32.totalorder %v853, 1
        %vm886 = vcmp.eq.s32.totalorder %v854, 1
        %vm887 = vcmp.eq.s32.totalorder %v855, 1
        %vm888 = vcmp.eq.s32.totalorder %v856, 1
        %vm889 = vcmp.eq.s32.totalorder %v857, 1
        %vm890 = vcmp.eq.s32.totalorder %v858, 1
        %vm891 = vcmp.eq.s32.totalorder %v859, 1
        %vm892 = vcmp.eq.s32.totalorder %v860, 1
        %vm893 = vcmp.eq.s32.totalorder %v861, 1
        %vm894 = vcmp.eq.s32.totalorder %v862, 1
        %vm895 = vcmp.eq.s32.totalorder %v863, 1
        %vm896 = vcmp.eq.s32.totalorder %v864, 1
        %vm897 = vcmp.eq.s32.totalorder %v865, 1
        %vm898 = vcmp.eq.s32.totalorder %v866, 1
        %vm899 = vcmp.eq.s32.totalorder %v867, 1
        %vm900 = vcmp.eq.s32.totalorder %v868, 1
        %vm901 = vcmp.eq.s32.totalorder %v869, 1
        %vm902 = vcmp.eq.s32.totalorder %v870, 1
        %vm903 = vcmp.eq.s32.totalorder %v871, 1
        %vm904 = vcmp.eq.s32.totalorder %v872, 1
        %vm905 = vcmp.eq.s32.totalorder %v873, 1
        %vm906 = vcmp.eq.s32.totalorder %v874, 1
        %vm907 = vcmp.eq.s32.totalorder %v875, 1
        %vm908 = vcmp.eq.s32.totalorder %v876, 1
        %vm909 = vcmp.eq.s32.totalorder %v877, 1
        %vm910 = vcmp.eq.s32.totalorder %v878, 1
        %v911 = vsel %vm879, %v784, 0.0
        %v912 = vsel %vm880, %v783, 0.0
        %v913 = vsel %vm881, %v814, 0.0
        %v914 = vsel %vm882, %v813, 0.0
        %v915 = vsel %vm883, %v812, 0.0
        %v916 = vsel %vm884, %v811, 0.0
        %v917 = vsel %vm885, %v810, 0.0
        %v918 = vsel %vm886, %v809, 0.0
        %v919 = vsel %vm887, %v808, 0.0
        %v920 = vsel %vm888, %v807, 0.0
        %v921 = vsel %vm889, %v806, 0.0
        %v922 = vsel %vm890, %v805, 0.0
        %v923 = vsel %vm891, %v804, 0.0
        %v924 = vsel %vm892, %v803, 0.0
        %v925 = vsel %vm893, %v802, 0.0
        %v926 = vsel %vm894, %v801, 0.0
        %v927 = vsel %vm895, %v800, 0.0
        %v928 = vsel %vm896, %v799, 0.0
        %v929 = vsel %vm897, %v798, 0.0
        %v930 = vsel %vm898, %v797, 0.0
        %v931 = vsel %vm899, %v796, 0.0
        %v932 = vsel %vm900, %v795, 0.0
        %v933 = vsel %vm901, %v794, 0.0
        %v934 = vsel %vm902, %v793, 0.0
        %v935 = vsel %vm903, %v792, 0.0
        %v936 = vsel %vm904, %v791, 0.0
        %v937 = vsel %vm905, %v790, 0.0
        %v938 = vsel %vm906, %v789, 0.0
        %v939 = vsel %vm907, %v788, 0.0
        %v940 = vsel %vm908, %v787, 0.0
        %v941 = vsel %vm909, %v786, 0.0
        %v942 = vsel %vm910, %v785, 0.0
        %vm943 = vcmask 31744
        %944 = vst.msk [vmem:[#allocation2] sm:$0xff] %vm943, %v911
        %945 = vst.msk [vmem:[#allocation2 + $0x8] sm:$0xff] %vm943, %v912
        %946 = vst.msk [vmem:[#allocation2 + $0x10] sm:$0xff] %vm943, %v913
        %947 = vst.msk [vmem:[#allocation2 + $0x18] sm:$0xff] %vm943, %v914
        %948 = vst.msk [vmem:[#allocation2 + $0x20] sm:$0xff] %vm943, %v915
        %949 = vst.msk [vmem:[#allocation2 + $0x28] sm:$0xff] %vm943, %v916
        %950 = vst.msk [vmem:[#allocation2 + $0x30] sm:$0xff] %vm943, %v917
        %951 = vst.msk [vmem:[#allocation2 + $0x38] sm:$0xff] %vm943, %v918
        %952 = vst.msk [vmem:[#allocation2 + $0x40] sm:$0xff] %vm943, %v919
        %953 = vst.msk [vmem:[#allocation2 + $0x48] sm:$0xff] %vm943, %v920
        %954 = vst.msk [vmem:[#allocation2 + $0x50] sm:$0xff] %vm943, %v921
        %955 = vst.msk [vmem:[#allocation2 + $0x58] sm:$0xff] %vm943, %v922
        %956 = vst.msk [vmem:[#allocation2 + $0x60] sm:$0xff] %vm943, %v923
        %957 = vst.msk [vmem:[#allocation2 + $0x68] sm:$0xff] %vm943, %v924
        %958 = vst.msk [vmem:[#allocation2 + $0x70] sm:$0xff] %vm943, %v925
        %959 = vst.msk [vmem:[#allocation2 + $0x78] sm:$0xff] %vm943, %v926
        %960 = vst.msk [vmem:[#allocation2 + $0x80] sm:$0xff] %vm943, %v927
        %961 = vst.msk [vmem:[#allocation2 + $0x88] sm:$0xff] %vm943, %v928
        %962 = vst.msk [vmem:[#allocation2 + $0x90] sm:$0xff] %vm943, %v929
        %963 = vst.msk [vmem:[#allocation2 + $0x98] sm:$0xff] %vm943, %v930
        %964 = vst.msk [vmem:[#allocation2 + $0xa0] sm:$0xff] %vm943, %v931
        %965 = vst.msk [vmem:[#allocation2 + $0xa8] sm:$0xff] %vm943, %v932
        %966 = vst.msk [vmem:[#allocation2 + $0xb0] sm:$0xff] %vm943, %v933
        %967 = vst.msk [vmem:[#allocation2 + $0xb8] sm:$0xff] %vm943, %v934
        %968 = vst.msk [vmem:[#allocation2 + $0xc0] sm:$0xff] %vm943, %v935
        %969 = vst.msk [vmem:[#allocation2 + $0xc8] sm:$0xff] %vm943, %v936
        %970 = vst.msk [vmem:[#allocation2 + $0xd0] sm:$0xff] %vm943, %v937
        %971 = vst.msk [vmem:[#allocation2 + $0xd8] sm:$0xff] %vm943, %v938
        %972 = vst.msk [vmem:[#allocation2 + $0xe0] sm:$0xff] %vm943, %v939
        %973 = vst.msk [vmem:[#allocation2 + $0xe8] sm:$0xff] %vm943, %v940
        %974 = vst.msk [vmem:[#allocation2 + $0xf0] sm:$0xff] %vm943, %v941
        %975 = vst.msk [vmem:[#allocation2 + $0xf8] sm:$0xff] %vm943, %v942
        %v976 = vsel %vm622, 1, 0
        %v977 = vsel %vm623, 1, 0
        %v978 = vsel %vm624, 1, 0
        %v979 = vsel %vm625, 1, 0
        %v980 = vsel %vm626, 1, 0
        %v981 = vsel %vm627, 1, 0
        %v982 = vsel %vm628, 1, 0
        %v983 = vsel %vm629, 1, 0
        %v984 = vsel %vm630, 1, 0
        %v985 = vsel %vm631, 1, 0
        %v986 = vsel %vm632, 1, 0
        %v987 = vsel %vm633, 1, 0
        %v988 = vsel %vm634, 1, 0
        %v989 = vsel %vm635, 1, 0
        %v990 = vsel %vm636, 1, 0
        %v991 = vsel %vm637, 1, 0
        %v992 = vsel %vm638, 1, 0
        %v993 = vsel %vm639, 1, 0
        %v994 = vsel %vm640, 1, 0
        %v995 = vsel %vm641, 1, 0
        %v996 = vsel %vm642, 1, 0
        %v997 = vsel %vm643, 1, 0
        %v998 = vsel %vm644, 1, 0
        %v999 = vsel %vm645, 1, 0
        %v1000 = vsel %vm646, 1, 0
        %v1001 = vsel %vm647, 1, 0
        %v1002 = vsel %vm648, 1, 0
        %v1003 = vsel %vm649, 1, 0
        %v1004 = vsel %vm650, 1, 0
        %v1005 = vsel %vm651, 1, 0
        %v1006 = vsel %vm652, 1, 0
        %v1007 = vsel %vm653, 1, 0
        %vm1008 = vcmp.eq.s32.totalorder %v976, 1
        %vm1009 = vcmp.eq.s32.totalorder %v977, 1
        %vm1010 = vcmp.eq.s32.totalorder %v978, 1
        %vm1011 = vcmp.eq.s32.totalorder %v979, 1
        %vm1012 = vcmp.eq.s32.totalorder %v980, 1
        %vm1013 = vcmp.eq.s32.totalorder %v981, 1
        %vm1014 = vcmp.eq.s32.totalorder %v982, 1
        %vm1015 = vcmp.eq.s32.totalorder %v983, 1
        %vm1016 = vcmp.eq.s32.totalorder %v984, 1
        %vm1017 = vcmp.eq.s32.totalorder %v985, 1
        %vm1018 = vcmp.eq.s32.totalorder %v986, 1
        %vm1019 = vcmp.eq.s32.totalorder %v987, 1
        %vm1020 = vcmp.eq.s32.totalorder %v988, 1
        %vm1021 = vcmp.eq.s32.totalorder %v989, 1
        %vm1022 = vcmp.eq.s32.totalorder %v990, 1
        %vm1023 = vcmp.eq.s32.totalorder %v991, 1
        %vm1024 = vcmp.eq.s32.totalorder %v992, 1
        %vm1025 = vcmp.eq.s32.totalorder %v993, 1
        %vm1026 = vcmp.eq.s32.totalorder %v994, 1
        %vm1027 = vcmp.eq.s32.totalorder %v995, 1
        %vm1028 = vcmp.eq.s32.totalorder %v996, 1
        %vm1029 = vcmp.eq.s32.totalorder %v997, 1
        %vm1030 = vcmp.eq.s32.totalorder %v998, 1
        %vm1031 = vcmp.eq.s32.totalorder %v999, 1
        %vm1032 = vcmp.eq.s32.totalorder %v1000, 1
        %vm1033 = vcmp.eq.s32.totalorder %v1001, 1
        %vm1034 = vcmp.eq.s32.totalorder %v1002, 1
        %vm1035 = vcmp.eq.s32.totalorder %v1003, 1
        %vm1036 = vcmp.eq.s32.totalorder %v1004, 1
        %vm1037 = vcmp.eq.s32.totalorder %v1005, 1
        %vm1038 = vcmp.eq.s32.totalorder %v1006, 1
        %vm1039 = vcmp.eq.s32.totalorder %v1007, 1
        %v1040 = vsel %vm1008, %v523, 0.0
        %v1041 = vsel %vm1009, %v524, 0.0
        %v1042 = vsel %vm1010, %v493, 0.0
        %v1043 = vsel %vm1011, %v494, 0.0
        %v1044 = vsel %vm1012, %v495, 0.0
        %v1045 = vsel %vm1013, %v496, 0.0
        %v1046 = vsel %vm1014, %v497, 0.0
        %v1047 = vsel %vm1015, %v498, 0.0
        %v1048 = vsel %vm1016, %v499, 0.0
        %v1049 = vsel %vm1017, %v500, 0.0
        %v1050 = vsel %vm1018, %v501, 0.0
        %v1051 = vsel %vm1019, %v502, 0.0
        %v1052 = vsel %vm1020, %v503, 0.0
        %v1053 = vsel %vm1021, %v504, 0.0
        %v1054 = vsel %vm1022, %v505, 0.0
        %v1055 = vsel %vm1023, %v506, 0.0
        %v1056 = vsel %vm1024, %v507, 0.0
        %v1057 = vsel %vm1025, %v508, 0.0
        %v1058 = vsel %vm1026, %v509, 0.0
        %v1059 = vsel %vm1027, %v510, 0.0
        %v1060 = vsel %vm1028, %v511, 0.0
        %v1061 = vsel %vm1029, %v512, 0.0
        %v1062 = vsel %vm1030, %v513, 0.0
        %v1063 = vsel %vm1031, %v514, 0.0
        %v1064 = vsel %vm1032, %v515, 0.0
        %v1065 = vsel %vm1033, %v516, 0.0
        %v1066 = vsel %vm1034, %v517, 0.0
        %v1067 = vsel %vm1035, %v518, 0.0
        %v1068 = vsel %vm1036, %v519, 0.0
        %v1069 = vsel %vm1037, %v520, 0.0
        %v1070 = vsel %vm1038, %v521, 0.0
        %v1071 = vsel %vm1039, %v522, 0.0
        %1104 = vrot.lane.b32.xlu0 %v1040, 4
        %v1105 = vpop.permute.xlu0 %1104
        %1106 = vrot.lane.b32.xlu0 %v1041, 4
        %v1107 = vpop.permute.xlu0 %1106
        %1108 = vrot.lane.b32.xlu0 %v1042, 4
        %v1109 = vpop.permute.xlu0 %1108
        %1110 = vrot.lane.b32.xlu0 %v1043, 4
        %v1111 = vpop.permute.xlu0 %1110
        %1112 = vrot.lane.b32.xlu0 %v1044, 4
        %v1113 = vpop.permute.xlu0 %1112
        %1114 = vrot.lane.b32.xlu0 %v1045, 4
        %v1115 = vpop.permute.xlu0 %1114
        %1116 = vrot.lane.b32.xlu0 %v1046, 4
        %v1117 = vpop.permute.xlu0 %1116
        %1118 = vrot.lane.b32.xlu0 %v1047, 4
        %v1119 = vpop.permute.xlu0 %1118
        %1120 = vrot.lane.b32.xlu0 %v1048, 4
        %v1121 = vpop.permute.xlu0 %1120
        %1122 = vrot.lane.b32.xlu0 %v1049, 4
        %v1123 = vpop.permute.xlu0 %1122
        %1124 = vrot.lane.b32.xlu0 %v1050, 4
        %v1125 = vpop.permute.xlu0 %1124
        %1126 = vrot.lane.b32.xlu0 %v1051, 4
        %v1127 = vpop.permute.xlu0 %1126
        %1128 = vrot.lane.b32.xlu0 %v1052, 4
        %v1129 = vpop.permute.xlu0 %1128
        %1130 = vrot.lane.b32.xlu0 %v1053, 4
        %v1131 = vpop.permute.xlu0 %1130
        %1132 = vrot.lane.b32.xlu0 %v1054, 4
        %v1133 = vpop.permute.xlu0 %1132
        %1134 = vrot.lane.b32.xlu0 %v1055, 4
        %v1135 = vpop.permute.xlu0 %1134
        %1136 = vrot.lane.b32.xlu0 %v1056, 4
        %v1137 = vpop.permute.xlu0 %1136
        %1138 = vrot.lane.b32.xlu0 %v1057, 4
        %v1139 = vpop.permute.xlu0 %1138
        %1140 = vrot.lane.b32.xlu0 %v1058, 4
        %v1141 = vpop.permute.xlu0 %1140
        %1142 = vrot.lane.b32.xlu0 %v1059, 4
        %v1143 = vpop.permute.xlu0 %1142
        %1144 = vrot.lane.b32.xlu0 %v1060, 4
        %v1145 = vpop.permute.xlu0 %1144
        %1146 = vrot.lane.b32.xlu0 %v1061, 4
        %v1147 = vpop.permute.xlu0 %1146
        %1148 = vrot.lane.b32.xlu0 %v1062, 4
        %v1149 = vpop.permute.xlu0 %1148
        %1150 = vrot.lane.b32.xlu0 %v1063, 4
        %v1151 = vpop.permute.xlu0 %1150
        %1152 = vrot.lane.b32.xlu0 %v1064, 4
        %v1153 = vpop.permute.xlu0 %1152
        %1154 = vrot.lane.b32.xlu0 %v1065, 4
        %v1155 = vpop.permute.xlu0 %1154
        %1156 = vrot.lane.b32.xlu0 %v1066, 4
        %v1157 = vpop.permute.xlu0 %1156
        %1158 = vrot.lane.b32.xlu0 %v1067, 4
        %v1159 = vpop.permute.xlu0 %1158
        %1160 = vrot.lane.b32.xlu0 %v1068, 4
        %v1161 = vpop.permute.xlu0 %1160
        %1162 = vrot.lane.b32.xlu0 %v1069, 4
        %v1163 = vpop.permute.xlu0 %1162
        %1164 = vrot.lane.b32.xlu0 %v1070, 4
        %v1165 = vpop.permute.xlu0 %1164
        %1166 = vrot.lane.b32.xlu0 %v1071, 4
        %v1167 = vpop.permute.xlu0 %1166
        %vm1200 = vcmask 64544
        %1201 = vst.msk [vmem:[#allocation2] sm:$0xff] %vm1200, %v1105
        %1202 = vst.msk [vmem:[#allocation2 + $0x8] sm:$0xff] %vm1200, %v1107
        %1203 = vst.msk [vmem:[#allocation2 + $0x10] sm:$0xff] %vm1200, %v1109
        %1204 = vst.msk [vmem:[#allocation2 + $0x18] sm:$0xff] %vm1200, %v1111
        %1205 = vst.msk [vmem:[#allocation2 + $0x20] sm:$0xff] %vm1200, %v1113
        %1206 = vst.msk [vmem:[#allocation2 + $0x28] sm:$0xff] %vm1200, %v1115
        %1207 = vst.msk [vmem:[#allocation2 + $0x30] sm:$0xff] %vm1200, %v1117
        %1208 = vst.msk [vmem:[#allocation2 + $0x38] sm:$0xff] %vm1200, %v1119
        %1209 = vst.msk [vmem:[#allocation2 + $0x40] sm:$0xff] %vm1200, %v1121
        %1210 = vst.msk [vmem:[#allocation2 + $0x48] sm:$0xff] %vm1200, %v1123
        %1211 = vst.msk [vmem:[#allocation2 + $0x50] sm:$0xff] %vm1200, %v1125
        %1212 = vst.msk [vmem:[#allocation2 + $0x58] sm:$0xff] %vm1200, %v1127
        %1213 = vst.msk [vmem:[#allocation2 + $0x60] sm:$0xff] %vm1200, %v1129
        %1214 = vst.msk [vmem:[#allocation2 + $0x68] sm:$0xff] %vm1200, %v1131
        %1215 = vst.msk [vmem:[#allocation2 + $0x70] sm:$0xff] %vm1200, %v1133
        %1216 = vst.msk [vmem:[#allocation2 + $0x78] sm:$0xff] %vm1200, %v1135
        %1217 = vst.msk [vmem:[#allocation2 + $0x80] sm:$0xff] %vm1200, %v1137
        %1218 = vst.msk [vmem:[#allocation2 + $0x88] sm:$0xff] %vm1200, %v1139
        %1219 = vst.msk [vmem:[#allocation2 + $0x90] sm:$0xff] %vm1200, %v1141
        %1220 = vst.msk [vmem:[#allocation2 + $0x98] sm:$0xff] %vm1200, %v1143
        %1221 = vst.msk [vmem:[#allocation2 + $0xa0] sm:$0xff] %vm1200, %v1145
        %1222 = vst.msk [vmem:[#allocation2 + $0xa8] sm:$0xff] %vm1200, %v1147
        %1223 = vst.msk [vmem:[#allocation2 + $0xb0] sm:$0xff] %vm1200, %v1149
        %1224 = vst.msk [vmem:[#allocation2 + $0xb8] sm:$0xff] %vm1200, %v1151
        %1225 = vst.msk [vmem:[#allocation2 + $0xc0] sm:$0xff] %vm1200, %v1153
        %1226 = vst.msk [vmem:[#allocation2 + $0xc8] sm:$0xff] %vm1200, %v1155
        %1227 = vst.msk [vmem:[#allocation2 + $0xd0] sm:$0xff] %vm1200, %v1157
        %1228 = vst.msk [vmem:[#allocation2 + $0xd8] sm:$0xff] %vm1200, %v1159
        %1229 = vst.msk [vmem:[#allocation2 + $0xe0] sm:$0xff] %vm1200, %v1161
        %1230 = vst.msk [vmem:[#allocation2 + $0xe8] sm:$0xff] %vm1200, %v1163
        %1231 = vst.msk [vmem:[#allocation2 + $0xf0] sm:$0xff] %vm1200, %v1165
        %1232 = vst.msk [vmem:[#allocation2 + $0xf8] sm:$0xff] %vm1200, %v1167
        %v1233 = vrot.slane %v493, 1
        %v1234 = vrot.slane %v494, 1
        %v1235 = vrot.slane %v495, 1
        %v1236 = vrot.slane %v496, 1
        %v1237 = vrot.slane %v497, 1
        %v1238 = vrot.slane %v498, 1
        %v1239 = vrot.slane %v499, 1
        %v1240 = vrot.slane %v500, 1
        %v1241 = vrot.slane %v501, 1
        %v1242 = vrot.slane %v502, 1
        %v1243 = vrot.slane %v503, 1
        %v1244 = vrot.slane %v504, 1
        %v1245 = vrot.slane %v505, 1
        %v1246 = vrot.slane %v506, 1
        %v1247 = vrot.slane %v507, 1
        %v1248 = vrot.slane %v508, 1
        %v1249 = vrot.slane %v509, 1
        %v1250 = vrot.slane %v510, 1
        %v1251 = vrot.slane %v511, 1
        %v1252 = vrot.slane %v512, 1
        %v1253 = vrot.slane %v513, 1
        %v1254 = vrot.slane %v514, 1
        %v1255 = vrot.slane %v515, 1
        %v1256 = vrot.slane %v516, 1
        %v1257 = vrot.slane %v517, 1
        %v1258 = vrot.slane %v518, 1
        %v1259 = vrot.slane %v519, 1
        %v1260 = vrot.slane %v520, 1
        %v1261 = vrot.slane %v521, 1
        %v1262 = vrot.slane %v522, 1
        %v1263 = vrot.slane %v523, 1
        %v1264 = vrot.slane %v524, 1
        %vm1265 = vcmp.lt.s32.totalorder %v526, 7
        %v1266 = vsel %vm1265, %v1263, %v1264
        %v1267 = vsel %vm1265, %v1262, %v1263
        %v1268 = vsel %vm1265, %v1261, %v1262
        %v1269 = vsel %vm1265, %v1260, %v1261
        %v1270 = vsel %vm1265, %v1259, %v1260
        %v1271 = vsel %vm1265, %v1258, %v1259
        %v1272 = vsel %vm1265, %v1257, %v1258
        %v1273 = vsel %vm1265, %v1256, %v1257
        %v1274 = vsel %vm1265, %v1255, %v1256
        %v1275 = vsel %vm1265, %v1254, %v1255
        %v1276 = vsel %vm1265, %v1253, %v1254
        %v1277 = vsel %vm1265, %v1252, %v1253
        %v1278 = vsel %vm1265, %v1251, %v1252
        %v1279 = vsel %vm1265, %v1250, %v1251
        %v1280 = vsel %vm1265, %v1249, %v1250
        %v1281 = vsel %vm1265, %v1248, %v1249
        %v1282 = vsel %vm1265, %v1247, %v1248
        %v1283 = vsel %vm1265, %v1246, %v1247
        %v1284 = vsel %vm1265, %v1245, %v1246
        %v1285 = vsel %vm1265, %v1244, %v1245
        %v1286 = vsel %vm1265, %v1243, %v1244
        %v1287 = vsel %vm1265, %v1242, %v1243
        %v1288 = vsel %vm1265, %v1241, %v1242
        %v1289 = vsel %vm1265, %v1240, %v1241
        %v1290 = vsel %vm1265, %v1239, %v1240
        %v1291 = vsel %vm1265, %v1238, %v1239
        %v1292 = vsel %vm1265, %v1237, %v1238
        %v1293 = vsel %vm1265, %v1236, %v1237
        %v1294 = vsel %vm1265, %v1235, %v1236
        %v1295 = vsel %vm1265, %v1234, %v1235
        %v1296 = vsel %vm1265, %v1233, %v1234
        %v1297 = vsel %vm1265, %v1264, %v1233
        %vm1298 = vmand %vm622, %vm718
        %vm1299 = vmand %vm623, %vm719
        %vm1300 = vmand %vm624, %vm720
        %vm1301 = vmand %vm625, %vm721
        %vm1302 = vmand %vm626, %vm722
        %vm1303 = vmand %vm627, %vm723
        %vm1304 = vmand %vm628, %vm724
        %vm1305 = vmand %vm629, %vm725
        %vm1306 = vmand %vm630, %vm726
        %vm1307 = vmand %vm631, %vm727
        %vm1308 = vmand %vm632, %vm728
        %vm1309 = vmand %vm633, %vm729
        %vm1310 = vmand %vm634, %vm730
        %vm1311 = vmand %vm635, %vm731
        %vm1312 = vmand %vm636, %vm732
        %vm1313 = vmand %vm637, %vm733
        %vm1314 = vmand %vm638, %vm734
        %vm1315 = vmand %vm639, %vm735
        %vm1316 = vmand %vm640, %vm736
        %vm1317 = vmand %vm641, %vm737
        %vm1318 = vmand %vm642, %vm738
        %vm1319 = vmand %vm643, %vm739
        %vm1320 = vmand %vm644, %vm740
        %vm1321 = vmand %vm645, %vm741
        %vm1322 = vmand %vm646, %vm742
        %vm1323 = vmand %vm647, %vm743
        %vm1324 = vmand %vm648, %vm744
        %vm1325 = vmand %vm649, %vm745
        %vm1326 = vmand %vm650, %vm746
        %vm1327 = vmand %vm651, %vm747
        %vm1328 = vmand %vm652, %vm748
        %vm1329 = vmand %vm653, %vm749
        %v1330 = vsel %vm1298, 1, 0
        %v1331 = vsel %vm1299, 1, 0
        %v1332 = vsel %vm1300, 1, 0
        %v1333 = vsel %vm1301, 1, 0
        %v1334 = vsel %vm1302, 1, 0
        %v1335 = vsel %vm1303, 1, 0
        %v1336 = vsel %vm1304, 1, 0
        %v1337 = vsel %vm1305, 1, 0
        %v1338 = vsel %vm1306, 1, 0
        %v1339 = vsel %vm1307, 1, 0
        %v1340 = vsel %vm1308, 1, 0
        %v1341 = vsel %vm1309, 1, 0
        %v1342 = vsel %vm1310, 1, 0
        %v1343 = vsel %vm1311, 1, 0
        %v1344 = vsel %vm1312, 1, 0
        %v1345 = vsel %vm1313, 1, 0
        %v1346 = vsel %vm1314, 1, 0
        %v1347 = vsel %vm1315, 1, 0
        %v1348 = vsel %vm1316, 1, 0
        %v1349 = vsel %vm1317, 1, 0
        %v1350 = vsel %vm1318, 1, 0
        %v1351 = vsel %vm1319, 1, 0
        %v1352 = vsel %vm1320, 1, 0
        %v1353 = vsel %vm1321, 1, 0
        %v1354 = vsel %vm1322, 1, 0
        %v1355 = vsel %vm1323, 1, 0
        %v1356 = vsel %vm1324, 1, 0
        %v1357 = vsel %vm1325, 1, 0
        %v1358 = vsel %vm1326, 1, 0
        %v1359 = vsel %vm1327, 1, 0
        %v1360 = vsel %vm1328, 1, 0
        %v1361 = vsel %vm1329, 1, 0
        %vm1362 = vcmp.eq.s32.totalorder %v1330, 1
        %vm1363 = vcmp.eq.s32.totalorder %v1331, 1
        %vm1364 = vcmp.eq.s32.totalorder %v1332, 1
        %vm1365 = vcmp.eq.s32.totalorder %v1333, 1
        %vm1366 = vcmp.eq.s32.totalorder %v1334, 1
        %vm1367 = vcmp.eq.s32.totalorder %v1335, 1
        %vm1368 = vcmp.eq.s32.totalorder %v1336, 1
        %vm1369 = vcmp.eq.s32.totalorder %v1337, 1
        %vm1370 = vcmp.eq.s32.totalorder %v1338, 1
        %vm1371 = vcmp.eq.s32.totalorder %v1339, 1
        %vm1372 = vcmp.eq.s32.totalorder %v1340, 1
        %vm1373 = vcmp.eq.s32.totalorder %v1341, 1
        %vm1374 = vcmp.eq.s32.totalorder %v1342, 1
        %vm1375 = vcmp.eq.s32.totalorder %v1343, 1
        %vm1376 = vcmp.eq.s32.totalorder %v1344, 1
        %vm1377 = vcmp.eq.s32.totalorder %v1345, 1
        %vm1378 = vcmp.eq.s32.totalorder %v1346, 1
        %vm1379 = vcmp.eq.s32.totalorder %v1347, 1
        %vm1380 = vcmp.eq.s32.totalorder %v1348, 1
        %vm1381 = vcmp.eq.s32.totalorder %v1349, 1
        %vm1382 = vcmp.eq.s32.totalorder %v1350, 1
        %vm1383 = vcmp.eq.s32.totalorder %v1351, 1
        %vm1384 = vcmp.eq.s32.totalorder %v1352, 1
        %vm1385 = vcmp.eq.s32.totalorder %v1353, 1
        %vm1386 = vcmp.eq.s32.totalorder %v1354, 1
        %vm1387 = vcmp.eq.s32.totalorder %v1355, 1
        %vm1388 = vcmp.eq.s32.totalorder %v1356, 1
        %vm1389 = vcmp.eq.s32.totalorder %v1357, 1
        %vm1390 = vcmp.eq.s32.totalorder %v1358, 1
        %vm1391 = vcmp.eq.s32.totalorder %v1359, 1
        %vm1392 = vcmp.eq.s32.totalorder %v1360, 1
        %vm1393 = vcmp.eq.s32.totalorder %v1361, 1
        %v1394 = vsel %vm1362, %v1266, 0.0
        %v1395 = vsel %vm1363, %v1297, 0.0
        %v1396 = vsel %vm1364, %v1296, 0.0
        %v1397 = vsel %vm1365, %v1295, 0.0
        %v1398 = vsel %vm1366, %v1294, 0.0
        %v1399 = vsel %vm1367, %v1293, 0.0
        %v1400 = vsel %vm1368, %v1292, 0.0
        %v1401 = vsel %vm1369, %v1291, 0.0
        %v1402 = vsel %vm1370, %v1290, 0.0
        %v1403 = vsel %vm1371, %v1289, 0.0
        %v1404 = vsel %vm1372, %v1288, 0.0
        %v1405 = vsel %vm1373, %v1287, 0.0
        %v1406 = vsel %vm1374, %v1286, 0.0
        %v1407 = vsel %vm1375, %v1285, 0.0
        %v1408 = vsel %vm1376, %v1284, 0.0
        %v1409 = vsel %vm1377, %v1283, 0.0
        %v1410 = vsel %vm1378, %v1282, 0.0
        %v1411 = vsel %vm1379, %v1281, 0.0
        %v1412 = vsel %vm1380, %v1280, 0.0
        %v1413 = vsel %vm1381, %v1279, 0.0
        %v1414 = vsel %vm1382, %v1278, 0.0
        %v1415 = vsel %vm1383, %v1277, 0.0
        %v1416 = vsel %vm1384, %v1276, 0.0
        %v1417 = vsel %vm1385, %v1275, 0.0
        %v1418 = vsel %vm1386, %v1274, 0.0
        %v1419 = vsel %vm1387, %v1273, 0.0
        %v1420 = vsel %vm1388, %v1272, 0.0
        %v1421 = vsel %vm1389, %v1271, 0.0
        %v1422 = vsel %vm1390, %v1270, 0.0
        %v1423 = vsel %vm1391, %v1269, 0.0
        %v1424 = vsel %vm1392, %v1268, 0.0
        %v1425 = vsel %vm1393, %v1267, 0.0
        %1458 = vrot.lane.b32.xlu0 %v1394, 8
        %v1459 = vpop.permute.xlu0 %1458
        %1460 = vrot.lane.b32.xlu0 %v1395, 8
        %v1461 = vpop.permute.xlu0 %1460
        %1462 = vrot.lane.b32.xlu0 %v1396, 8
        %v1463 = vpop.permute.xlu0 %1462
        %1464 = vrot.lane.b32.xlu0 %v1397, 8
        %v1465 = vpop.permute.xlu0 %1464
        %1466 = vrot.lane.b32.xlu0 %v1398, 8
        %v1467 = vpop.permute.xlu0 %1466
        %1468 = vrot.lane.b32.xlu0 %v1399, 8
        %v1469 = vpop.permute.xlu0 %1468
        %1470 = vrot.lane.b32.xlu0 %v1400, 8
        %v1471 = vpop.permute.xlu0 %1470
        %1472 = vrot.lane.b32.xlu0 %v1401, 8
        %v1473 = vpop.permute.xlu0 %1472
        %1474 = vrot.lane.b32.xlu0 %v1402, 8
        %v1475 = vpop.permute.xlu0 %1474
        %1476 = vrot.lane.b32.xlu0 %v1403, 8
        %v1477 = vpop.permute.xlu0 %1476
        %1478 = vrot.lane.b32.xlu0 %v1404, 8
        %v1479 = vpop.permute.xlu0 %1478
        %1480 = vrot.lane.b32.xlu0 %v1405, 8
        %v1481 = vpop.permute.xlu0 %1480
        %1482 = vrot.lane.b32.xlu0 %v1406, 8
        %v1483 = vpop.permute.xlu0 %1482
        %1484 = vrot.lane.b32.xlu0 %v1407, 8
        %v1485 = vpop.permute.xlu0 %1484
        %1486 = vrot.lane.b32.xlu0 %v1408, 8
        %v1487 = vpop.permute.xlu0 %1486
        %1488 = vrot.lane.b32.xlu0 %v1409, 8
        %v1489 = vpop.permute.xlu0 %1488
        %1490 = vrot.lane.b32.xlu0 %v1410, 8
        %v1491 = vpop.permute.xlu0 %1490
        %1492 = vrot.lane.b32.xlu0 %v1411, 8
        %v1493 = vpop.permute.xlu0 %1492
        %1494 = vrot.lane.b32.xlu0 %v1412, 8
        %v1495 = vpop.permute.xlu0 %1494
        %1496 = vrot.lane.b32.xlu0 %v1413, 8
        %v1497 = vpop.permute.xlu0 %1496
        %1498 = vrot.lane.b32.xlu0 %v1414, 8
        %v1499 = vpop.permute.xlu0 %1498
        %1500 = vrot.lane.b32.xlu0 %v1415, 8
        %v1501 = vpop.permute.xlu0 %1500
        %1502 = vrot.lane.b32.xlu0 %v1416, 8
        %v1503 = vpop.permute.xlu0 %1502
        %1504 = vrot.lane.b32.xlu0 %v1417, 8
        %v1505 = vpop.permute.xlu0 %1504
        %1506 = vrot.lane.b32.xlu0 %v1418, 8
        %v1507 = vpop.permute.xlu0 %1506
        %1508 = vrot.lane.b32.xlu0 %v1419, 8
        %v1509 = vpop.permute.xlu0 %1508
        %1510 = vrot.lane.b32.xlu0 %v1420, 8
        %v1511 = vpop.permute.xlu0 %1510
        %1512 = vrot.lane.b32.xlu0 %v1421, 8
        %v1513 = vpop.permute.xlu0 %1512
        %1514 = vrot.lane.b32.xlu0 %v1422, 8
        %v1515 = vpop.permute.xlu0 %1514
        %1516 = vrot.lane.b32.xlu0 %v1423, 8
        %v1517 = vpop.permute.xlu0 %1516
        %1518 = vrot.lane.b32.xlu0 %v1424, 8
        %v1519 = vpop.permute.xlu0 %1518
        %1520 = vrot.lane.b32.xlu0 %v1425, 8
        %v1521 = vpop.permute.xlu0 %1520
        %vm1554 = vcmask 97344
        %1555 = vst.msk [vmem:[#allocation2] sm:$0xff] %vm1554, %v1459
        %1556 = vst.msk [vmem:[#allocation2 + $0x8] sm:$0xff] %vm1554, %v1461
        %1557 = vst.msk [vmem:[#allocation2 + $0x10] sm:$0xff] %vm1554, %v1463
        %1558 = vst.msk [vmem:[#allocation2 + $0x18] sm:$0xff] %vm1554, %v1465
        %1559 = vst.msk [vmem:[#allocation2 + $0x20] sm:$0xff] %vm1554, %v1467
        %1560 = vst.msk [vmem:[#allocation2 + $0x28] sm:$0xff] %vm1554, %v1469
        %1561 = vst.msk [vmem:[#allocation2 + $0x30] sm:$0xff] %vm1554, %v1471
        %1562 = vst.msk [vmem:[#allocation2 + $0x38] sm:$0xff] %vm1554, %v1473
        %1563 = vst.msk [vmem:[#allocation2 + $0x40] sm:$0xff] %vm1554, %v1475
        %1564 = vst.msk [vmem:[#allocation2 + $0x48] sm:$0xff] %vm1554, %v1477
        %1565 = vst.msk [vmem:[#allocation2 + $0x50] sm:$0xff] %vm1554, %v1479
        %1566 = vst.msk [vmem:[#allocation2 + $0x58] sm:$0xff] %vm1554, %v1481
        %1567 = vst.msk [vmem:[#allocation2 + $0x60] sm:$0xff] %vm1554, %v1483
        %1568 = vst.msk [vmem:[#allocation2 + $0x68] sm:$0xff] %vm1554, %v1485
        %1569 = vst.msk [vmem:[#allocation2 + $0x70] sm:$0xff] %vm1554, %v1487
        %1570 = vst.msk [vmem:[#allocation2 + $0x78] sm:$0xff] %vm1554, %v1489
        %1571 = vst.msk [vmem:[#allocation2 + $0x80] sm:$0xff] %vm1554, %v1491
        %1572 = vst.msk [vmem:[#allocation2 + $0x88] sm:$0xff] %vm1554, %v1493
        %1573 = vst.msk [vmem:[#allocation2 + $0x90] sm:$0xff] %vm1554, %v1495
        %1574 = vst.msk [vmem:[#allocation2 + $0x98] sm:$0xff] %vm1554, %v1497
        %1575 = vst.msk [vmem:[#allocation2 + $0xa0] sm:$0xff] %vm1554, %v1499
        %1576 = vst.msk [vmem:[#allocation2 + $0xa8] sm:$0xff] %vm1554, %v1501
        %1577 = vst.msk [vmem:[#allocation2 + $0xb0] sm:$0xff] %vm1554, %v1503
        %1578 = vst.msk [vmem:[#allocation2 + $0xb8] sm:$0xff] %vm1554, %v1505
        %1579 = vst.msk [vmem:[#allocation2 + $0xc0] sm:$0xff] %vm1554, %v1507
        %1580 = vst.msk [vmem:[#allocation2 + $0xc8] sm:$0xff] %vm1554, %v1509
        %1581 = vst.msk [vmem:[#allocation2 + $0xd0] sm:$0xff] %vm1554, %v1511
        %1582 = vst.msk [vmem:[#allocation2 + $0xd8] sm:$0xff] %vm1554, %v1513
        %1583 = vst.msk [vmem:[#allocation2 + $0xe0] sm:$0xff] %vm1554, %v1515
        %1584 = vst.msk [vmem:[#allocation2 + $0xe8] sm:$0xff] %vm1554, %v1517
        %1585 = vst.msk [vmem:[#allocation2 + $0xf0] sm:$0xff] %vm1554, %v1519
        %1586 = vst.msk [vmem:[#allocation2 + $0xf8] sm:$0xff] %vm1554, %v1521
        %v1587 = vsel %vm686, 1, 0
        %v1588 = vsel %vm687, 1, 0
        %v1589 = vsel %vm688, 1, 0
        %v1590 = vsel %vm689, 1, 0
        %v1591 = vsel %vm690, 1, 0
        %v1592 = vsel %vm691, 1, 0
        %v1593 = vsel %vm692, 1, 0
        %v1594 = vsel %vm693, 1, 0
        %v1595 = vsel %vm694, 1, 0
        %v1596 = vsel %vm695, 1, 0
        %v1597 = vsel %vm696, 1, 0
        %v1598 = vsel %vm697, 1, 0
        %v1599 = vsel %vm698, 1, 0
        %v1600 = vsel %vm699, 1, 0
        %v1601 = vsel %vm700, 1, 0
        %v1602 = vsel %vm701, 1, 0
        %v1603 = vsel %vm702, 1, 0
        %v1604 = vsel %vm703, 1, 0
        %v1605 = vsel %vm704, 1, 0
        %v1606 = vsel %vm705, 1, 0
        %v1607 = vsel %vm706, 1, 0
        %v1608 = vsel %vm707, 1, 0
        %v1609 = vsel %vm708, 1, 0
        %v1610 = vsel %vm709, 1, 0
        %v1611 = vsel %vm710, 1, 0
        %v1612 = vsel %vm711, 1, 0
        %v1613 = vsel %vm712, 1, 0
        %v1614 = vsel %vm713, 1, 0
        %v1615 = vsel %vm714, 1, 0
        %v1616 = vsel %vm715, 1, 0
        %v1617 = vsel %vm716, 1, 0
        %v1618 = vsel %vm717, 1, 0
        %vm1619 = vcmp.eq.s32.totalorder %v1587, 1
        %vm1620 = vcmp.eq.s32.totalorder %v1588, 1
        %vm1621 = vcmp.eq.s32.totalorder %v1589, 1
        %vm1622 = vcmp.eq.s32.totalorder %v1590, 1
        %vm1623 = vcmp.eq.s32.totalorder %v1591, 1
        %vm1624 = vcmp.eq.s32.totalorder %v1592, 1
        %vm1625 = vcmp.eq.s32.totalorder %v1593, 1
        %vm1626 = vcmp.eq.s32.totalorder %v1594, 1
        %vm1627 = vcmp.eq.s32.totalorder %v1595, 1
        %vm1628 = vcmp.eq.s32.totalorder %v1596, 1
        %vm1629 = vcmp.eq.s32.totalorder %v1597, 1
        %vm1630 = vcmp.eq.s32.totalorder %v1598, 1
        %vm1631 = vcmp.eq.s32.totalorder %v1599, 1
        %vm1632 = vcmp.eq.s32.totalorder %v1600, 1
        %vm1633 = vcmp.eq.s32.totalorder %v1601, 1
        %vm1634 = vcmp.eq.s32.totalorder %v1602, 1
        %vm1635 = vcmp.eq.s32.totalorder %v1603, 1
        %vm1636 = vcmp.eq.s32.totalorder %v1604, 1
        %vm1637 = vcmp.eq.s32.totalorder %v1605, 1
        %vm1638 = vcmp.eq.s32.totalorder %v1606, 1
        %vm1639 = vcmp.eq.s32.totalorder %v1607, 1
        %vm1640 = vcmp.eq.s32.totalorder %v1608, 1
        %vm1641 = vcmp.eq.s32.totalorder %v1609, 1
        %vm1642 = vcmp.eq.s32.totalorder %v1610, 1
        %vm1643 = vcmp.eq.s32.totalorder %v1611, 1
        %vm1644 = vcmp.eq.s32.totalorder %v1612, 1
        %vm1645 = vcmp.eq.s32.totalorder %v1613, 1
        %vm1646 = vcmp.eq.s32.totalorder %v1614, 1
        %vm1647 = vcmp.eq.s32.totalorder %v1615, 1
        %vm1648 = vcmp.eq.s32.totalorder %v1616, 1
        %vm1649 = vcmp.eq.s32.totalorder %v1617, 1
        %vm1650 = vcmp.eq.s32.totalorder %v1618, 1
        %v1651 = vsel %vm1619, %v814, 0.0
        %v1652 = vsel %vm1620, %v813, 0.0
        %v1653 = vsel %vm1621, %v812, 0.0
        %v1654 = vsel %vm1622, %v811, 0.0
        %v1655 = vsel %vm1623, %v810, 0.0
        %v1656 = vsel %vm1624, %v809, 0.0
        %v1657 = vsel %vm1625, %v808, 0.0
        %v1658 = vsel %vm1626, %v807, 0.0
        %v1659 = vsel %vm1627, %v806, 0.0
        %v1660 = vsel %vm1628, %v805, 0.0
        %v1661 = vsel %vm1629, %v804, 0.0
        %v1662 = vsel %vm1630, %v803, 0.0
        %v1663 = vsel %vm1631, %v802, 0.0
        %v1664 = vsel %vm1632, %v801, 0.0
        %v1665 = vsel %vm1633, %v800, 0.0
        %v1666 = vsel %vm1634, %v799, 0.0
        %v1667 = vsel %vm1635, %v798, 0.0
        %v1668 = vsel %vm1636, %v797, 0.0
        %v1669 = vsel %vm1637, %v796, 0.0
        %v1670 = vsel %vm1638, %v795, 0.0
        %v1671 = vsel %vm1639, %v794, 0.0
        %v1672 = vsel %vm1640, %v793, 0.0
        %v1673 = vsel %vm1641, %v792, 0.0
        %v1674 = vsel %vm1642, %v791, 0.0
        %v1675 = vsel %vm1643, %v790, 0.0
        %v1676 = vsel %vm1644, %v789, 0.0
        %v1677 = vsel %vm1645, %v788, 0.0
        %v1678 = vsel %vm1646, %v787, 0.0
        %v1679 = vsel %vm1647, %v786, 0.0
        %v1680 = vsel %vm1648, %v785, 0.0
        %v1681 = vsel %vm1649, %v784, 0.0
        %v1682 = vsel %vm1650, %v783, 0.0
        %1715 = vrot.lane.b32.xlu0 %v1651, 12
        %v1716 = vpop.permute.xlu0 %1715
        %1717 = vrot.lane.b32.xlu0 %v1652, 12
        %v1718 = vpop.permute.xlu0 %1717
        %1719 = vrot.lane.b32.xlu0 %v1653, 12
        %v1720 = vpop.permute.xlu0 %1719
        %1721 = vrot.lane.b32.xlu0 %v1654, 12
        %v1722 = vpop.permute.xlu0 %1721
        %1723 = vrot.lane.b32.xlu0 %v1655, 12
        %v1724 = vpop.permute.xlu0 %1723
        %1725 = vrot.lane.b32.xlu0 %v1656, 12
        %v1726 = vpop.permute.xlu0 %1725
        %1727 = vrot.lane.b32.xlu0 %v1657, 12
        %v1728 = vpop.permute.xlu0 %1727
        %1729 = vrot.lane.b32.xlu0 %v1658, 12
        %v1730 = vpop.permute.xlu0 %1729
        %1731 = vrot.lane.b32.xlu0 %v1659, 12
        %v1732 = vpop.permute.xlu0 %1731
        %1733 = vrot.lane.b32.xlu0 %v1660, 12
        %v1734 = vpop.permute.xlu0 %1733
        %1735 = vrot.lane.b32.xlu0 %v1661, 12
        %v1736 = vpop.permute.xlu0 %1735
        %1737 = vrot.lane.b32.xlu0 %v1662, 12
        %v1738 = vpop.permute.xlu0 %1737
        %1739 = vrot.lane.b32.xlu0 %v1663, 12
        %v1740 = vpop.permute.xlu0 %1739
        %1741 = vrot.lane.b32.xlu0 %v1664, 12
        %v1742 = vpop.permute.xlu0 %1741
        %1743 = vrot.lane.b32.xlu0 %v1665, 12
        %v1744 = vpop.permute.xlu0 %1743
        %1745 = vrot.lane.b32.xlu0 %v1666, 12
        %v1746 = vpop.permute.xlu0 %1745
        %1747 = vrot.lane.b32.xlu0 %v1667, 12
        %v1748 = vpop.permute.xlu0 %1747
        %1749 = vrot.lane.b32.xlu0 %v1668, 12
        %v1750 = vpop.permute.xlu0 %1749
        %1751 = vrot.lane.b32.xlu0 %v1669, 12
        %v1752 = vpop.permute.xlu0 %1751
        %1753 = vrot.lane.b32.xlu0 %v1670, 12
        %v1754 = vpop.permute.xlu0 %1753
        %1755 = vrot.lane.b32.xlu0 %v1671, 12
        %v1756 = vpop.permute.xlu0 %1755
        %1757 = vrot.lane.b32.xlu0 %v1672, 12
        %v1758 = vpop.permute.xlu0 %1757
        %1759 = vrot.lane.b32.xlu0 %v1673, 12
        %v1760 = vpop.permute.xlu0 %1759
        %1761 = vrot.lane.b32.xlu0 %v1674, 12
        %v1762 = vpop.permute.xlu0 %1761
        %1763 = vrot.lane.b32.xlu0 %v1675, 12
        %v1764 = vpop.permute.xlu0 %1763
        %1765 = vrot.lane.b32.xlu0 %v1676, 12
        %v1766 = vpop.permute.xlu0 %1765
        %1767 = vrot.lane.b32.xlu0 %v1677, 12
        %v1768 = vpop.permute.xlu0 %1767
        %1769 = vrot.lane.b32.xlu0 %v1678, 12
        %v1770 = vpop.permute.xlu0 %1769
        %1771 = vrot.lane.b32.xlu0 %v1679, 12
        %v1772 = vpop.permute.xlu0 %1771
        %1773 = vrot.lane.b32.xlu0 %v1680, 12
        %v1774 = vpop.permute.xlu0 %1773
        %1775 = vrot.lane.b32.xlu0 %v1681, 12
        %v1776 = vpop.permute.xlu0 %1775
        %1777 = vrot.lane.b32.xlu0 %v1682, 12
        %v1778 = vpop.permute.xlu0 %1777
        %vm1811 = vcmask 130144
        %1812 = vst.msk [vmem:[#allocation2] sm:$0xff] %vm1811, %v1716
        %1813 = vst.msk [vmem:[#allocation2 + $0x8] sm:$0xff] %vm1811, %v1718
        %1814 = vst.msk [vmem:[#allocation2 + $0x10] sm:$0xff] %vm1811, %v1720
        %1815 = vst.msk [vmem:[#allocation2 + $0x18] sm:$0xff] %vm1811, %v1722
        %1816 = vst.msk [vmem:[#allocation2 + $0x20] sm:$0xff] %vm1811, %v1724
        %1817 = vst.msk [vmem:[#allocation2 + $0x28] sm:$0xff] %vm1811, %v1726
        %1818 = vst.msk [vmem:[#allocation2 + $0x30] sm:$0xff] %vm1811, %v1728
        %1819 = vst.msk [vmem:[#allocation2 + $0x38] sm:$0xff] %vm1811, %v1730
        %1820 = vst.msk [vmem:[#allocation2 + $0x40] sm:$0xff] %vm1811, %v1732
        %1821 = vst.msk [vmem:[#allocation2 + $0x48] sm:$0xff] %vm1811, %v1734
        %1822 = vst.msk [vmem:[#allocation2 + $0x50] sm:$0xff] %vm1811, %v1736
        %1823 = vst.msk [vmem:[#allocation2 + $0x58] sm:$0xff] %vm1811, %v1738
        %1824 = vst.msk [vmem:[#allocation2 + $0x60] sm:$0xff] %vm1811, %v1740
        %1825 = vst.msk [vmem:[#allocation2 + $0x68] sm:$0xff] %vm1811, %v1742
        %1826 = vst.msk [vmem:[#allocation2 + $0x70] sm:$0xff] %vm1811, %v1744
        %1827 = vst.msk [vmem:[#allocation2 + $0x78] sm:$0xff] %vm1811, %v1746
        %1828 = vst.msk [vmem:[#allocation2 + $0x80] sm:$0xff] %vm1811, %v1748
        %1829 = vst.msk [vmem:[#allocation2 + $0x88] sm:$0xff] %vm1811, %v1750
        %1830 = vst.msk [vmem:[#allocation2 + $0x90] sm:$0xff] %vm1811, %v1752
        %1831 = vst.msk [vmem:[#allocation2 + $0x98] sm:$0xff] %vm1811, %v1754
        %1832 = vst.msk [vmem:[#allocation2 + $0xa0] sm:$0xff] %vm1811, %v1756
        %1833 = vst.msk [vmem:[#allocation2 + $0xa8] sm:$0xff] %vm1811, %v1758
        %1834 = vst.msk [vmem:[#allocation2 + $0xb0] sm:$0xff] %vm1811, %v1760
        %1835 = vst.msk [vmem:[#allocation2 + $0xb8] sm:$0xff] %vm1811, %v1762
        %1836 = vst.msk [vmem:[#allocation2 + $0xc0] sm:$0xff] %vm1811, %v1764
        %1837 = vst.msk [vmem:[#allocation2 + $0xc8] sm:$0xff] %vm1811, %v1766
        %1838 = vst.msk [vmem:[#allocation2 + $0xd0] sm:$0xff] %vm1811, %v1768
        %1839 = vst.msk [vmem:[#allocation2 + $0xd8] sm:$0xff] %vm1811, %v1770
        %1840 = vst.msk [vmem:[#allocation2 + $0xe0] sm:$0xff] %vm1811, %v1772
        %1841 = vst.msk [vmem:[#allocation2 + $0xe8] sm:$0xff] %vm1811, %v1774
        %1842 = vst.msk [vmem:[#allocation2 + $0xf0] sm:$0xff] %vm1811, %v1776
        %1843 = vst.msk [vmem:[#allocation2 + $0xf8] sm:$0xff] %vm1811, %v1778
        %1876 = vrot.lane.b32.xlu0 %v493, 16
        %v1877 = vpop.permute.xlu0 %1876
        %1878 = vrot.lane.b32.xlu0 %v494, 16
        %v1879 = vpop.permute.xlu0 %1878
        %1880 = vrot.lane.b32.xlu0 %v495, 16
        %v1881 = vpop.permute.xlu0 %1880
        %1882 = vrot.lane.b32.xlu0 %v496, 16
        %v1883 = vpop.permute.xlu0 %1882
        %1884 = vrot.lane.b32.xlu0 %v497, 16
        %v1885 = vpop.permute.xlu0 %1884
        %1886 = vrot.lane.b32.xlu0 %v498, 16
        %v1887 = vpop.permute.xlu0 %1886
        %1888 = vrot.lane.b32.xlu0 %v499, 16
        %v1889 = vpop.permute.xlu0 %1888
        %1890 = vrot.lane.b32.xlu0 %v500, 16
        %v1891 = vpop.permute.xlu0 %1890
        %1892 = vrot.lane.b32.xlu0 %v501, 16
        %v1893 = vpop.permute.xlu0 %1892
        %1894 = vrot.lane.b32.xlu0 %v502, 16
        %v1895 = vpop.permute.xlu0 %1894
        %1896 = vrot.lane.b32.xlu0 %v503, 16
        %v1897 = vpop.permute.xlu0 %1896
        %1898 = vrot.lane.b32.xlu0 %v504, 16
        %v1899 = vpop.permute.xlu0 %1898
        %1900 = vrot.lane.b32.xlu0 %v505, 16
        %v1901 = vpop.permute.xlu0 %1900
        %1902 = vrot.lane.b32.xlu0 %v506, 16
        %v1903 = vpop.permute.xlu0 %1902
        %1904 = vrot.lane.b32.xlu0 %v507, 16
        %v1905 = vpop.permute.xlu0 %1904
        %1906 = vrot.lane.b32.xlu0 %v508, 16
        %v1907 = vpop.permute.xlu0 %1906
        %1908 = vrot.lane.b32.xlu0 %v509, 16
        %v1909 = vpop.permute.xlu0 %1908
        %1910 = vrot.lane.b32.xlu0 %v510, 16
        %v1911 = vpop.permute.xlu0 %1910
        %1912 = vrot.lane.b32.xlu0 %v511, 16
        %v1913 = vpop.permute.xlu0 %1912
        %1914 = vrot.lane.b32.xlu0 %v512, 16
        %v1915 = vpop.permute.xlu0 %1914
        %1916 = vrot.lane.b32.xlu0 %v513, 16
        %v1917 = vpop.permute.xlu0 %1916
        %1918 = vrot.lane.b32.xlu0 %v514, 16
        %v1919 = vpop.permute.xlu0 %1918
        %1920 = vrot.lane.b32.xlu0 %v515, 16
        %v1921 = vpop.permute.xlu0 %1920
        %1922 = vrot.lane.b32.xlu0 %v516, 16
        %v1923 = vpop.permute.xlu0 %1922
        %1924 = vrot.lane.b32.xlu0 %v517, 16
        %v1925 = vpop.permute.xlu0 %1924
        %1926 = vrot.lane.b32.xlu0 %v518, 16
        %v1927 = vpop.permute.xlu0 %1926
        %1928 = vrot.lane.b32.xlu0 %v519, 16
        %v1929 = vpop.permute.xlu0 %1928
        %1930 = vrot.lane.b32.xlu0 %v520, 16
        %v1931 = vpop.permute.xlu0 %1930
        %1932 = vrot.lane.b32.xlu0 %v521, 16
        %v1933 = vpop.permute.xlu0 %1932
        %1934 = vrot.lane.b32.xlu0 %v522, 16
        %v1935 = vpop.permute.xlu0 %1934
        %1936 = vrot.lane.b32.xlu0 %v523, 16
        %v1937 = vpop.permute.xlu0 %1936
        %1938 = vrot.lane.b32.xlu0 %v524, 16
        %v1939 = vpop.permute.xlu0 %1938
        %vm1972 = vcmask 162944
        %1973 = vst.msk [vmem:[#allocation2] sm:$0xff] %vm1972, %v1877
        %1974 = vst.msk [vmem:[#allocation2 + $0x8] sm:$0xff] %vm1972, %v1879
        %1975 = vst.msk [vmem:[#allocation2 + $0x10] sm:$0xff] %vm1972, %v1881
        %1976 = vst.msk [vmem:[#allocation2 + $0x18] sm:$0xff] %vm1972, %v1883
        %1977 = vst.msk [vmem:[#allocation2 + $0x20] sm:$0xff] %vm1972, %v1885
        %1978 = vst.msk [vmem:[#allocation2 + $0x28] sm:$0xff] %vm1972, %v1887
        %1979 = vst.msk [vmem:[#allocation2 + $0x30] sm:$0xff] %vm1972, %v1889
        %1980 = vst.msk [vmem:[#allocation2 + $0x38] sm:$0xff] %vm1972, %v1891
        %1981 = vst.msk [vmem:[#allocation2 + $0x40] sm:$0xff] %vm1972, %v1893
        %1982 = vst.msk [vmem:[#allocation2 + $0x48] sm:$0xff] %vm1972, %v1895
        %1983 = vst.msk [vmem:[#allocation2 + $0x50] sm:$0xff] %vm1972, %v1897
        %1984 = vst.msk [vmem:[#allocation2 + $0x58] sm:$0xff] %vm1972, %v1899
        %1985 = vst.msk [vmem:[#allocation2 + $0x60] sm:$0xff] %vm1972, %v1901
        %1986 = vst.msk [vmem:[#allocation2 + $0x68] sm:$0xff] %vm1972, %v1903
        %1987 = vst.msk [vmem:[#allocation2 + $0x70] sm:$0xff] %vm1972, %v1905
        %1988 = vst.msk [vmem:[#allocation2 + $0x78] sm:$0xff] %vm1972, %v1907
        %1989 = vst.msk [vmem:[#allocation2 + $0x80] sm:$0xff] %vm1972, %v1909
        %1990 = vst.msk [vmem:[#allocation2 + $0x88] sm:$0xff] %vm1972, %v1911
        %1991 = vst.msk [vmem:[#allocation2 + $0x90] sm:$0xff] %vm1972, %v1913
        %1992 = vst.msk [vmem:[#allocation2 + $0x98] sm:$0xff] %vm1972, %v1915
        %1993 = vst.msk [vmem:[#allocation2 + $0xa0] sm:$0xff] %vm1972, %v1917
        %1994 = vst.msk [vmem:[#allocation2 + $0xa8] sm:$0xff] %vm1972, %v1919
        %1995 = vst.msk [vmem:[#allocation2 + $0xb0] sm:$0xff] %vm1972, %v1921
        %1996 = vst.msk [vmem:[#allocation2 + $0xb8] sm:$0xff] %vm1972, %v1923
        %1997 = vst.msk [vmem:[#allocation2 + $0xc0] sm:$0xff] %vm1972, %v1925
        %1998 = vst.msk [vmem:[#allocation2 + $0xc8] sm:$0xff] %vm1972, %v1927
        %1999 = vst.msk [vmem:[#allocation2 + $0xd0] sm:$0xff] %vm1972, %v1929
        %2000 = vst.msk [vmem:[#allocation2 + $0xd8] sm:$0xff] %vm1972, %v1931
        %2001 = vst.msk [vmem:[#allocation2 + $0xe0] sm:$0xff] %vm1972, %v1933
        %2002 = vst.msk [vmem:[#allocation2 + $0xe8] sm:$0xff] %vm1972, %v1935
        %2003 = vst.msk [vmem:[#allocation2 + $0xf0] sm:$0xff] %vm1972, %v1937
        %2004 = vst.msk [vmem:[#allocation2 + $0xf8] sm:$0xff] %vm1972, %v1939
        %v2005 = vsel %vm718, 1, 0
        %v2006 = vsel %vm719, 1, 0
        %v2007 = vsel %vm720, 1, 0
        %v2008 = vsel %vm721, 1, 0
        %v2009 = vsel %vm722, 1, 0
        %v2010 = vsel %vm723, 1, 0
        %v2011 = vsel %vm724, 1, 0
        %v2012 = vsel %vm725, 1, 0
        %v2013 = vsel %vm726, 1, 0
        %v2014 = vsel %vm727, 1, 0
        %v2015 = vsel %vm728, 1, 0
        %v2016 = vsel %vm729, 1, 0
        %v2017 = vsel %vm730, 1, 0
        %v2018 = vsel %vm731, 1, 0
        %v2019 = vsel %vm732, 1, 0
        %v2020 = vsel %vm733, 1, 0
        %v2021 = vsel %vm734, 1, 0
        %v2022 = vsel %vm735, 1, 0
        %v2023 = vsel %vm736, 1, 0
        %v2024 = vsel %vm737, 1, 0
        %v2025 = vsel %vm738, 1, 0
        %v2026 = vsel %vm739, 1, 0
        %v2027 = vsel %vm740, 1, 0
        %v2028 = vsel %vm741, 1, 0
        %v2029 = vsel %vm742, 1, 0
        %v2030 = vsel %vm743, 1, 0
        %v2031 = vsel %vm744, 1, 0
        %v2032 = vsel %vm745, 1, 0
        %v2033 = vsel %vm746, 1, 0
        %v2034 = vsel %vm747, 1, 0
        %v2035 = vsel %vm748, 1, 0
        %v2036 = vsel %vm749, 1, 0
        %vm2037 = vcmp.eq.s32.totalorder %v2005, 1
        %vm2038 = vcmp.eq.s32.totalorder %v2006, 1
        %vm2039 = vcmp.eq.s32.totalorder %v2007, 1
        %vm2040 = vcmp.eq.s32.totalorder %v2008, 1
        %vm2041 = vcmp.eq.s32.totalorder %v2009, 1
        %vm2042 = vcmp.eq.s32.totalorder %v2010, 1
        %vm2043 = vcmp.eq.s32.totalorder %v2011, 1
        %vm2044 = vcmp.eq.s32.totalorder %v2012, 1
        %vm2045 = vcmp.eq.s32.totalorder %v2013, 1
        %vm2046 = vcmp.eq.s32.totalorder %v2014, 1
        %vm2047 = vcmp.eq.s32.totalorder %v2015, 1
        %vm2048 = vcmp.eq.s32.totalorder %v2016, 1
        %vm2049 = vcmp.eq.s32.totalorder %v2017, 1
        %vm2050 = vcmp.eq.s32.totalorder %v2018, 1
        %vm2051 = vcmp.eq.s32.totalorder %v2019, 1
        %vm2052 = vcmp.eq.s32.totalorder %v2020, 1
        %vm2053 = vcmp.eq.s32.totalorder %v2021, 1
        %vm2054 = vcmp.eq.s32.totalorder %v2022, 1
        %vm2055 = vcmp.eq.s32.totalorder %v2023, 1
        %vm2056 = vcmp.eq.s32.totalorder %v2024, 1
        %vm2057 = vcmp.eq.s32.totalorder %v2025, 1
        %vm2058 = vcmp.eq.s32.totalorder %v2026, 1
        %vm2059 = vcmp.eq.s32.totalorder %v2027, 1
        %vm2060 = vcmp.eq.s32.totalorder %v2028, 1
        %vm2061 = vcmp.eq.s32.totalorder %v2029, 1
        %vm2062 = vcmp.eq.s32.totalorder %v2030, 1
        %vm2063 = vcmp.eq.s32.totalorder %v2031, 1
        %vm2064 = vcmp.eq.s32.totalorder %v2032, 1
        %vm2065 = vcmp.eq.s32.totalorder %v2033, 1
        %vm2066 = vcmp.eq.s32.totalorder %v2034, 1
        %vm2067 = vcmp.eq.s32.totalorder %v2035, 1
        %vm2068 = vcmp.eq.s32.totalorder %v2036, 1
        %v2069 = vsel %vm2037, %v1296, 0.0
        %v2070 = vsel %vm2038, %v1295, 0.0
        %v2071 = vsel %vm2039, %v1294, 0.0
        %v2072 = vsel %vm2040, %v1293, 0.0
        %v2073 = vsel %vm2041, %v1292, 0.0
        %v2074 = vsel %vm2042, %v1291, 0.0
        %v2075 = vsel %vm2043, %v1290, 0.0
        %v2076 = vsel %vm2044, %v1289, 0.0
        %v2077 = vsel %vm2045, %v1288, 0.0
        %v2078 = vsel %vm2046, %v1287, 0.0
        %v2079 = vsel %vm2047, %v1286, 0.0
        %v2080 = vsel %vm2048, %v1285, 0.0
        %v2081 = vsel %vm2049, %v1284, 0.0
        %v2082 = vsel %vm2050, %v1283, 0.0
        %v2083 = vsel %vm2051, %v1282, 0.0
        %v2084 = vsel %vm2052, %v1281, 0.0
        %v2085 = vsel %vm2053, %v1280, 0.0
        %v2086 = vsel %vm2054, %v1279, 0.0
        %v2087 = vsel %vm2055, %v1278, 0.0
        %v2088 = vsel %vm2056, %v1277, 0.0
        %v2089 = vsel %vm2057, %v1276, 0.0
        %v2090 = vsel %vm2058, %v1275, 0.0
        %v2091 = vsel %vm2059, %v1274, 0.0
        %v2092 = vsel %vm2060, %v1273, 0.0
        %v2093 = vsel %vm2061, %v1272, 0.0
        %v2094 = vsel %vm2062, %v1271, 0.0
        %v2095 = vsel %vm2063, %v1270, 0.0
        %v2096 = vsel %vm2064, %v1269, 0.0
        %v2097 = vsel %vm2065, %v1268, 0.0
        %v2098 = vsel %vm2066, %v1267, 0.0
        %v2099 = vsel %vm2067, %v1266, 0.0
        %v2100 = vsel %vm2068, %v1297, 0.0
        %2133 = vrot.lane.b32.xlu0 %v2069, 20
        %v2134 = vpop.permute.xlu0 %2133
        %2135 = vrot.lane.b32.xlu0 %v2070, 20
        %v2136 = vpop.permute.xlu0 %2135
        %2137 = vrot.lane.b32.xlu0 %v2071, 20
        %v2138 = vpop.permute.xlu0 %2137
        %2139 = vrot.lane.b32.xlu0 %v2072, 20
        %v2140 = vpop.permute.xlu0 %2139
        %2141 = vrot.lane.b32.xlu0 %v2073, 20
        %v2142 = vpop.permute.xlu0 %2141
        %2143 = vrot.lane.b32.xlu0 %v2074, 20
        %v2144 = vpop.permute.xlu0 %2143
        %2145 = vrot.lane.b32.xlu0 %v2075, 20
        %v2146 = vpop.permute.xlu0 %2145
        %2147 = vrot.lane.b32.xlu0 %v2076, 20
        %v2148 = vpop.permute.xlu0 %2147
        %2149 = vrot.lane.b32.xlu0 %v2077, 20
        %v2150 = vpop.permute.xlu0 %2149
        %2151 = vrot.lane.b32.xlu0 %v2078, 20
        %v2152 = vpop.permute.xlu0 %2151
        %2153 = vrot.lane.b32.xlu0 %v2079, 20
        %v2154 = vpop.permute.xlu0 %2153
        %2155 = vrot.lane.b32.xlu0 %v2080, 20
        %v2156 = vpop.permute.xlu0 %2155
        %2157 = vrot.lane.b32.xlu0 %v2081, 20
        %v2158 = vpop.permute.xlu0 %2157
        %2159 = vrot.lane.b32.xlu0 %v2082, 20
        %v2160 = vpop.permute.xlu0 %2159
        %2161 = vrot.lane.b32.xlu0 %v2083, 20
        %v2162 = vpop.permute.xlu0 %2161
        %2163 = vrot.lane.b32.xlu0 %v2084, 20
        %v2164 = vpop.permute.xlu0 %2163
        %2165 = vrot.lane.b32.xlu0 %v2085, 20
        %v2166 = vpop.permute.xlu0 %2165
        %2167 = vrot.lane.b32.xlu0 %v2086, 20
        %v2168 = vpop.permute.xlu0 %2167
        %2169 = vrot.lane.b32.xlu0 %v2087, 20
        %v2170 = vpop.permute.xlu0 %2169
        %2171 = vrot.lane.b32.xlu0 %v2088, 20
        %v2172 = vpop.permute.xlu0 %2171
        %2173 = vrot.lane.b32.xlu0 %v2089, 20
        %v2174 = vpop.permute.xlu0 %2173
        %2175 = vrot.lane.b32.xlu0 %v2090, 20
        %v2176 = vpop.permute.xlu0 %2175
        %2177 = vrot.lane.b32.xlu0 %v2091, 20
        %v2178 = vpop.permute.xlu0 %2177
        %2179 = vrot.lane.b32.xlu0 %v2092, 20
        %v2180 = vpop.permute.xlu0 %2179
        %2181 = vrot.lane.b32.xlu0 %v2093, 20
        %v2182 = vpop.permute.xlu0 %2181
        %2183 = vrot.lane.b32.xlu0 %v2094, 20
        %v2184 = vpop.permute.xlu0 %2183
        %2185 = vrot.lane.b32.xlu0 %v2095, 20
        %v2186 = vpop.permute.xlu0 %2185
        %2187 = vrot.lane.b32.xlu0 %v2096, 20
        %v2188 = vpop.permute.xlu0 %2187
        %2189 = vrot.lane.b32.xlu0 %v2097, 20
        %v2190 = vpop.permute.xlu0 %2189
        %2191 = vrot.lane.b32.xlu0 %v2098, 20
        %v2192 = vpop.permute.xlu0 %2191
        %2193 = vrot.lane.b32.xlu0 %v2099, 20
        %v2194 = vpop.permute.xlu0 %2193
        %2195 = vrot.lane.b32.xlu0 %v2100, 20
        %v2196 = vpop.permute.xlu0 %2195
        %vm2229 = vcmask 195744
        %2230 = vst.msk [vmem:[#allocation2] sm:$0xff] %vm2229, %v2134
        %2231 = vst.msk [vmem:[#allocation2 + $0x8] sm:$0xff] %vm2229, %v2136
        %2232 = vst.msk [vmem:[#allocation2 + $0x10] sm:$0xff] %vm2229, %v2138
        %2233 = vst.msk [vmem:[#allocation2 + $0x18] sm:$0xff] %vm2229, %v2140
        %2234 = vst.msk [vmem:[#allocation2 + $0x20] sm:$0xff] %vm2229, %v2142
        %2235 = vst.msk [vmem:[#allocation2 + $0x28] sm:$0xff] %vm2229, %v2144
        %2236 = vst.msk [vmem:[#allocation2 + $0x30] sm:$0xff] %vm2229, %v2146
        %2237 = vst.msk [vmem:[#allocation2 + $0x38] sm:$0xff] %vm2229, %v2148
        %2238 = vst.msk [vmem:[#allocation2 + $0x40] sm:$0xff] %vm2229, %v2150
        %2239 = vst.msk [vmem:[#allocation2 + $0x48] sm:$0xff] %vm2229, %v2152
        %2240 = vst.msk [vmem:[#allocation2 + $0x50] sm:$0xff] %vm2229, %v2154
        %2241 = vst.msk [vmem:[#allocation2 + $0x58] sm:$0xff] %vm2229, %v2156
        %2242 = vst.msk [vmem:[#allocation2 + $0x60] sm:$0xff] %vm2229, %v2158
        %2243 = vst.msk [vmem:[#allocation2 + $0x68] sm:$0xff] %vm2229, %v2160
        %2244 = vst.msk [vmem:[#allocation2 + $0x70] sm:$0xff] %vm2229, %v2162
        %2245 = vst.msk [vmem:[#allocation2 + $0x78] sm:$0xff] %vm2229, %v2164
        %2246 = vst.msk [vmem:[#allocation2 + $0x80] sm:$0xff] %vm2229, %v2166
        %2247 = vst.msk [vmem:[#allocation2 + $0x88] sm:$0xff] %vm2229, %v2168
        %2248 = vst.msk [vmem:[#allocation2 + $0x90] sm:$0xff] %vm2229, %v2170
        %2249 = vst.msk [vmem:[#allocation2 + $0x98] sm:$0xff] %vm2229, %v2172
        %2250 = vst.msk [vmem:[#allocation2 + $0xa0] sm:$0xff] %vm2229, %v2174
        %2251 = vst.msk [vmem:[#allocation2 + $0xa8] sm:$0xff] %vm2229, %v2176
        %2252 = vst.msk [vmem:[#allocation2 + $0xb0] sm:$0xff] %vm2229, %v2178
        %2253 = vst.msk [vmem:[#allocation2 + $0xb8] sm:$0xff] %vm2229, %v2180
        %2254 = vst.msk [vmem:[#allocation2 + $0xc0] sm:$0xff] %vm2229, %v2182
        %2255 = vst.msk [vmem:[#allocation2 + $0xc8] sm:$0xff] %vm2229, %v2184
        %2256 = vst.msk [vmem:[#allocation2 + $0xd0] sm:$0xff] %vm2229, %v2186
        %2257 = vst.msk [vmem:[#allocation2 + $0xd8] sm:$0xff] %vm2229, %v2188
        %2258 = vst.msk [vmem:[#allocation2 + $0xe0] sm:$0xff] %vm2229, %v2190
        %2259 = vst.msk [vmem:[#allocation2 + $0xe8] sm:$0xff] %vm2229, %v2192
        %2260 = vst.msk [vmem:[#allocation2 + $0xf0] sm:$0xff] %vm2229, %v2194
        %2261 = vst.msk [vmem:[#allocation2 + $0xf8] sm:$0xff] %vm2229, %v2196
        %vm2262 = vmand %vm654, %vm686
        %vm2263 = vmand %vm655, %vm687
        %vm2264 = vmand %vm656, %vm688
        %vm2265 = vmand %vm657, %vm689
        %vm2266 = vmand %vm658, %vm690
        %vm2267 = vmand %vm659, %vm691
        %vm2268 = vmand %vm660, %vm692
        %vm2269 = vmand %vm661, %vm693
        %vm2270 = vmand %vm662, %vm694
        %vm2271 = vmand %vm663, %vm695
        %vm2272 = vmand %vm664, %vm696
        %vm2273 = vmand %vm665, %vm697
        %vm2274 = vmand %vm666, %vm698
        %vm2275 = vmand %vm667, %vm699
        %vm2276 = vmand %vm668, %vm700
        %vm2277 = vmand %vm669, %vm701
        %vm2278 = vmand %vm670, %vm702
        %vm2279 = vmand %vm671, %vm703
        %vm2280 = vmand %vm672, %vm704
        %vm2281 = vmand %vm673, %vm705
        %vm2282 = vmand %vm674, %vm706
        %vm2283 = vmand %vm675, %vm707
        %vm2284 = vmand %vm676, %vm708
        %vm2285 = vmand %vm677, %vm709
        %vm2286 = vmand %vm678, %vm710
        %vm2287 = vmand %vm679, %vm711
        %vm2288 = vmand %vm680, %vm712
        %vm2289 = vmand %vm681, %vm713
        %vm2290 = vmand %vm682, %vm714
        %vm2291 = vmand %vm683, %vm715
        %vm2292 = vmand %vm684, %vm716
        %vm2293 = vmand %vm685, %vm717
        %v2294 = vsel %vm2262, 1, 0
        %v2295 = vsel %vm2263, 1, 0
        %v2296 = vsel %vm2264, 1, 0
        %v2297 = vsel %vm2265, 1, 0
        %v2298 = vsel %vm2266, 1, 0
        %v2299 = vsel %vm2267, 1, 0
        %v2300 = vsel %vm2268, 1, 0
        %v2301 = vsel %vm2269, 1, 0
        %v2302 = vsel %vm2270, 1, 0
        %v2303 = vsel %vm2271, 1, 0
        %v2304 = vsel %vm2272, 1, 0
        %v2305 = vsel %vm2273, 1, 0
        %v2306 = vsel %vm2274, 1, 0
        %v2307 = vsel %vm2275, 1, 0
        %v2308 = vsel %vm2276, 1, 0
        %v2309 = vsel %vm2277, 1, 0
        %v2310 = vsel %vm2278, 1, 0
        %v2311 = vsel %vm2279, 1, 0
        %v2312 = vsel %vm2280, 1, 0
        %v2313 = vsel %vm2281, 1, 0
        %v2314 = vsel %vm2282, 1, 0
        %v2315 = vsel %vm2283, 1, 0
        %v2316 = vsel %vm2284, 1, 0
        %v2317 = vsel %vm2285, 1, 0
        %v2318 = vsel %vm2286, 1, 0
        %v2319 = vsel %vm2287, 1, 0
        %v2320 = vsel %vm2288, 1, 0
        %v2321 = vsel %vm2289, 1, 0
        %v2322 = vsel %vm2290, 1, 0
        %v2323 = vsel %vm2291, 1, 0
        %v2324 = vsel %vm2292, 1, 0
        %v2325 = vsel %vm2293, 1, 0
        %vm2326 = vcmp.eq.s32.totalorder %v2294, 1
        %vm2327 = vcmp.eq.s32.totalorder %v2295, 1
        %vm2328 = vcmp.eq.s32.totalorder %v2296, 1
        %vm2329 = vcmp.eq.s32.totalorder %v2297, 1
        %vm2330 = vcmp.eq.s32.totalorder %v2298, 1
        %vm2331 = vcmp.eq.s32.totalorder %v2299, 1
        %vm2332 = vcmp.eq.s32.totalorder %v2300, 1
        %vm2333 = vcmp.eq.s32.totalorder %v2301, 1
        %vm2334 = vcmp.eq.s32.totalorder %v2302, 1
        %vm2335 = vcmp.eq.s32.totalorder %v2303, 1
        %vm2336 = vcmp.eq.s32.totalorder %v2304, 1
        %vm2337 = vcmp.eq.s32.totalorder %v2305, 1
        %vm2338 = vcmp.eq.s32.totalorder %v2306, 1
        %vm2339 = vcmp.eq.s32.totalorder %v2307, 1
        %vm2340 = vcmp.eq.s32.totalorder %v2308, 1
        %vm2341 = vcmp.eq.s32.totalorder %v2309, 1
        %vm2342 = vcmp.eq.s32.totalorder %v2310, 1
        %vm2343 = vcmp.eq.s32.totalorder %v2311, 1
        %vm2344 = vcmp.eq.s32.totalorder %v2312, 1
        %vm2345 = vcmp.eq.s32.totalorder %v2313, 1
        %vm2346 = vcmp.eq.s32.totalorder %v2314, 1
        %vm2347 = vcmp.eq.s32.totalorder %v2315, 1
        %vm2348 = vcmp.eq.s32.totalorder %v2316, 1
        %vm2349 = vcmp.eq.s32.totalorder %v2317, 1
        %vm2350 = vcmp.eq.s32.totalorder %v2318, 1
        %vm2351 = vcmp.eq.s32.totalorder %v2319, 1
        %vm2352 = vcmp.eq.s32.totalorder %v2320, 1
        %vm2353 = vcmp.eq.s32.totalorder %v2321, 1
        %vm2354 = vcmp.eq.s32.totalorder %v2322, 1
        %vm2355 = vcmp.eq.s32.totalorder %v2323, 1
        %vm2356 = vcmp.eq.s32.totalorder %v2324, 1
        %vm2357 = vcmp.eq.s32.totalorder %v2325, 1
        %v2358 = vsel %vm2326, %v812, 0.0
        %v2359 = vsel %vm2327, %v811, 0.0
        %v2360 = vsel %vm2328, %v810, 0.0
        %v2361 = vsel %vm2329, %v809, 0.0
        %v2362 = vsel %vm2330, %v808, 0.0
        %v2363 = vsel %vm2331, %v807, 0.0
        %v2364 = vsel %vm2332, %v806, 0.0
        %v2365 = vsel %vm2333, %v805, 0.0
        %v2366 = vsel %vm2334, %v804, 0.0
        %v2367 = vsel %vm2335, %v803, 0.0
        %v2368 = vsel %vm2336, %v802, 0.0
        %v2369 = vsel %vm2337, %v801, 0.0
        %v2370 = vsel %vm2338, %v800, 0.0
        %v2371 = vsel %vm2339, %v799, 0.0
        %v2372 = vsel %vm2340, %v798, 0.0
        %v2373 = vsel %vm2341, %v797, 0.0
        %v2374 = vsel %vm2342, %v796, 0.0
        %v2375 = vsel %vm2343, %v795, 0.0
        %v2376 = vsel %vm2344, %v794, 0.0
        %v2377 = vsel %vm2345, %v793, 0.0
        %v2378 = vsel %vm2346, %v792, 0.0
        %v2379 = vsel %vm2347, %v791, 0.0
        %v2380 = vsel %vm2348, %v790, 0.0
        %v2381 = vsel %vm2349, %v789, 0.0
        %v2382 = vsel %vm2350, %v788, 0.0
        %v2383 = vsel %vm2351, %v787, 0.0
        %v2384 = vsel %vm2352, %v786, 0.0
        %v2385 = vsel %vm2353, %v785, 0.0
        %v2386 = vsel %vm2354, %v784, 0.0
        %v2387 = vsel %vm2355, %v783, 0.0
        %v2388 = vsel %vm2356, %v814, 0.0
        %v2389 = vsel %vm2357, %v813, 0.0
        %2422 = vrot.lane.b32.xlu0 %v2358, 24
        %v2423 = vpop.permute.xlu0 %2422
        %2424 = vrot.lane.b32.xlu0 %v2359, 24
        %v2425 = vpop.permute.xlu0 %2424
        %2426 = vrot.lane.b32.xlu0 %v2360, 24
        %v2427 = vpop.permute.xlu0 %2426
        %2428 = vrot.lane.b32.xlu0 %v2361, 24
        %v2429 = vpop.permute.xlu0 %2428
        %2430 = vrot.lane.b32.xlu0 %v2362, 24
        %v2431 = vpop.permute.xlu0 %2430
        %2432 = vrot.lane.b32.xlu0 %v2363, 24
        %v2433 = vpop.permute.xlu0 %2432
        %2434 = vrot.lane.b32.xlu0 %v2364, 24
        %v2435 = vpop.permute.xlu0 %2434
        %2436 = vrot.lane.b32.xlu0 %v2365, 24
        %v2437 = vpop.permute.xlu0 %2436
        %2438 = vrot.lane.b32.xlu0 %v2366, 24
        %v2439 = vpop.permute.xlu0 %2438
        %2440 = vrot.lane.b32.xlu0 %v2367, 24
        %v2441 = vpop.permute.xlu0 %2440
        %2442 = vrot.lane.b32.xlu0 %v2368, 24
        %v2443 = vpop.permute.xlu0 %2442
        %2444 = vrot.lane.b32.xlu0 %v2369, 24
        %v2445 = vpop.permute.xlu0 %2444
        %2446 = vrot.lane.b32.xlu0 %v2370, 24
        %v2447 = vpop.permute.xlu0 %2446
        %2448 = vrot.lane.b32.xlu0 %v2371, 24
        %v2449 = vpop.permute.xlu0 %2448
        %2450 = vrot.lane.b32.xlu0 %v2372, 24
        %v2451 = vpop.permute.xlu0 %2450
        %2452 = vrot.lane.b32.xlu0 %v2373, 24
        %v2453 = vpop.permute.xlu0 %2452
        %2454 = vrot.lane.b32.xlu0 %v2374, 24
        %v2455 = vpop.permute.xlu0 %2454
        %2456 = vrot.lane.b32.xlu0 %v2375, 24
        %v2457 = vpop.permute.xlu0 %2456
        %2458 = vrot.lane.b32.xlu0 %v2376, 24
        %v2459 = vpop.permute.xlu0 %2458
        %2460 = vrot.lane.b32.xlu0 %v2377, 24
        %v2461 = vpop.permute.xlu0 %2460
        %2462 = vrot.lane.b32.xlu0 %v2378, 24
        %v2463 = vpop.permute.xlu0 %2462
        %2464 = vrot.lane.b32.xlu0 %v2379, 24
        %v2465 = vpop.permute.xlu0 %2464
        %2466 = vrot.lane.b32.xlu0 %v2380, 24
        %v2467 = vpop.permute.xlu0 %2466
        %2468 = vrot.lane.b32.xlu0 %v2381, 24
        %v2469 = vpop.permute.xlu0 %2468
        %2470 = vrot.lane.b32.xlu0 %v2382, 24
        %v2471 = vpop.permute.xlu0 %2470
        %2472 = vrot.lane.b32.xlu0 %v2383, 24
        %v2473 = vpop.permute.xlu0 %2472
        %2474 = vrot.lane.b32.xlu0 %v2384, 24
        %v2475 = vpop.permute.xlu0 %2474
        %2476 = vrot.lane.b32.xlu0 %v2385, 24
        %v2477 = vpop.permute.xlu0 %2476
        %2478 = vrot.lane.b32.xlu0 %v2386, 24
        %v2479 = vpop.permute.xlu0 %2478
        %2480 = vrot.lane.b32.xlu0 %v2387, 24
        %v2481 = vpop.permute.xlu0 %2480
        %2482 = vrot.lane.b32.xlu0 %v2388, 24
        %v2483 = vpop.permute.xlu0 %2482
        %2484 = vrot.lane.b32.xlu0 %v2389, 24
        %v2485 = vpop.permute.xlu0 %2484
        %vm2518 = vcmask 228544
        %2519 = vst.msk [vmem:[#allocation2] sm:$0xff] %vm2518, %v2423
        %2520 = vst.msk [vmem:[#allocation2 + $0x8] sm:$0xff] %vm2518, %v2425
        %2521 = vst.msk [vmem:[#allocation2 + $0x10] sm:$0xff] %vm2518, %v2427
        %2522 = vst.msk [vmem:[#allocation2 + $0x18] sm:$0xff] %vm2518, %v2429
        %2523 = vst.msk [vmem:[#allocation2 + $0x20] sm:$0xff] %vm2518, %v2431
        %2524 = vst.msk [vmem:[#allocation2 + $0x28] sm:$0xff] %vm2518, %v2433
        %2525 = vst.msk [vmem:[#allocation2 + $0x30] sm:$0xff] %vm2518, %v2435
        %2526 = vst.msk [vmem:[#allocation2 + $0x38] sm:$0xff] %vm2518, %v2437
        %2527 = vst.msk [vmem:[#allocation2 + $0x40] sm:$0xff] %vm2518, %v2439
        %2528 = vst.msk [vmem:[#allocation2 + $0x48] sm:$0xff] %vm2518, %v2441
        %2529 = vst.msk [vmem:[#allocation2 + $0x50] sm:$0xff] %vm2518, %v2443
        %2530 = vst.msk [vmem:[#allocation2 + $0x58] sm:$0xff] %vm2518, %v2445
        %2531 = vst.msk [vmem:[#allocation2 + $0x60] sm:$0xff] %vm2518, %v2447
        %2532 = vst.msk [vmem:[#allocation2 + $0x68] sm:$0xff] %vm2518, %v2449
        %2533 = vst.msk [vmem:[#allocation2 + $0x70] sm:$0xff] %vm2518, %v2451
        %2534 = vst.msk [vmem:[#allocation2 + $0x78] sm:$0xff] %vm2518, %v2453
        %2535 = vst.msk [vmem:[#allocation2 + $0x80] sm:$0xff] %vm2518, %v2455
        %2536 = vst.msk [vmem:[#allocation2 + $0x88] sm:$0xff] %vm2518, %v2457
        %2537 = vst.msk [vmem:[#allocation2 + $0x90] sm:$0xff] %vm2518, %v2459
        %2538 = vst.msk [vmem:[#allocation2 + $0x98] sm:$0xff] %vm2518, %v2461
        %2539 = vst.msk [vmem:[#allocation2 + $0xa0] sm:$0xff] %vm2518, %v2463
        %2540 = vst.msk [vmem:[#allocation2 + $0xa8] sm:$0xff] %vm2518, %v2465
        %2541 = vst.msk [vmem:[#allocation2 + $0xb0] sm:$0xff] %vm2518, %v2467
        %2542 = vst.msk [vmem:[#allocation2 + $0xb8] sm:$0xff] %vm2518, %v2469
        %2543 = vst.msk [vmem:[#allocation2 + $0xc0] sm:$0xff] %vm2518, %v2471
        %2544 = vst.msk [vmem:[#allocation2 + $0xc8] sm:$0xff] %vm2518, %v2473
        %2545 = vst.msk [vmem:[#allocation2 + $0xd0] sm:$0xff] %vm2518, %v2475
        %2546 = vst.msk [vmem:[#allocation2 + $0xd8] sm:$0xff] %vm2518, %v2477
        %2547 = vst.msk [vmem:[#allocation2 + $0xe0] sm:$0xff] %vm2518, %v2479
        %2548 = vst.msk [vmem:[#allocation2 + $0xe8] sm:$0xff] %vm2518, %v2481
        %2549 = vst.msk [vmem:[#allocation2 + $0xf0] sm:$0xff] %vm2518, %v2483
        %2550 = vst.msk [vmem:[#allocation2 + $0xf8] sm:$0xff] %vm2518, %v2485
        %v2551 = vsel %vm654, 1, 0
        %v2552 = vsel %vm655, 1, 0
        %v2553 = vsel %vm656, 1, 0
        %v2554 = vsel %vm657, 1, 0
        %v2555 = vsel %vm658, 1, 0
        %v2556 = vsel %vm659, 1, 0
        %v2557 = vsel %vm660, 1, 0
        %v2558 = vsel %vm661, 1, 0
        %v2559 = vsel %vm662, 1, 0
        %v2560 = vsel %vm663, 1, 0
        %v2561 = vsel %vm664, 1, 0
        %v2562 = vsel %vm665, 1, 0
        %v2563 = vsel %vm666, 1, 0
        %v2564 = vsel %vm667, 1, 0
        %v2565 = vsel %vm668, 1, 0
        %v2566 = vsel %vm669, 1, 0
        %v2567 = vsel %vm670, 1, 0
        %v2568 = vsel %vm671, 1, 0
        %v2569 = vsel %vm672, 1, 0
        %v2570 = vsel %vm673, 1, 0
        %v2571 = vsel %vm674, 1, 0
        %v2572 = vsel %vm675, 1, 0
        %v2573 = vsel %vm676, 1, 0
        %v2574 = vsel %vm677, 1, 0
        %v2575 = vsel %vm678, 1, 0
        %v2576 = vsel %vm679, 1, 0
        %v2577 = vsel %vm680, 1, 0
        %v2578 = vsel %vm681, 1, 0
        %v2579 = vsel %vm682, 1, 0
        %v2580 = vsel %vm683, 1, 0
        %v2581 = vsel %vm684, 1, 0
        %v2582 = vsel %vm685, 1, 0
        %vm2583 = vcmp.eq.s32.totalorder %v2551, 1
        %vm2584 = vcmp.eq.s32.totalorder %v2552, 1
        %vm2585 = vcmp.eq.s32.totalorder %v2553, 1
        %vm2586 = vcmp.eq.s32.totalorder %v2554, 1
        %vm2587 = vcmp.eq.s32.totalorder %v2555, 1
        %vm2588 = vcmp.eq.s32.totalorder %v2556, 1
        %vm2589 = vcmp.eq.s32.totalorder %v2557, 1
        %vm2590 = vcmp.eq.s32.totalorder %v2558, 1
        %vm2591 = vcmp.eq.s32.totalorder %v2559, 1
        %vm2592 = vcmp.eq.s32.totalorder %v2560, 1
        %vm2593 = vcmp.eq.s32.totalorder %v2561, 1
        %vm2594 = vcmp.eq.s32.totalorder %v2562, 1
        %vm2595 = vcmp.eq.s32.totalorder %v2563, 1
        %vm2596 = vcmp.eq.s32.totalorder %v2564, 1
        %vm2597 = vcmp.eq.s32.totalorder %v2565, 1
        %vm2598 = vcmp.eq.s32.totalorder %v2566, 1
        %vm2599 = vcmp.eq.s32.totalorder %v2567, 1
        %vm2600 = vcmp.eq.s32.totalorder %v2568, 1
        %vm2601 = vcmp.eq.s32.totalorder %v2569, 1
        %vm2602 = vcmp.eq.s32.totalorder %v2570, 1
        %vm2603 = vcmp.eq.s32.totalorder %v2571, 1
        %vm2604 = vcmp.eq.s32.totalorder %v2572, 1
        %vm2605 = vcmp.eq.s32.totalorder %v2573, 1
        %vm2606 = vcmp.eq.s32.totalorder %v2574, 1
        %vm2607 = vcmp.eq.s32.totalorder %v2575, 1
        %vm2608 = vcmp.eq.s32.totalorder %v2576, 1
        %vm2609 = vcmp.eq.s32.totalorder %v2577, 1
        %vm2610 = vcmp.eq.s32.totalorder %v2578, 1
        %vm2611 = vcmp.eq.s32.totalorder %v2579, 1
        %vm2612 = vcmp.eq.s32.totalorder %v2580, 1
        %vm2613 = vcmp.eq.s32.totalorder %v2581, 1
        %vm2614 = vcmp.eq.s32.totalorder %v2582, 1
        %v2615 = vsel %vm2583, %v495, 0.0
        %v2616 = vsel %vm2584, %v496, 0.0
        %v2617 = vsel %vm2585, %v497, 0.0
        %v2618 = vsel %vm2586, %v498, 0.0
        %v2619 = vsel %vm2587, %v499, 0.0
        %v2620 = vsel %vm2588, %v500, 0.0
        %v2621 = vsel %vm2589, %v501, 0.0
        %v2622 = vsel %vm2590, %v502, 0.0
        %v2623 = vsel %vm2591, %v503, 0.0
        %v2624 = vsel %vm2592, %v504, 0.0
        %v2625 = vsel %vm2593, %v505, 0.0
        %v2626 = vsel %vm2594, %v506, 0.0
        %v2627 = vsel %vm2595, %v507, 0.0
        %v2628 = vsel %vm2596, %v508, 0.0
        %v2629 = vsel %vm2597, %v509, 0.0
        %v2630 = vsel %vm2598, %v510, 0.0
        %v2631 = vsel %vm2599, %v511, 0.0
        %v2632 = vsel %vm2600, %v512, 0.0
        %v2633 = vsel %vm2601, %v513, 0.0
        %v2634 = vsel %vm2602, %v514, 0.0
        %v2635 = vsel %vm2603, %v515, 0.0
        %v2636 = vsel %vm2604, %v516, 0.0
        %v2637 = vsel %vm2605, %v517, 0.0
        %v2638 = vsel %vm2606, %v518, 0.0
        %v2639 = vsel %vm2607, %v519, 0.0
        %v2640 = vsel %vm2608, %v520, 0.0
        %v2641 = vsel %vm2609, %v521, 0.0
        %v2642 = vsel %vm2610, %v522, 0.0
        %v2643 = vsel %vm2611, %v523, 0.0
        %v2644 = vsel %vm2612, %v524, 0.0
        %v2645 = vsel %vm2613, %v493, 0.0
        %v2646 = vsel %vm2614, %v494, 0.0
        %2679 = vrot.lane.b32.xlu0 %v2615, 28
        %v2680 = vpop.permute.xlu0 %2679
        %2681 = vrot.lane.b32.xlu0 %v2616, 28
        %v2682 = vpop.permute.xlu0 %2681
        %2683 = vrot.lane.b32.xlu0 %v2617, 28
        %v2684 = vpop.permute.xlu0 %2683
        %2685 = vrot.lane.b32.xlu0 %v2618, 28
        %v2686 = vpop.permute.xlu0 %2685
        %2687 = vrot.lane.b32.xlu0 %v2619, 28
        %v2688 = vpop.permute.xlu0 %2687
        %2689 = vrot.lane.b32.xlu0 %v2620, 28
        %v2690 = vpop.permute.xlu0 %2689
        %2691 = vrot.lane.b32.xlu0 %v2621, 28
        %v2692 = vpop.permute.xlu0 %2691
        %2693 = vrot.lane.b32.xlu0 %v2622, 28
        %v2694 = vpop.permute.xlu0 %2693
        %2695 = vrot.lane.b32.xlu0 %v2623, 28
        %v2696 = vpop.permute.xlu0 %2695
        %2697 = vrot.lane.b32.xlu0 %v2624, 28
        %v2698 = vpop.permute.xlu0 %2697
        %2699 = vrot.lane.b32.xlu0 %v2625, 28
        %v2700 = vpop.permute.xlu0 %2699
        %2701 = vrot.lane.b32.xlu0 %v2626, 28
        %v2702 = vpop.permute.xlu0 %2701
        %2703 = vrot.lane.b32.xlu0 %v2627, 28
        %v2704 = vpop.permute.xlu0 %2703
        %2705 = vrot.lane.b32.xlu0 %v2628, 28
        %v2706 = vpop.permute.xlu0 %2705
        %2707 = vrot.lane.b32.xlu0 %v2629, 28
        %v2708 = vpop.permute.xlu0 %2707
        %2709 = vrot.lane.b32.xlu0 %v2630, 28
        %v2710 = vpop.permute.xlu0 %2709
        %2711 = vrot.lane.b32.xlu0 %v2631, 28
        %v2712 = vpop.permute.xlu0 %2711
        %2713 = vrot.lane.b32.xlu0 %v2632, 28
        %v2714 = vpop.permute.xlu0 %2713
        %2715 = vrot.lane.b32.xlu0 %v2633, 28
        %v2716 = vpop.permute.xlu0 %2715
        %2717 = vrot.lane.b32.xlu0 %v2634, 28
        %v2718 = vpop.permute.xlu0 %2717
        %2719 = vrot.lane.b32.xlu0 %v2635, 28
        %v2720 = vpop.permute.xlu0 %2719
        %2721 = vrot.lane.b32.xlu0 %v2636, 28
        %v2722 = vpop.permute.xlu0 %2721
        %2723 = vrot.lane.b32.xlu0 %v2637, 28
        %v2724 = vpop.permute.xlu0 %2723
        %2725 = vrot.lane.b32.xlu0 %v2638, 28
        %v2726 = vpop.permute.xlu0 %2725
        %2727 = vrot.lane.b32.xlu0 %v2639, 28
        %v2728 = vpop.permute.xlu0 %2727
        %2729 = vrot.lane.b32.xlu0 %v2640, 28
        %v2730 = vpop.permute.xlu0 %2729
        %2731 = vrot.lane.b32.xlu0 %v2641, 28
        %v2732 = vpop.permute.xlu0 %2731
        %2733 = vrot.lane.b32.xlu0 %v2642, 28
        %v2734 = vpop.permute.xlu0 %2733
        %2735 = vrot.lane.b32.xlu0 %v2643, 28
        %v2736 = vpop.permute.xlu0 %2735
        %2737 = vrot.lane.b32.xlu0 %v2644, 28
        %v2738 = vpop.permute.xlu0 %2737
        %2739 = vrot.lane.b32.xlu0 %v2645, 28
        %v2740 = vpop.permute.xlu0 %2739
        %2741 = vrot.lane.b32.xlu0 %v2646, 28
        %v2742 = vpop.permute.xlu0 %2741
        %vm2775 = vcmask 261344
        %2776 = vst.msk [vmem:[#allocation2] sm:$0xff] %vm2775, %v2680
        %2777 = vst.msk [vmem:[#allocation2 + $0x8] sm:$0xff] %vm2775, %v2682
        %2778 = vst.msk [vmem:[#allocation2 + $0x10] sm:$0xff] %vm2775, %v2684
        %2779 = vst.msk [vmem:[#allocation2 + $0x18] sm:$0xff] %vm2775, %v2686
        %2780 = vst.msk [vmem:[#allocation2 + $0x20] sm:$0xff] %vm2775, %v2688
        %2781 = vst.msk [vmem:[#allocation2 + $0x28] sm:$0xff] %vm2775, %v2690
        %2782 = vst.msk [vmem:[#allocation2 + $0x30] sm:$0xff] %vm2775, %v2692
        %2783 = vst.msk [vmem:[#allocation2 + $0x38] sm:$0xff] %vm2775, %v2694
        %2784 = vst.msk [vmem:[#allocation2 + $0x40] sm:$0xff] %vm2775, %v2696
        %2785 = vst.msk [vmem:[#allocation2 + $0x48] sm:$0xff] %vm2775, %v2698
        %2786 = vst.msk [vmem:[#allocation2 + $0x50] sm:$0xff] %vm2775, %v2700
        %2787 = vst.msk [vmem:[#allocation2 + $0x58] sm:$0xff] %vm2775, %v2702
        %2788 = vst.msk [vmem:[#allocation2 + $0x60] sm:$0xff] %vm2775, %v2704
        %2789 = vst.msk [vmem:[#allocation2 + $0x68] sm:$0xff] %vm2775, %v2706
        %2790 = vst.msk [vmem:[#allocation2 + $0x70] sm:$0xff] %vm2775, %v2708
        %2791 = vst.msk [vmem:[#allocation2 + $0x78] sm:$0xff] %vm2775, %v2710
        %2792 = vst.msk [vmem:[#allocation2 + $0x80] sm:$0xff] %vm2775, %v2712
        %2793 = vst.msk [vmem:[#allocation2 + $0x88] sm:$0xff] %vm2775, %v2714
        %2794 = vst.msk [vmem:[#allocation2 + $0x90] sm:$0xff] %vm2775, %v2716
        %2795 = vst.msk [vmem:[#allocation2 + $0x98] sm:$0xff] %vm2775, %v2718
        %2796 = vst.msk [vmem:[#allocation2 + $0xa0] sm:$0xff] %vm2775, %v2720
        %2797 = vst.msk [vmem:[#allocation2 + $0xa8] sm:$0xff] %vm2775, %v2722
        %2798 = vst.msk [vmem:[#allocation2 + $0xb0] sm:$0xff] %vm2775, %v2724
        %2799 = vst.msk [vmem:[#allocation2 + $0xb8] sm:$0xff] %vm2775, %v2726
        %2800 = vst.msk [vmem:[#allocation2 + $0xc0] sm:$0xff] %vm2775, %v2728
        %2801 = vst.msk [vmem:[#allocation2 + $0xc8] sm:$0xff] %vm2775, %v2730
        %2802 = vst.msk [vmem:[#allocation2 + $0xd0] sm:$0xff] %vm2775, %v2732
        %2803 = vst.msk [vmem:[#allocation2 + $0xd8] sm:$0xff] %vm2775, %v2734
        %2804 = vst.msk [vmem:[#allocation2 + $0xe0] sm:$0xff] %vm2775, %v2736
        %2805 = vst.msk [vmem:[#allocation2 + $0xe8] sm:$0xff] %vm2775, %v2738
        %2806 = vst.msk [vmem:[#allocation2 + $0xf0] sm:$0xff] %vm2775, %v2740
        %2807 = vst.msk [vmem:[#allocation2 + $0xf8] sm:$0xff] %vm2775, %v2742
        %vm2808 = vmand %vm654, %vm718
        %vm2809 = vmand %vm655, %vm719
        %vm2810 = vmand %vm656, %vm720
        %vm2811 = vmand %vm657, %vm721
        %vm2812 = vmand %vm658, %vm722
        %vm2813 = vmand %vm659, %vm723
        %vm2814 = vmand %vm660, %vm724
        %vm2815 = vmand %vm661, %vm725
        %vm2816 = vmand %vm662, %vm726
        %vm2817 = vmand %vm663, %vm727
        %vm2818 = vmand %vm664, %vm728
        %vm2819 = vmand %vm665, %vm729
        %vm2820 = vmand %vm666, %vm730
        %vm2821 = vmand %vm667, %vm731
        %vm2822 = vmand %vm668, %vm732
        %vm2823 = vmand %vm669, %vm733
        %vm2824 = vmand %vm670, %vm734
        %vm2825 = vmand %vm671, %vm735
        %vm2826 = vmand %vm672, %vm736
        %vm2827 = vmand %vm673, %vm737
        %vm2828 = vmand %vm674, %vm738
        %vm2829 = vmand %vm675, %vm739
        %vm2830 = vmand %vm676, %vm740
        %vm2831 = vmand %vm677, %vm741
        %vm2832 = vmand %vm678, %vm742
        %vm2833 = vmand %vm679, %vm743
        %vm2834 = vmand %vm680, %vm744
        %vm2835 = vmand %vm681, %vm745
        %vm2836 = vmand %vm682, %vm746
        %vm2837 = vmand %vm683, %vm747
        %vm2838 = vmand %vm684, %vm748
        %vm2839 = vmand %vm685, %vm749
        %v2840 = vsel %vm2808, 1, 0
        %v2841 = vsel %vm2809, 1, 0
        %v2842 = vsel %vm2810, 1, 0
        %v2843 = vsel %vm2811, 1, 0
        %v2844 = vsel %vm2812, 1, 0
        %v2845 = vsel %vm2813, 1, 0
        %v2846 = vsel %vm2814, 1, 0
        %v2847 = vsel %vm2815, 1, 0
        %v2848 = vsel %vm2816, 1, 0
        %v2849 = vsel %vm2817, 1, 0
        %v2850 = vsel %vm2818, 1, 0
        %v2851 = vsel %vm2819, 1, 0
        %v2852 = vsel %vm2820, 1, 0
        %v2853 = vsel %vm2821, 1, 0
        %v2854 = vsel %vm2822, 1, 0
        %v2855 = vsel %vm2823, 1, 0
        %v2856 = vsel %vm2824, 1, 0
        %v2857 = vsel %vm2825, 1, 0
        %v2858 = vsel %vm2826, 1, 0
        %v2859 = vsel %vm2827, 1, 0
        %v2860 = vsel %vm2828, 1, 0
        %v2861 = vsel %vm2829, 1, 0
        %v2862 = vsel %vm2830, 1, 0
        %v2863 = vsel %vm2831, 1, 0
        %v2864 = vsel %vm2832, 1, 0
        %v2865 = vsel %vm2833, 1, 0
        %v2866 = vsel %vm2834, 1, 0
        %v2867 = vsel %vm2835, 1, 0
        %v2868 = vsel %vm2836, 1, 0
        %v2869 = vsel %vm2837, 1, 0
        %v2870 = vsel %vm2838, 1, 0
        %v2871 = vsel %vm2839, 1, 0
        %vm2872 = vcmp.eq.s32.totalorder %v2840, 1
        %vm2873 = vcmp.eq.s32.totalorder %v2841, 1
        %vm2874 = vcmp.eq.s32.totalorder %v2842, 1
        %vm2875 = vcmp.eq.s32.totalorder %v2843, 1
        %vm2876 = vcmp.eq.s32.totalorder %v2844, 1
        %vm2877 = vcmp.eq.s32.totalorder %v2845, 1
        %vm2878 = vcmp.eq.s32.totalorder %v2846, 1
        %vm2879 = vcmp.eq.s32.totalorder %v2847, 1
        %vm2880 = vcmp.eq.s32.totalorder %v2848, 1
        %vm2881 = vcmp.eq.s32.totalorder %v2849, 1
        %vm2882 = vcmp.eq.s32.totalorder %v2850, 1
        %vm2883 = vcmp.eq.s32.totalorder %v2851, 1
        %vm2884 = vcmp.eq.s32.totalorder %v2852, 1
        %vm2885 = vcmp.eq.s32.totalorder %v2853, 1
        %vm2886 = vcmp.eq.s32.totalorder %v2854, 1
        %vm2887 = vcmp.eq.s32.totalorder %v2855, 1
        %vm2888 = vcmp.eq.s32.totalorder %v2856, 1
        %vm2889 = vcmp.eq.s32.totalorder %v2857, 1
        %vm2890 = vcmp.eq.s32.totalorder %v2858, 1
        %vm2891 = vcmp.eq.s32.totalorder %v2859, 1
        %vm2892 = vcmp.eq.s32.totalorder %v2860, 1
        %vm2893 = vcmp.eq.s32.totalorder %v2861, 1
        %vm2894 = vcmp.eq.s32.totalorder %v2862, 1
        %vm2895 = vcmp.eq.s32.totalorder %v2863, 1
        %vm2896 = vcmp.eq.s32.totalorder %v2864, 1
        %vm2897 = vcmp.eq.s32.totalorder %v2865, 1
        %vm2898 = vcmp.eq.s32.totalorder %v2866, 1
        %vm2899 = vcmp.eq.s32.totalorder %v2867, 1
        %vm2900 = vcmp.eq.s32.totalorder %v2868, 1
        %vm2901 = vcmp.eq.s32.totalorder %v2869, 1
        %vm2902 = vcmp.eq.s32.totalorder %v2870, 1
        %vm2903 = vcmp.eq.s32.totalorder %v2871, 1
        %v2904 = vsel %vm2872, %v1294, 0.0
        %v2905 = vsel %vm2873, %v1293, 0.0
        %v2906 = vsel %vm2874, %v1292, 0.0
        %v2907 = vsel %vm2875, %v1291, 0.0
        %v2908 = vsel %vm2876, %v1290, 0.0
        %v2909 = vsel %vm2877, %v1289, 0.0
        %v2910 = vsel %vm2878, %v1288, 0.0
        %v2911 = vsel %vm2879, %v1287, 0.0
        %v2912 = vsel %vm2880, %v1286, 0.0
        %v2913 = vsel %vm2881, %v1285, 0.0
        %v2914 = vsel %vm2882, %v1284, 0.0
        %v2915 = vsel %vm2883, %v1283, 0.0
        %v2916 = vsel %vm2884, %v1282, 0.0
        %v2917 = vsel %vm2885, %v1281, 0.0
        %v2918 = vsel %vm2886, %v1280, 0.0
        %v2919 = vsel %vm2887, %v1279, 0.0
        %v2920 = vsel %vm2888, %v1278, 0.0
        %v2921 = vsel %vm2889, %v1277, 0.0
        %v2922 = vsel %vm2890, %v1276, 0.0
        %v2923 = vsel %vm2891, %v1275, 0.0
        %v2924 = vsel %vm2892, %v1274, 0.0
        %v2925 = vsel %vm2893, %v1273, 0.0
        %v2926 = vsel %vm2894, %v1272, 0.0
        %v2927 = vsel %vm2895, %v1271, 0.0
        %v2928 = vsel %vm2896, %v1270, 0.0
        %v2929 = vsel %vm2897, %v1269, 0.0
        %v2930 = vsel %vm2898, %v1268, 0.0
        %v2931 = vsel %vm2899, %v1267, 0.0
        %v2932 = vsel %vm2900, %v1266, 0.0
        %v2933 = vsel %vm2901, %v1297, 0.0
        %v2934 = vsel %vm2902, %v1296, 0.0
        %v2935 = vsel %vm2903, %v1295, 0.0
        %2968 = vrot.lane.b32.xlu0 %v2904, 32
        %v2969 = vpop.permute.xlu0 %2968
        %2970 = vrot.lane.b32.xlu0 %v2905, 32
        %v2971 = vpop.permute.xlu0 %2970
        %2972 = vrot.lane.b32.xlu0 %v2906, 32
        %v2973 = vpop.permute.xlu0 %2972
        %2974 = vrot.lane.b32.xlu0 %v2907, 32
        %v2975 = vpop.permute.xlu0 %2974
        %2976 = vrot.lane.b32.xlu0 %v2908, 32
        %v2977 = vpop.permute.xlu0 %2976
        %2978 = vrot.lane.b32.xlu0 %v2909, 32
        %v2979 = vpop.permute.xlu0 %2978
        %2980 = vrot.lane.b32.xlu0 %v2910, 32
        %v2981 = vpop.permute.xlu0 %2980
        %2982 = vrot.lane.b32.xlu0 %v2911, 32
        %v2983 = vpop.permute.xlu0 %2982
        %2984 = vrot.lane.b32.xlu0 %v2912, 32
        %v2985 = vpop.permute.xlu0 %2984
        %2986 = vrot.lane.b32.xlu0 %v2913, 32
        %v2987 = vpop.permute.xlu0 %2986
        %2988 = vrot.lane.b32.xlu0 %v2914, 32
        %v2989 = vpop.permute.xlu0 %2988
        %2990 = vrot.lane.b32.xlu0 %v2915, 32
        %v2991 = vpop.permute.xlu0 %2990
        %2992 = vrot.lane.b32.xlu0 %v2916, 32
        %v2993 = vpop.permute.xlu0 %2992
        %2994 = vrot.lane.b32.xlu0 %v2917, 32
        %v2995 = vpop.permute.xlu0 %2994
        %2996 = vrot.lane.b32.xlu0 %v2918, 32
        %v2997 = vpop.permute.xlu0 %2996
        %2998 = vrot.lane.b32.xlu0 %v2919, 32
        %v2999 = vpop.permute.xlu0 %2998
        %3000 = vrot.lane.b32.xlu0 %v2920, 32
        %v3001 = vpop.permute.xlu0 %3000
        %3002 = vrot.lane.b32.xlu0 %v2921, 32
        %v3003 = vpop.permute.xlu0 %3002
        %3004 = vrot.lane.b32.xlu0 %v2922, 32
        %v3005 = vpop.permute.xlu0 %3004
        %3006 = vrot.lane.b32.xlu0 %v2923, 32
        %v3007 = vpop.permute.xlu0 %3006
        %3008 = vrot.lane.b32.xlu0 %v2924, 32
        %v3009 = vpop.permute.xlu0 %3008
        %3010 = vrot.lane.b32.xlu0 %v2925, 32
        %v3011 = vpop.permute.xlu0 %3010
        %3012 = vrot.lane.b32.xlu0 %v2926, 32
        %v3013 = vpop.permute.xlu0 %3012
        %3014 = vrot.lane.b32.xlu0 %v2927, 32
        %v3015 = vpop.permute.xlu0 %3014
        %3016 = vrot.lane.b32.xlu0 %v2928, 32
        %v3017 = vpop.permute.xlu0 %3016
        %3018 = vrot.lane.b32.xlu0 %v2929, 32
        %v3019 = vpop.permute.xlu0 %3018
        %3020 = vrot.lane.b32.xlu0 %v2930, 32
        %v3021 = vpop.permute.xlu0 %3020
        %3022 = vrot.lane.b32.xlu0 %v2931, 32
        %v3023 = vpop.permute.xlu0 %3022
        %3024 = vrot.lane.b32.xlu0 %v2932, 32
        %v3025 = vpop.permute.xlu0 %3024
        %3026 = vrot.lane.b32.xlu0 %v2933, 32
        %v3027 = vpop.permute.xlu0 %3026
        %3028 = vrot.lane.b32.xlu0 %v2934, 32
        %v3029 = vpop.permute.xlu0 %3028
        %3030 = vrot.lane.b32.xlu0 %v2935, 32
        %v3031 = vpop.permute.xlu0 %3030
        %vm3064 = vcmask 294144
        %3065 = vst.msk [vmem:[#allocation2] sm:$0xff] %vm3064, %v2969
        %3066 = vst.msk [vmem:[#allocation2 + $0x8] sm:$0xff] %vm3064, %v2971
        %3067 = vst.msk [vmem:[#allocation2 + $0x10] sm:$0xff] %vm3064, %v2973
        %3068 = vst.msk [vmem:[#allocation2 + $0x18] sm:$0xff] %vm3064, %v2975
        %3069 = vst.msk [vmem:[#allocation2 + $0x20] sm:$0xff] %vm3064, %v2977
        %3070 = vst.msk [vmem:[#allocation2 + $0x28] sm:$0xff] %vm3064, %v2979
        %3071 = vst.msk [vmem:[#allocation2 + $0x30] sm:$0xff] %vm3064, %v2981
        %3072 = vst.msk [vmem:[#allocation2 + $0x38] sm:$0xff] %vm3064, %v2983
        %3073 = vst.msk [vmem:[#allocation2 + $0x40] sm:$0xff] %vm3064, %v2985
        %3074 = vst.msk [vmem:[#allocation2 + $0x48] sm:$0xff] %vm3064, %v2987
        %3075 = vst.msk [vmem:[#allocation2 + $0x50] sm:$0xff] %vm3064, %v2989
        %3076 = vst.msk [vmem:[#allocation2 + $0x58] sm:$0xff] %vm3064, %v2991
        %3077 = vst.msk [vmem:[#allocation2 + $0x60] sm:$0xff] %vm3064, %v2993
        %3078 = vst.msk [vmem:[#allocation2 + $0x68] sm:$0xff] %vm3064, %v2995
        %3079 = vst.msk [vmem:[#allocation2 + $0x70] sm:$0xff] %vm3064, %v2997
        %3080 = vst.msk [vmem:[#allocation2 + $0x78] sm:$0xff] %vm3064, %v2999
        %3081 = vst.msk [vmem:[#allocation2 + $0x80] sm:$0xff] %vm3064, %v3001
        %3082 = vst.msk [vmem:[#allocation2 + $0x88] sm:$0xff] %vm3064, %v3003
        %3083 = vst.msk [vmem:[#allocation2 + $0x90] sm:$0xff] %vm3064, %v3005
        %3084 = vst.msk [vmem:[#allocation2 + $0x98] sm:$0xff] %vm3064, %v3007
        %3085 = vst.msk [vmem:[#allocation2 + $0xa0] sm:$0xff] %vm3064, %v3009
        %3086 = vst.msk [vmem:[#allocation2 + $0xa8] sm:$0xff] %vm3064, %v3011
        %3087 = vst.msk [vmem:[#allocation2 + $0xb0] sm:$0xff] %vm3064, %v3013
        %3088 = vst.msk [vmem:[#allocation2 + $0xb8] sm:$0xff] %vm3064, %v3015
        %3089 = vst.msk [vmem:[#allocation2 + $0xc0] sm:$0xff] %vm3064, %v3017
        %3090 = vst.msk [vmem:[#allocation2 + $0xc8] sm:$0xff] %vm3064, %v3019
        %3091 = vst.msk [vmem:[#allocation2 + $0xd0] sm:$0xff] %vm3064, %v3021
        %3092 = vst.msk [vmem:[#allocation2 + $0xd8] sm:$0xff] %vm3064, %v3023
        %3093 = vst.msk [vmem:[#allocation2 + $0xe0] sm:$0xff] %vm3064, %v3025
        %3094 = vst.msk [vmem:[#allocation2 + $0xe8] sm:$0xff] %vm3064, %v3027
        %3095 = vst.msk [vmem:[#allocation2 + $0xf0] sm:$0xff] %vm3064, %v3029
        %3096 = vst.msk [vmem:[#allocation2 + $0xf8] sm:$0xff] %vm3064, %v3031
        %v3097 = vld [vmem:[#allocation2] sm:$0xff]
        %v3098 = vld [vmem:[#allocation2 + $0x8] sm:$0xff]
        %v3099 = vld [vmem:[#allocation2 + $0x10] sm:$0xff]
        %v3100 = vld [vmem:[#allocation2 + $0x18] sm:$0xff]
        %v3101 = vld [vmem:[#allocation2 + $0x20] sm:$0xff]
        %v3102 = vld [vmem:[#allocation2 + $0x28] sm:$0xff]
        %v3103 = vld [vmem:[#allocation2 + $0x30] sm:$0xff]
        %v3104 = vld [vmem:[#allocation2 + $0x38] sm:$0xff]
        %v3105 = vld [vmem:[#allocation2 + $0x40] sm:$0xff]
        %v3106 = vld [vmem:[#allocation2 + $0x48] sm:$0xff]
        %v3107 = vld [vmem:[#allocation2 + $0x50] sm:$0xff]
        %v3108 = vld [vmem:[#allocation2 + $0x58] sm:$0xff]
        %v3109 = vld [vmem:[#allocation2 + $0x60] sm:$0xff]
        %v3110 = vld [vmem:[#allocation2 + $0x68] sm:$0xff]
        %v3111 = vld [vmem:[#allocation2 + $0x70] sm:$0xff]
        %v3112 = vld [vmem:[#allocation2 + $0x78] sm:$0xff]
        %v3113 = vld [vmem:[#allocation2 + $0x80] sm:$0xff]
        %v3114 = vld [vmem:[#allocation2 + $0x88] sm:$0xff]
        %v3115 = vld [vmem:[#allocation2 + $0x90] sm:$0xff]
        %v3116 = vld [vmem:[#allocation2 + $0x98] sm:$0xff]
        %v3117 = vld [vmem:[#allocation2 + $0xa0] sm:$0xff]
        %v3118 = vld [vmem:[#allocation2 + $0xa8] sm:$0xff]
        %v3119 = vld [vmem:[#allocation2 + $0xb0] sm:$0xff]
        %v3120 = vld [vmem:[#allocation2 + $0xb8] sm:$0xff]
        %v3121 = vld [vmem:[#allocation2 + $0xc0] sm:$0xff]
        %v3122 = vld [vmem:[#allocation2 + $0xc8] sm:$0xff]
        %v3123 = vld [vmem:[#allocation2 + $0xd0] sm:$0xff]
        %v3124 = vld [vmem:[#allocation2 + $0xd8] sm:$0xff]
        %v3125 = vld [vmem:[#allocation2 + $0xe0] sm:$0xff]
        %v3126 = vld [vmem:[#allocation2 + $0xe8] sm:$0xff]
        %v3127 = vld [vmem:[#allocation2 + $0xf0] sm:$0xff]
        %v3128 = vld [vmem:[#allocation2 + $0xf8] sm:$0xff]
        %v3129 = vpack.c.bf16 %v3098, %v3097
        %v3130 = vpack.c.bf16 %v3100, %v3099
        %v3131 = vpack.c.bf16 %v3102, %v3101
        %v3132 = vpack.c.bf16 %v3104, %v3103
        %v3133 = vpack.c.bf16 %v3106, %v3105
        %v3134 = vpack.c.bf16 %v3108, %v3107
        %v3135 = vpack.c.bf16 %v3110, %v3109
        %v3136 = vpack.c.bf16 %v3112, %v3111
        %v3137 = vpack.c.bf16 %v3114, %v3113
        %v3138 = vpack.c.bf16 %v3116, %v3115
        %v3139 = vpack.c.bf16 %v3118, %v3117
        %v3140 = vpack.c.bf16 %v3120, %v3119
        %v3141 = vpack.c.bf16 %v3122, %v3121
        %v3142 = vpack.c.bf16 %v3124, %v3123
        %v3143 = vpack.c.bf16 %v3126, %v3125
        %v3144 = vpack.c.bf16 %v3128, %v3127
        %v3145 = vld [vmem:[%s1] sm:$0xf]
        %v3146 = vld [vmem:[%s1 + $0x4] sm:$0xf]
        %v3147 = vld [vmem:[%s1 + $0x8] sm:$0xf]
        %v3148 = vld [vmem:[%s1 + $0xc] sm:$0xf]
        %v3149 = vld [vmem:[%s1 + $0x10] sm:$0x3]
        %v3150 = vld [vmem:[%s2] sm:$0x1]
        %v3152 = vlaneseq
        %v3153 = vshrl.u32 %v3152, 7
        %v3154 = vsub.s32 0, %v3153
        %v3155 = vrot.slane %v3150, %v3154
        %v3162 = vunpack.c.l.b16 %v3145
        %v3163 = vunpack.c.l.b16 %v3146
        %v3164 = vunpack.c.l.b16 %v3147
        %v3165 = vunpack.c.l.b16 %v3148
        %v3166 = vunpack.c.l.b16 %v3149
        %v3167 = vpack.c.b16 %v3163, %v3162
        %v3168 = vpack.c.b16 %v3165, %v3164
        %v3169 = vpack.c.b16 %v3166, %v3166
        %vm3172 = vcmask 293888
        %v3174 = vsel %vm3172, %v3129, 0
        %v3177 = vsel %vm3172, %v3130, 0
        %v3180 = vsel %vm3172, %v3131, 0
        %v3183 = vsel %vm3172, %v3132, 0
        %v3186 = vsel %vm3172, %v3133, 0
        %v3189 = vsel %vm3172, %v3134, 0
        %v3192 = vsel %vm3172, %v3135, 0
        %v3195 = vsel %vm3172, %v3136, 0
        %v3198 = vsel %vm3172, %v3137, 0
        %v3201 = vsel %vm3172, %v3138, 0
        %v3204 = vsel %vm3172, %v3139, 0
        %v3207 = vsel %vm3172, %v3140, 0
        %v3210 = vsel %vm3172, %v3141, 0
        %v3213 = vsel %vm3172, %v3142, 0
        %v3216 = vsel %vm3172, %v3143, 0
        %v3219 = vsel %vm3172, %v3144, 0
        %vm3221 = vcmask 1041408
        %v3223 = vsel %vm3221, %v3169, 0
        %3225 = vmatprep.subr.bf16.mxu0 0
        %3226 = vmatpush1.bf16.msra.mxu0 %v3167
        %3227 = vmatprep.subr.bf16.mxu0 0
        %3228 = vmatpush1.bf16.msra.mxu0 %v3168
        %3229 = vmatprep.subr.bf16.mxu0 0
        %3230 = vmatpush1.bf16.msra.mxu0 %v3223
        %3231 = vmatprep.subr.bf16.mxu0 0
        %3232 = vmatpush1.bf16.msra.mxu0 0
        %3233 = vmatprep.subr.bf16.mxu0 0
        %3234 = vmatpush1.bf16.msra.mxu0 0
        %3235 = vmatprep.subr.bf16.mxu0 0
        %3236 = vmatpush1.bf16.msra.mxu0 0
        %3237 = vmatprep.subr.bf16.mxu0 0
        %3238 = vmatpush1.bf16.msra.mxu0 0
        %3239 = vmatprep.subr.bf16.mxu0 0
        %3240 = vmatpush1.bf16.msra.mxu0 0
        %3241 = vmatprep.subr.bf16.mxu0 0
        %3242 = vmatpush1.bf16.msra.mxu0 0
        %3243 = vmatprep.subr.bf16.mxu0 0
        %3244 = vmatpush1.bf16.msra.mxu0 0
        %3245 = vmatprep.subr.bf16.mxu0 0
        %3246 = vmatpush1.bf16.msra.mxu0 0
        %3247 = vmatprep.subr.bf16.mxu0 0
        %3248 = vmatpush1.bf16.msra.mxu0 0
        %3249 = vmatprep.subr.bf16.mxu0 0
        %3250 = vmatpush1.bf16.msra.mxu0 0
        %3251 = vmatprep.subr.bf16.mxu0 0
        %3252 = vmatpush1.bf16.msra.mxu0 0
        %3253 = vmatprep.subr.bf16.mxu0 0
        %3254 = vmatpush1.bf16.msra.mxu0 0
        %3255 = vmatprep.subr.bf16.mxu0 0
        %3256 = vmatpush1.bf16.msra.mxu0 0
        %3257 = vmatprep.mubr.bf16.mxu0 0
        %3258 = vmatmul.mubr.bf16.gmra.mrb[0].mxu0 %v3174
        %v3259 = vpop.f32.mrb[0].mxu0
        %v3260 = vadd.f32 %v3155, %v3259
        %v3261 = vpop.f32.mrb[0].mxu0
        %v3262 = vpop.f32.mrb[0].mxu0
        %v3263 = vadd.f32 %v3155, %v3262
        %v3264 = vpop.f32.mrb[0].mxu0
        %3265 = vmatprep.mubr.bf16.mxu0 0
        %3266 = vmatmul.mubr.bf16.gmra.mrb[0].mxu0 %v3177
        %v3267 = vpop.f32.mrb[0].mxu0
        %v3268 = vadd.f32 %v3155, %v3267
        %v3269 = vpop.f32.mrb[0].mxu0
        %v3270 = vpop.f32.mrb[0].mxu0
        %v3271 = vadd.f32 %v3155, %v3270
        %v3272 = vpop.f32.mrb[0].mxu0
        %3273 = vmatprep.mubr.bf16.mxu0 0
        %3274 = vmatmul.mubr.bf16.gmra.mrb[0].mxu0 %v3180
        %v3275 = vpop.f32.mrb[0].mxu0
        %v3276 = vadd.f32 %v3155, %v3275
        %v3277 = vpop.f32.mrb[0].mxu0
        %v3278 = vpop.f32.mrb[0].mxu0
        %v3279 = vadd.f32 %v3155, %v3278
        %v3280 = vpop.f32.mrb[0].mxu0
        %3281 = vmatprep.mubr.bf16.mxu0 0
        %3282 = vmatmul.mubr.bf16.gmra.mrb[0].mxu0 %v3183
        %v3283 = vpop.f32.mrb[0].mxu0
        %v3284 = vadd.f32 %v3155, %v3283
        %v3285 = vpop.f32.mrb[0].mxu0
        %v3286 = vpop.f32.mrb[0].mxu0
        %v3287 = vadd.f32 %v3155, %v3286
        %v3288 = vpop.f32.mrb[0].mxu0
        %3289 = vmatprep.mubr.bf16.mxu0 0
        %3290 = vmatmul.mubr.bf16.gmra.mrb[0].mxu0 %v3186
        %v3291 = vpop.f32.mrb[0].mxu0
        %v3292 = vadd.f32 %v3155, %v3291
        %v3293 = vpop.f32.mrb[0].mxu0
        %v3294 = vpop.f32.mrb[0].mxu0
        %v3295 = vadd.f32 %v3155, %v3294
        %v3296 = vpop.f32.mrb[0].mxu0
        %3297 = vmatprep.mubr.bf16.mxu0 0
        %3298 = vmatmul.mubr.bf16.gmra.mrb[0].mxu0 %v3189
        %v3299 = vpop.f32.mrb[0].mxu0
        %v3300 = vadd.f32 %v3155, %v3299
        %v3301 = vpop.f32.mrb[0].mxu0
        %v3302 = vpop.f32.mrb[0].mxu0
        %v3303 = vadd.f32 %v3155, %v3302
        %v3304 = vpop.f32.mrb[0].mxu0
        %3305 = vmatprep.mubr.bf16.mxu0 0
        %3306 = vmatmul.mubr.bf16.gmra.mrb[0].mxu0 %v3192
        %v3307 = vpop.f32.mrb[0].mxu0
        %v3308 = vadd.f32 %v3155, %v3307
        %v3309 = vpop.f32.mrb[0].mxu0
        %v3310 = vpop.f32.mrb[0].mxu0
        %v3311 = vadd.f32 %v3155, %v3310
        %v3312 = vpop.f32.mrb[0].mxu0
        %3313 = vmatprep.mubr.bf16.mxu0 0
        %3314 = vmatmul.mubr.bf16.gmra.mrb[0].mxu0 %v3195
        %v3315 = vpop.f32.mrb[0].mxu0
        %v3316 = vadd.f32 %v3155, %v3315
        %v3317 = vpop.f32.mrb[0].mxu0
        %v3318 = vpop.f32.mrb[0].mxu0
        %v3319 = vadd.f32 %v3155, %v3318
        %v3320 = vpop.f32.mrb[0].mxu0
        %3321 = vmatprep.mubr.bf16.mxu0 0
        %3322 = vmatmul.mubr.bf16.gmra.mrb[0].mxu0 %v3198
        %v3323 = vpop.f32.mrb[0].mxu0
        %v3324 = vadd.f32 %v3155, %v3323
        %v3325 = vpop.f32.mrb[0].mxu0
        %v3326 = vpop.f32.mrb[0].mxu0
        %v3327 = vadd.f32 %v3155, %v3326
        %v3328 = vpop.f32.mrb[0].mxu0
        %3329 = vmatprep.mubr.bf16.mxu0 0
        %3330 = vmatmul.mubr.bf16.gmra.mrb[0].mxu0 %v3201
        %v3331 = vpop.f32.mrb[0].mxu0
        %v3332 = vadd.f32 %v3155, %v3331
        %v3333 = vpop.f32.mrb[0].mxu0
        %v3334 = vpop.f32.mrb[0].mxu0
        %v3335 = vadd.f32 %v3155, %v3334
        %v3336 = vpop.f32.mrb[0].mxu0
        %3337 = vmatprep.mubr.bf16.mxu0 0
        %3338 = vmatmul.mubr.bf16.gmra.mrb[0].mxu0 %v3204
        %v3339 = vpop.f32.mrb[0].mxu0
        %v3340 = vadd.f32 %v3155, %v3339
        %v3341 = vpop.f32.mrb[0].mxu0
        %v3342 = vpop.f32.mrb[0].mxu0
        %v3343 = vadd.f32 %v3155, %v3342
        %v3344 = vpop.f32.mrb[0].mxu0
        %3345 = vmatprep.mubr.bf16.mxu0 0
        %3346 = vmatmul.mubr.bf16.gmra.mrb[0].mxu0 %v3207
        %v3347 = vpop.f32.mrb[0].mxu0
        %v3348 = vadd.f32 %v3155, %v3347
        %v3349 = vpop.f32.mrb[0].mxu0
        %v3350 = vpop.f32.mrb[0].mxu0
        %v3351 = vadd.f32 %v3155, %v3350
        %v3352 = vpop.f32.mrb[0].mxu0
        %3353 = vmatprep.mubr.bf16.mxu0 0
        %3354 = vmatmul.mubr.bf16.gmra.mrb[0].mxu0 %v3210
        %v3355 = vpop.f32.mrb[0].mxu0
        %v3356 = vadd.f32 %v3155, %v3355
        %v3357 = vpop.f32.mrb[0].mxu0
        %v3358 = vpop.f32.mrb[0].mxu0
        %v3359 = vadd.f32 %v3155, %v3358
        %v3360 = vpop.f32.mrb[0].mxu0
        %3361 = vmatprep.mubr.bf16.mxu0 0
        %3362 = vmatmul.mubr.bf16.gmra.mrb[0].mxu0 %v3213
        %v3363 = vpop.f32.mrb[0].mxu0
        %v3364 = vadd.f32 %v3155, %v3363
        %v3365 = vpop.f32.mrb[0].mxu0
        %v3366 = vpop.f32.mrb[0].mxu0
        %v3367 = vadd.f32 %v3155, %v3366
        %v3368 = vpop.f32.mrb[0].mxu0
        %3369 = vmatprep.mubr.bf16.mxu0 0
        %3370 = vmatmul.mubr.bf16.gmra.mrb[0].mxu0 %v3216
        %v3371 = vpop.f32.mrb[0].mxu0
        %v3372 = vadd.f32 %v3155, %v3371
        %v3373 = vpop.f32.mrb[0].mxu0
        %v3374 = vpop.f32.mrb[0].mxu0
        %v3375 = vadd.f32 %v3155, %v3374
        %v3376 = vpop.f32.mrb[0].mxu0
        %3377 = vmatprep.mubr.bf16.mxu0 0
        %3378 = vmatmul.mubr.bf16.gmra.mrb[0].mxu0 %v3219
        %v3379 = vpop.f32.mrb[0].mxu0
        %v3380 = vadd.f32 %v3155, %v3379
        %v3381 = vpop.f32.mrb[0].mxu0
        %v3382 = vpop.f32.mrb[0].mxu0
        %v3383 = vadd.f32 %v3155, %v3382
        %v3384 = vpop.f32.mrb[0].mxu0
        %3385 = vdwg.mxu0
        %v3386 = vmax.f32 %v3260, 0.0
        %v3387 = vmax.f32 %v3263, 0.0
        %v3388 = vmax.f32 %v3268, 0.0
        %v3389 = vmax.f32 %v3271, 0.0
        %v3390 = vmax.f32 %v3276, 0.0
        %v3391 = vmax.f32 %v3279, 0.0
        %v3392 = vmax.f32 %v3284, 0.0
        %v3393 = vmax.f32 %v3287, 0.0
        %v3394 = vmax.f32 %v3292, 0.0
        %v3395 = vmax.f32 %v3295, 0.0
        %v3396 = vmax.f32 %v3300, 0.0
        %v3397 = vmax.f32 %v3303, 0.0
        %v3398 = vmax.f32 %v3308, 0.0
        %v3399 = vmax.f32 %v3311, 0.0
        %v3400 = vmax.f32 %v3316, 0.0
        %v3401 = vmax.f32 %v3319, 0.0
        %v3402 = vmax.f32 %v3324, 0.0
        %v3403 = vmax.f32 %v3327, 0.0
        %v3404 = vmax.f32 %v3332, 0.0
        %v3405 = vmax.f32 %v3335, 0.0
        %v3406 = vmax.f32 %v3340, 0.0
        %v3407 = vmax.f32 %v3343, 0.0
        %v3408 = vmax.f32 %v3348, 0.0
        %v3409 = vmax.f32 %v3351, 0.0
        %v3410 = vmax.f32 %v3356, 0.0
        %v3411 = vmax.f32 %v3359, 0.0
        %v3412 = vmax.f32 %v3364, 0.0
        %v3413 = vmax.f32 %v3367, 0.0
        %v3414 = vmax.f32 %v3372, 0.0
        %v3415 = vmax.f32 %v3375, 0.0
        %v3416 = vmax.f32 %v3380, 0.0
        %v3417 = vmax.f32 %v3383, 0.0
        %v3418 = vrot.slane %v3386, 1
        %v3419 = vrot.slane %v3387, 1
        %v3420 = vrot.slane %v3388, 1
        %v3421 = vrot.slane %v3389, 1
        %v3422 = vrot.slane %v3390, 1
        %v3423 = vrot.slane %v3391, 1
        %v3424 = vrot.slane %v3392, 1
        %v3425 = vrot.slane %v3393, 1
        %v3426 = vrot.slane %v3394, 1
        %v3427 = vrot.slane %v3395, 1
        %v3428 = vrot.slane %v3396, 1
        %v3429 = vrot.slane %v3397, 1
        %v3430 = vrot.slane %v3398, 1
        %v3431 = vrot.slane %v3399, 1
        %v3432 = vrot.slane %v3400, 1
        %v3433 = vrot.slane %v3401, 1
        %v3434 = vrot.slane %v3402, 1
        %v3435 = vrot.slane %v3403, 1
        %v3436 = vrot.slane %v3404, 1
        %v3437 = vrot.slane %v3405, 1
        %v3438 = vrot.slane %v3406, 1
        %v3439 = vrot.slane %v3407, 1
        %v3440 = vrot.slane %v3408, 1
        %v3441 = vrot.slane %v3409, 1
        %v3442 = vrot.slane %v3410, 1
        %v3443 = vrot.slane %v3411, 1
        %v3444 = vrot.slane %v3412, 1
        %v3445 = vrot.slane %v3413, 1
        %v3446 = vrot.slane %v3414, 1
        %v3447 = vrot.slane %v3415, 1
        %v3448 = vrot.slane %v3416, 1
        %v3449 = vrot.slane %v3417, 1
        %v3450 = vsel %vm1265, %v3448, %v3449
        %v3451 = vsel %vm1265, %v3447, %v3448
        %v3452 = vsel %vm1265, %v3446, %v3447
        %v3453 = vsel %vm1265, %v3445, %v3446
        %v3454 = vsel %vm1265, %v3444, %v3445
        %v3455 = vsel %vm1265, %v3443, %v3444
        %v3456 = vsel %vm1265, %v3442, %v3443
        %v3457 = vsel %vm1265, %v3441, %v3442
        %v3458 = vsel %vm1265, %v3440, %v3441
        %v3459 = vsel %vm1265, %v3439, %v3440
        %v3460 = vsel %vm1265, %v3438, %v3439
        %v3461 = vsel %vm1265, %v3437, %v3438
        %v3462 = vsel %vm1265, %v3436, %v3437
        %v3463 = vsel %vm1265, %v3435, %v3436
        %v3464 = vsel %vm1265, %v3434, %v3435
        %v3465 = vsel %vm1265, %v3433, %v3434
        %v3466 = vsel %vm1265, %v3432, %v3433
        %v3467 = vsel %vm1265, %v3431, %v3432
        %v3468 = vsel %vm1265, %v3430, %v3431
        %v3469 = vsel %vm1265, %v3429, %v3430
        %v3470 = vsel %vm1265, %v3428, %v3429
        %v3471 = vsel %vm1265, %v3427, %v3428
        %v3472 = vsel %vm1265, %v3426, %v3427
        %v3473 = vsel %vm1265, %v3425, %v3426
        %v3474 = vsel %vm1265, %v3424, %v3425
        %v3475 = vsel %vm1265, %v3423, %v3424
        %v3476 = vsel %vm1265, %v3422, %v3423
        %v3477 = vsel %vm1265, %v3421, %v3422
        %v3478 = vsel %vm1265, %v3420, %v3421
        %v3479 = vsel %vm1265, %v3419, %v3420
        %v3480 = vsel %vm1265, %v3418, %v3419
        %v3481 = vsel %vm1265, %v3449, %v3418
        %v3482 = vmax.f32 %v3386, %v3480
        %v3483 = vmax.f32 %v3387, %v3479
        %v3484 = vmax.f32 %v3388, %v3478
        %v3485 = vmax.f32 %v3389, %v3477
        %v3486 = vmax.f32 %v3390, %v3476
        %v3487 = vmax.f32 %v3391, %v3475
        %v3488 = vmax.f32 %v3392, %v3474
        %v3489 = vmax.f32 %v3393, %v3473
        %v3490 = vmax.f32 %v3394, %v3472
        %v3491 = vmax.f32 %v3395, %v3471
        %v3492 = vmax.f32 %v3396, %v3470
        %v3493 = vmax.f32 %v3397, %v3469
        %v3494 = vmax.f32 %v3398, %v3468
        %v3495 = vmax.f32 %v3399, %v3467
        %v3496 = vmax.f32 %v3400, %v3466
        %v3497 = vmax.f32 %v3401, %v3465
        %v3498 = vmax.f32 %v3402, %v3464
        %v3499 = vmax.f32 %v3403, %v3463
        %v3500 = vmax.f32 %v3404, %v3462
        %v3501 = vmax.f32 %v3405, %v3461
        %v3502 = vmax.f32 %v3406, %v3460
        %v3503 = vmax.f32 %v3407, %v3459
        %v3504 = vmax.f32 %v3408, %v3458
        %v3505 = vmax.f32 %v3409, %v3457
        %v3506 = vmax.f32 %v3410, %v3456
        %v3507 = vmax.f32 %v3411, %v3455
        %v3508 = vmax.f32 %v3412, %v3454
        %v3509 = vmax.f32 %v3413, %v3453
        %v3510 = vmax.f32 %v3414, %v3452
        %v3511 = vmax.f32 %v3415, %v3451
        %v3512 = vmax.f32 %v3416, %v3450
        %v3513 = vmax.f32 %v3417, %v3481
        %v3514 = vmax.f32 %v3482, %v3484
        %v3515 = vmax.f32 %v3483, %v3485
        %v3516 = vmax.f32 %v3484, %v3486
        %v3517 = vmax.f32 %v3485, %v3487
        %v3518 = vmax.f32 %v3486, %v3488
        %v3519 = vmax.f32 %v3487, %v3489
        %v3520 = vmax.f32 %v3488, %v3490
        %v3521 = vmax.f32 %v3489, %v3491
        %v3522 = vmax.f32 %v3490, %v3492
        %v3523 = vmax.f32 %v3491, %v3493
        %v3524 = vmax.f32 %v3492, %v3494
        %v3525 = vmax.f32 %v3493, %v3495
        %v3526 = vmax.f32 %v3494, %v3496
        %v3527 = vmax.f32 %v3495, %v3497
        %v3528 = vmax.f32 %v3496, %v3498
        %v3529 = vmax.f32 %v3497, %v3499
        %v3530 = vmax.f32 %v3498, %v3500
        %v3531 = vmax.f32 %v3499, %v3501
        %v3532 = vmax.f32 %v3500, %v3502
        %v3533 = vmax.f32 %v3501, %v3503
        %v3534 = vmax.f32 %v3502, %v3504
        %v3535 = vmax.f32 %v3503, %v3505
        %v3536 = vmax.f32 %v3504, %v3506
        %v3537 = vmax.f32 %v3505, %v3507
        %v3538 = vmax.f32 %v3506, %v3508
        %v3539 = vmax.f32 %v3507, %v3509
        %v3540 = vmax.f32 %v3508, %v3510
        %v3541 = vmax.f32 %v3509, %v3511
        %v3542 = vmax.f32 %v3510, %v3512
        %v3543 = vmax.f32 %v3511, %v3513
        %v3544 = vmax.f32 %v3512, %v3482
        %v3545 = vmax.f32 %v3513, %v3483
        %vm3546 = vcmask 64512
        %3547 = vst.msk [vmem:[#allocation3] sm:$0xff] %vm3546, %v3514
        %3548 = vst.msk [vmem:[#allocation3 + $0x8] sm:$0xff] %vm3546, %v3515
        %3549 = vst.msk [vmem:[#allocation3 + $0x10] sm:$0xff] %vm3546, %v3516
        %3550 = vst.msk [vmem:[#allocation3 + $0x18] sm:$0xff] %vm3546, %v3517
        %3551 = vst.msk [vmem:[#allocation3 + $0x20] sm:$0xff] %vm3546, %v3518
        %3552 = vst.msk [vmem:[#allocation3 + $0x28] sm:$0xff] %vm3546, %v3519
        %3553 = vst.msk [vmem:[#allocation3 + $0x30] sm:$0xff] %vm3546, %v3520
        %3554 = vst.msk [vmem:[#allocation3 + $0x38] sm:$0xff] %vm3546, %v3521
        %3555 = vst.msk [vmem:[#allocation3 + $0x40] sm:$0xff] %vm3546, %v3522
        %3556 = vst.msk [vmem:[#allocation3 + $0x48] sm:$0xff] %vm3546, %v3523
        %3557 = vst.msk [vmem:[#allocation3 + $0x50] sm:$0xff] %vm3546, %v3524
        %3558 = vst.msk [vmem:[#allocation3 + $0x58] sm:$0xff] %vm3546, %v3525
        %3559 = vst.msk [vmem:[#allocation3 + $0x60] sm:$0xff] %vm3546, %v3526
        %3560 = vst.msk [vmem:[#allocation3 + $0x68] sm:$0xff] %vm3546, %v3527
        %3561 = vst.msk [vmem:[#allocation3 + $0x70] sm:$0xff] %vm3546, %v3528
        %3562 = vst.msk [vmem:[#allocation3 + $0x78] sm:$0xff] %vm3546, %v3529
        %3563 = vst.msk [vmem:[#allocation3 + $0x80] sm:$0xff] %vm3546, %v3530
        %3564 = vst.msk [vmem:[#allocation3 + $0x88] sm:$0xff] %vm3546, %v3531
        %3565 = vst.msk [vmem:[#allocation3 + $0x90] sm:$0xff] %vm3546, %v3532
        %3566 = vst.msk [vmem:[#allocation3 + $0x98] sm:$0xff] %vm3546, %v3533
        %3567 = vst.msk [vmem:[#allocation3 + $0xa0] sm:$0xff] %vm3546, %v3534
        %3568 = vst.msk [vmem:[#allocation3 + $0xa8] sm:$0xff] %vm3546, %v3535
        %3569 = vst.msk [vmem:[#allocation3 + $0xb0] sm:$0xff] %vm3546, %v3536
        %3570 = vst.msk [vmem:[#allocation3 + $0xb8] sm:$0xff] %vm3546, %v3537
        %3571 = vst.msk [vmem:[#allocation3 + $0xc0] sm:$0xff] %vm3546, %v3538
        %3572 = vst.msk [vmem:[#allocation3 + $0xc8] sm:$0xff] %vm3546, %v3539
        %3573 = vst.msk [vmem:[#allocation3 + $0xd0] sm:$0xff] %vm3546, %v3540
        %3574 = vst.msk [vmem:[#allocation3 + $0xd8] sm:$0xff] %vm3546, %v3541
        %3575 = vst.msk [vmem:[#allocation3 + $0xe0] sm:$0xff] %vm3546, %v3542
        %3576 = vst.msk [vmem:[#allocation3 + $0xe8] sm:$0xff] %vm3546, %v3543
        %3577 = vst.msk [vmem:[#allocation3 + $0xf0] sm:$0xff] %vm3546, %v3544
        %3578 = vst.msk [vmem:[#allocation3 + $0xf8] sm:$0xff] %vm3546, %v3545
        %v3579 = vld [vmem:[#allocation3] ss:$2 sm:$0xff]
        %3580 = vst.msk [vmem:[#allocation4] sm:$0xff] %vm3546, %v3579
        %s3581 = scalar_lea.vmem [#allocation3], 32
        %v3582 = vld [vmem:[%s3581] ss:$2 sm:$0xff]
        %3583 = vst.msk [vmem:[#allocation4 + $0x8] sm:$0xff] %vm3546, %v3582
        %s3584 = scalar_lea.vmem [#allocation3], 64
        %v3585 = vld [vmem:[%s3584] ss:$2 sm:$0xff]
        %3586 = vst.msk [vmem:[#allocation4 + $0x10] sm:$0xff] %vm3546, %v3585
        %s3587 = scalar_lea.vmem [#allocation3], 96
        %v3588 = vld [vmem:[%s3587] ss:$2 sm:$0xff]
        %3589 = vst.msk [vmem:[#allocation4 + $0x18] sm:$0xff] %vm3546, %v3588
        %s3590 = scalar_lea.vmem [#allocation3], 128
        %v3591 = vld [vmem:[%s3590] ss:$2 sm:$0xff]
        %3592 = vst.msk [vmem:[#allocation4 + $0x20] sm:$0xff] %vm3546, %v3591
        %s3593 = scalar_lea.vmem [#allocation3], 160
        %v3594 = vld [vmem:[%s3593] ss:$2 sm:$0xff]
        %3595 = vst.msk [vmem:[#allocation4 + $0x28] sm:$0xff] %vm3546, %v3594
        %s3596 = scalar_lea.vmem [#allocation3], 192
        %v3597 = vld [vmem:[%s3596] ss:$2 sm:$0xff]
        %3598 = vst.msk [vmem:[#allocation4 + $0x30] sm:$0xff] %vm3546, %v3597
        %s3599 = scalar_lea.vmem [#allocation3], 224
        %v3600 = vld [vmem:[%s3599] ss:$2 sm:$0xff]
        %3601 = vst.msk [vmem:[#allocation4 + $0x38] sm:$0xff] %vm3546, %v3600
        %v3602 = vld [vmem:[#allocation4] sm:$0xff]
        %v3603 = vld [vmem:[#allocation4 + $0x8] sm:$0xff]
        %v3604 = vld [vmem:[#allocation4 + $0x10] sm:$0xff]
        %v3605 = vld [vmem:[#allocation4 + $0x18] sm:$0xff]
        %v3606 = vld [vmem:[#allocation4 + $0x20] sm:$0xff]
        %v3607 = vld [vmem:[#allocation4 + $0x28] sm:$0xff]
        %v3608 = vld [vmem:[#allocation4 + $0x30] sm:$0xff]
        %v3609 = vld [vmem:[#allocation4 + $0x38] sm:$0xff]
        %v3610 = vshra.s32 %v526, 3
        %v3611 = vshra.s32 %v527, 3
        %v3612 = vshra.s32 %v528, 3
        %v3613 = vshra.s32 %v529, 3
        %v3614 = vshra.s32 %v530, 3
        %v3615 = vshra.s32 %v531, 3
        %v3616 = vshra.s32 %v532, 3
        %v3617 = vshra.s32 %v533, 3
        %v3618 = vand.u32 %v526, 7
        %v3619 = vand.u32 %v527, 7
        %v3620 = vand.u32 %v528, 7
        %v3621 = vand.u32 %v529, 7
        %v3622 = vand.u32 %v530, 7
        %v3623 = vand.u32 %v531, 7
        %v3624 = vand.u32 %v532, 7
        %v3625 = vand.u32 %v533, 7
        %vm3626 = vcmp.ge.s32.totalorder %v3610, 1
        %vm3627 = vcmp.ge.s32.totalorder %v3611, 1
        %vm3628 = vcmp.ge.s32.totalorder %v3612, 1
        %vm3629 = vcmp.ge.s32.totalorder %v3613, 1
        %vm3630 = vcmp.ge.s32.totalorder %v3614, 1
        %vm3631 = vcmp.ge.s32.totalorder %v3615, 1
        %vm3632 = vcmp.ge.s32.totalorder %v3616, 1
        %vm3633 = vcmp.ge.s32.totalorder %v3617, 1
        %vm3634 = vcmp.lt.s32.totalorder %v3610, 7
        %vm3635 = vcmp.lt.s32.totalorder %v3611, 7
        %vm3636 = vcmp.lt.s32.totalorder %v3612, 7
        %vm3637 = vcmp.lt.s32.totalorder %v3613, 7
        %vm3638 = vcmp.lt.s32.totalorder %v3614, 7
        %vm3639 = vcmp.lt.s32.totalorder %v3615, 7
        %vm3640 = vcmp.lt.s32.totalorder %v3616, 7
        %vm3641 = vcmp.lt.s32.totalorder %v3617, 7
        %vm3642 = vcmp.ge.s32.totalorder %v3618, 1
        %vm3643 = vcmp.ge.s32.totalorder %v3619, 1
        %vm3644 = vcmp.ge.s32.totalorder %v3620, 1
        %vm3645 = vcmp.ge.s32.totalorder %v3621, 1
        %vm3646 = vcmp.ge.s32.totalorder %v3622, 1
        %vm3647 = vcmp.ge.s32.totalorder %v3623, 1
        %vm3648 = vcmp.ge.s32.totalorder %v3624, 1
        %vm3649 = vcmp.ge.s32.totalorder %v3625, 1
        %vm3650 = vcmp.lt.s32.totalorder %v3618, 7
        %vm3651 = vcmp.lt.s32.totalorder %v3619, 7
        %vm3652 = vcmp.lt.s32.totalorder %v3620, 7
        %vm3653 = vcmp.lt.s32.totalorder %v3621, 7
        %vm3654 = vcmp.lt.s32.totalorder %v3622, 7
        %vm3655 = vcmp.lt.s32.totalorder %v3623, 7
        %vm3656 = vcmp.lt.s32.totalorder %v3624, 7
        %vm3657 = vcmp.lt.s32.totalorder %v3625, 7
        %v3658 = vrot.slane %v3602, 7
        %v3659 = vrot.slane %v3603, 7
        %v3660 = vrot.slane %v3604, 7
        %v3661 = vrot.slane %v3605, 7
        %v3662 = vrot.slane %v3606, 7
        %v3663 = vrot.slane %v3607, 7
        %v3664 = vrot.slane %v3608, 7
        %v3665 = vrot.slane %v3609, 7
        %v3666 = vsel %vm782, %v3664, %v3665
        %v3667 = vsel %vm782, %v3663, %v3664
        %v3668 = vsel %vm782, %v3662, %v3663
        %v3669 = vsel %vm782, %v3661, %v3662
        %v3670 = vsel %vm782, %v3660, %v3661
        %v3671 = vsel %vm782, %v3659, %v3660
        %v3672 = vsel %vm782, %v3658, %v3659
        %v3673 = vsel %vm782, %v3665, %v3658
        %vm3674 = vmand %vm3626, %vm3642
        %vm3675 = vmand %vm3627, %vm3643
        %vm3676 = vmand %vm3628, %vm3644
        %vm3677 = vmand %vm3629, %vm3645
        %vm3678 = vmand %vm3630, %vm3646
        %vm3679 = vmand %vm3631, %vm3647
        %vm3680 = vmand %vm3632, %vm3648
        %vm3681 = vmand %vm3633, %vm3649
        %v3682 = vsel %vm3674, 1, 0
        %v3683 = vsel %vm3675, 1, 0
        %v3684 = vsel %vm3676, 1, 0
        %v3685 = vsel %vm3677, 1, 0
        %v3686 = vsel %vm3678, 1, 0
        %v3687 = vsel %vm3679, 1, 0
        %v3688 = vsel %vm3680, 1, 0
        %v3689 = vsel %vm3681, 1, 0
        %vm3690 = vcmp.eq.s32.totalorder %v3682, 1
        %vm3691 = vcmp.eq.s32.totalorder %v3683, 1
        %vm3692 = vcmp.eq.s32.totalorder %v3684, 1
        %vm3693 = vcmp.eq.s32.totalorder %v3685, 1
        %vm3694 = vcmp.eq.s32.totalorder %v3686, 1
        %vm3695 = vcmp.eq.s32.totalorder %v3687, 1
        %vm3696 = vcmp.eq.s32.totalorder %v3688, 1
        %vm3697 = vcmp.eq.s32.totalorder %v3689, 1
        %v3698 = vsel %vm3690, %v3666, 0.0
        %v3699 = vsel %vm3691, %v3673, 0.0
        %v3700 = vsel %vm3692, %v3672, 0.0
        %v3701 = vsel %vm3693, %v3671, 0.0
        %v3702 = vsel %vm3694, %v3670, 0.0
        %v3703 = vsel %vm3695, %v3669, 0.0
        %v3704 = vsel %vm3696, %v3668, 0.0
        %v3705 = vsel %vm3697, %v3667, 0.0
        %3706 = vst.msk [vmem:[#allocation5] sm:$0xff] %vm3546, %v3698
        %3707 = vst.msk [vmem:[#allocation5 + $0x8] sm:$0xff] %vm3546, %v3699
        %3708 = vst.msk [vmem:[#allocation5 + $0x10] sm:$0xff] %vm3546, %v3700
        %3709 = vst.msk [vmem:[#allocation5 + $0x18] sm:$0xff] %vm3546, %v3701
        %3710 = vst.msk [vmem:[#allocation5 + $0x20] sm:$0xff] %vm3546, %v3702
        %3711 = vst.msk [vmem:[#allocation5 + $0x28] sm:$0xff] %vm3546, %v3703
        %3712 = vst.msk [vmem:[#allocation5 + $0x30] sm:$0xff] %vm3546, %v3704
        %3713 = vst.msk [vmem:[#allocation5 + $0x38] sm:$0xff] %vm3546, %v3705
        %v3714 = vsel %vm3626, 1, 0
        %v3715 = vsel %vm3627, 1, 0
        %v3716 = vsel %vm3628, 1, 0
        %v3717 = vsel %vm3629, 1, 0
        %v3718 = vsel %vm3630, 1, 0
        %v3719 = vsel %vm3631, 1, 0
        %v3720 = vsel %vm3632, 1, 0
        %v3721 = vsel %vm3633, 1, 0
        %vm3722 = vcmp.eq.s32.totalorder %v3714, 1
        %vm3723 = vcmp.eq.s32.totalorder %v3715, 1
        %vm3724 = vcmp.eq.s32.totalorder %v3716, 1
        %vm3725 = vcmp.eq.s32.totalorder %v3717, 1
        %vm3726 = vcmp.eq.s32.totalorder %v3718, 1
        %vm3727 = vcmp.eq.s32.totalorder %v3719, 1
        %vm3728 = vcmp.eq.s32.totalorder %v3720, 1
        %vm3729 = vcmp.eq.s32.totalorder %v3721, 1
        %v3730 = vsel %vm3722, %v3609, 0.0
        %v3731 = vsel %vm3723, %v3602, 0.0
        %v3732 = vsel %vm3724, %v3603, 0.0
        %v3733 = vsel %vm3725, %v3604, 0.0
        %v3734 = vsel %vm3726, %v3605, 0.0
        %v3735 = vsel %vm3727, %v3606, 0.0
        %v3736 = vsel %vm3728, %v3607, 0.0
        %v3737 = vsel %vm3729, %v3608, 0.0
        %3746 = vrot.lane.b32.xlu0 %v3730, 8
        %v3747 = vpop.permute.xlu0 %3746
        %3748 = vrot.lane.b32.xlu0 %v3731, 8
        %v3749 = vpop.permute.xlu0 %3748
        %3750 = vrot.lane.b32.xlu0 %v3732, 8
        %v3751 = vpop.permute.xlu0 %3750
        %3752 = vrot.lane.b32.xlu0 %v3733, 8
        %v3753 = vpop.permute.xlu0 %3752
        %3754 = vrot.lane.b32.xlu0 %v3734, 8
        %v3755 = vpop.permute.xlu0 %3754
        %3756 = vrot.lane.b32.xlu0 %v3735, 8
        %v3757 = vpop.permute.xlu0 %3756
        %3758 = vrot.lane.b32.xlu0 %v3736, 8
        %v3759 = vpop.permute.xlu0 %3758
        %3760 = vrot.lane.b32.xlu0 %v3737, 8
        %v3761 = vpop.permute.xlu0 %3760
        %vm3770 = vcmask 130112
        %3771 = vst.msk [vmem:[#allocation5] sm:$0xff] %vm3770, %v3747
        %3772 = vst.msk [vmem:[#allocation5 + $0x8] sm:$0xff] %vm3770, %v3749
        %3773 = vst.msk [vmem:[#allocation5 + $0x10] sm:$0xff] %vm3770, %v3751
        %3774 = vst.msk [vmem:[#allocation5 + $0x18] sm:$0xff] %vm3770, %v3753
        %3775 = vst.msk [vmem:[#allocation5 + $0x20] sm:$0xff] %vm3770, %v3755
        %3776 = vst.msk [vmem:[#allocation5 + $0x28] sm:$0xff] %vm3770, %v3757
        %3777 = vst.msk [vmem:[#allocation5 + $0x30] sm:$0xff] %vm3770, %v3759
        %3778 = vst.msk [vmem:[#allocation5 + $0x38] sm:$0xff] %vm3770, %v3761
        %v3779 = vrot.slane %v3602, 1
        %v3780 = vrot.slane %v3603, 1
        %v3781 = vrot.slane %v3604, 1
        %v3782 = vrot.slane %v3605, 1
        %v3783 = vrot.slane %v3606, 1
        %v3784 = vrot.slane %v3607, 1
        %v3785 = vrot.slane %v3608, 1
        %v3786 = vrot.slane %v3609, 1
        %v3787 = vsel %vm1265, %v3785, %v3786
        %v3788 = vsel %vm1265, %v3784, %v3785
        %v3789 = vsel %vm1265, %v3783, %v3784
        %v3790 = vsel %vm1265, %v3782, %v3783
        %v3791 = vsel %vm1265, %v3781, %v3782
        %v3792 = vsel %vm1265, %v3780, %v3781
        %v3793 = vsel %vm1265, %v3779, %v3780
        %v3794 = vsel %vm1265, %v3786, %v3779
        %vm3795 = vmand %vm3626, %vm3650
        %vm3796 = vmand %vm3627, %vm3651
        %vm3797 = vmand %vm3628, %vm3652
        %vm3798 = vmand %vm3629, %vm3653
        %vm3799 = vmand %vm3630, %vm3654
        %vm3800 = vmand %vm3631, %vm3655
        %vm3801 = vmand %vm3632, %vm3656
        %vm3802 = vmand %vm3633, %vm3657
        %v3803 = vsel %vm3795, 1, 0
        %v3804 = vsel %vm3796, 1, 0
        %v3805 = vsel %vm3797, 1, 0
        %v3806 = vsel %vm3798, 1, 0
        %v3807 = vsel %vm3799, 1, 0
        %v3808 = vsel %vm3800, 1, 0
        %v3809 = vsel %vm3801, 1, 0
        %v3810 = vsel %vm3802, 1, 0
        %vm3811 = vcmp.eq.s32.totalorder %v3803, 1
        %vm3812 = vcmp.eq.s32.totalorder %v3804, 1
        %vm3813 = vcmp.eq.s32.totalorder %v3805, 1
        %vm3814 = vcmp.eq.s32.totalorder %v3806, 1
        %vm3815 = vcmp.eq.s32.totalorder %v3807, 1
        %vm3816 = vcmp.eq.s32.totalorder %v3808, 1
        %vm3817 = vcmp.eq.s32.totalorder %v3809, 1
        %vm3818 = vcmp.eq.s32.totalorder %v3810, 1
        %v3819 = vsel %vm3811, %v3794, 0.0
        %v3820 = vsel %vm3812, %v3793, 0.0
        %v3821 = vsel %vm3813, %v3792, 0.0
        %v3822 = vsel %vm3814, %v3791, 0.0
        %v3823 = vsel %vm3815, %v3790, 0.0
        %v3824 = vsel %vm3816, %v3789, 0.0
        %v3825 = vsel %vm3817, %v3788, 0.0
        %v3826 = vsel %vm3818, %v3787, 0.0
        %3835 = vrot.lane.b32.xlu0 %v3819, 16
        %v3836 = vpop.permute.xlu0 %3835
        %3837 = vrot.lane.b32.xlu0 %v3820, 16
        %v3838 = vpop.permute.xlu0 %3837
        %3839 = vrot.lane.b32.xlu0 %v3821, 16
        %v3840 = vpop.permute.xlu0 %3839
        %3841 = vrot.lane.b32.xlu0 %v3822, 16
        %v3842 = vpop.permute.xlu0 %3841
        %3843 = vrot.lane.b32.xlu0 %v3823, 16
        %v3844 = vpop.permute.xlu0 %3843
        %3845 = vrot.lane.b32.xlu0 %v3824, 16
        %v3846 = vpop.permute.xlu0 %3845
        %3847 = vrot.lane.b32.xlu0 %v3825, 16
        %v3848 = vpop.permute.xlu0 %3847
        %3849 = vrot.lane.b32.xlu0 %v3826, 16
        %v3850 = vpop.permute.xlu0 %3849
        %vm3859 = vcmask 195712
        %3860 = vst.msk [vmem:[#allocation5] sm:$0xff] %vm3859, %v3836
        %3861 = vst.msk [vmem:[#allocation5 + $0x8] sm:$0xff] %vm3859, %v3838
        %3862 = vst.msk [vmem:[#allocation5 + $0x10] sm:$0xff] %vm3859, %v3840
        %3863 = vst.msk [vmem:[#allocation5 + $0x18] sm:$0xff] %vm3859, %v3842
        %3864 = vst.msk [vmem:[#allocation5 + $0x20] sm:$0xff] %vm3859, %v3844
        %3865 = vst.msk [vmem:[#allocation5 + $0x28] sm:$0xff] %vm3859, %v3846
        %3866 = vst.msk [vmem:[#allocation5 + $0x30] sm:$0xff] %vm3859, %v3848
        %3867 = vst.msk [vmem:[#allocation5 + $0x38] sm:$0xff] %vm3859, %v3850
        %v3868 = vsel %vm3642, 1, 0
        %v3869 = vsel %vm3643, 1, 0
        %v3870 = vsel %vm3644, 1, 0
        %v3871 = vsel %vm3645, 1, 0
        %v3872 = vsel %vm3646, 1, 0
        %v3873 = vsel %vm3647, 1, 0
        %v3874 = vsel %vm3648, 1, 0
        %v3875 = vsel %vm3649, 1, 0
        %vm3876 = vcmp.eq.s32.totalorder %v3868, 1
        %vm3877 = vcmp.eq.s32.totalorder %v3869, 1
        %vm3878 = vcmp.eq.s32.totalorder %v3870, 1
        %vm3879 = vcmp.eq.s32.totalorder %v3871, 1
        %vm3880 = vcmp.eq.s32.totalorder %v3872, 1
        %vm3881 = vcmp.eq.s32.totalorder %v3873, 1
        %vm3882 = vcmp.eq.s32.totalorder %v3874, 1
        %vm3883 = vcmp.eq.s32.totalorder %v3875, 1
        %v3884 = vsel %vm3876, %v3673, 0.0
        %v3885 = vsel %vm3877, %v3672, 0.0
        %v3886 = vsel %vm3878, %v3671, 0.0
        %v3887 = vsel %vm3879, %v3670, 0.0
        %v3888 = vsel %vm3880, %v3669, 0.0
        %v3889 = vsel %vm3881, %v3668, 0.0
        %v3890 = vsel %vm3882, %v3667, 0.0
        %v3891 = vsel %vm3883, %v3666, 0.0
        %3900 = vrot.lane.b32.xlu0 %v3884, 24
        %v3901 = vpop.permute.xlu0 %3900
        %3902 = vrot.lane.b32.xlu0 %v3885, 24
        %v3903 = vpop.permute.xlu0 %3902
        %3904 = vrot.lane.b32.xlu0 %v3886, 24
        %v3905 = vpop.permute.xlu0 %3904
        %3906 = vrot.lane.b32.xlu0 %v3887, 24
        %v3907 = vpop.permute.xlu0 %3906
        %3908 = vrot.lane.b32.xlu0 %v3888, 24
        %v3909 = vpop.permute.xlu0 %3908
        %3910 = vrot.lane.b32.xlu0 %v3889, 24
        %v3911 = vpop.permute.xlu0 %3910
        %3912 = vrot.lane.b32.xlu0 %v3890, 24
        %v3913 = vpop.permute.xlu0 %3912
        %3914 = vrot.lane.b32.xlu0 %v3891, 24
        %v3915 = vpop.permute.xlu0 %3914
        %vm3924 = vcmask 261312
        %3925 = vst.msk [vmem:[#allocation5] sm:$0xff] %vm3924, %v3901
        %3926 = vst.msk [vmem:[#allocation5 + $0x8] sm:$0xff] %vm3924, %v3903
        %3927 = vst.msk [vmem:[#allocation5 + $0x10] sm:$0xff] %vm3924, %v3905
        %3928 = vst.msk [vmem:[#allocation5 + $0x18] sm:$0xff] %vm3924, %v3907
        %3929 = vst.msk [vmem:[#allocation5 + $0x20] sm:$0xff] %vm3924, %v3909
        %3930 = vst.msk [vmem:[#allocation5 + $0x28] sm:$0xff] %vm3924, %v3911
        %3931 = vst.msk [vmem:[#allocation5 + $0x30] sm:$0xff] %vm3924, %v3913
        %3932 = vst.msk [vmem:[#allocation5 + $0x38] sm:$0xff] %vm3924, %v3915
        %3941 = vrot.lane.b32.xlu0 %v3602, 32
        %v3942 = vpop.permute.xlu0 %3941
        %3943 = vrot.lane.b32.xlu0 %v3603, 32
        %v3944 = vpop.permute.xlu0 %3943
        %3945 = vrot.lane.b32.xlu0 %v3604, 32
        %v3946 = vpop.permute.xlu0 %3945
        %3947 = vrot.lane.b32.xlu0 %v3605, 32
        %v3948 = vpop.permute.xlu0 %3947
        %3949 = vrot.lane.b32.xlu0 %v3606, 32
        %v3950 = vpop.permute.xlu0 %3949
        %3951 = vrot.lane.b32.xlu0 %v3607, 32
        %v3952 = vpop.permute.xlu0 %3951
        %3953 = vrot.lane.b32.xlu0 %v3608, 32
        %v3954 = vpop.permute.xlu0 %3953
        %3955 = vrot.lane.b32.xlu0 %v3609, 32
        %v3956 = vpop.permute.xlu0 %3955
        %vm3965 = vcmask 326912
        %3966 = vst.msk [vmem:[#allocation5] sm:$0xff] %vm3965, %v3942
        %3967 = vst.msk [vmem:[#allocation5 + $0x8] sm:$0xff] %vm3965, %v3944
        %3968 = vst.msk [vmem:[#allocation5 + $0x10] sm:$0xff] %vm3965, %v3946
        %3969 = vst.msk [vmem:[#allocation5 + $0x18] sm:$0xff] %vm3965, %v3948
        %3970 = vst.msk [vmem:[#allocation5 + $0x20] sm:$0xff] %vm3965, %v3950
        %3971 = vst.msk [vmem:[#allocation5 + $0x28] sm:$0xff] %vm3965, %v3952
        %3972 = vst.msk [vmem:[#allocation5 + $0x30] sm:$0xff] %vm3965, %v3954
        %3973 = vst.msk [vmem:[#allocation5 + $0x38] sm:$0xff] %vm3965, %v3956
        %v3974 = vsel %vm3650, 1, 0
        %v3975 = vsel %vm3651, 1, 0
        %v3976 = vsel %vm3652, 1, 0
        %v3977 = vsel %vm3653, 1, 0
        %v3978 = vsel %vm3654, 1, 0
        %v3979 = vsel %vm3655, 1, 0
        %v3980 = vsel %vm3656, 1, 0
        %v3981 = vsel %vm3657, 1, 0
        %vm3982 = vcmp.eq.s32.totalorder %v3974, 1
        %vm3983 = vcmp.eq.s32.totalorder %v3975, 1
        %vm3984 = vcmp.eq.s32.totalorder %v3976, 1
        %vm3985 = vcmp.eq.s32.totalorder %v3977, 1
        %vm3986 = vcmp.eq.s32.totalorder %v3978, 1
        %vm3987 = vcmp.eq.s32.totalorder %v3979, 1
        %vm3988 = vcmp.eq.s32.totalorder %v3980, 1
        %vm3989 = vcmp.eq.s32.totalorder %v3981, 1
        %v3990 = vsel %vm3982, %v3793, 0.0
        %v3991 = vsel %vm3983, %v3792, 0.0
        %v3992 = vsel %vm3984, %v3791, 0.0
        %v3993 = vsel %vm3985, %v3790, 0.0
        %v3994 = vsel %vm3986, %v3789, 0.0
        %v3995 = vsel %vm3987, %v3788, 0.0
        %v3996 = vsel %vm3988, %v3787, 0.0
        %v3997 = vsel %vm3989, %v3794, 0.0
        %4006 = vrot.lane.b32.xlu0 %v3990, 40
        %v4007 = vpop.permute.xlu0 %4006
        %4008 = vrot.lane.b32.xlu0 %v3991, 40
        %v4009 = vpop.permute.xlu0 %4008
        %4010 = vrot.lane.b32.xlu0 %v3992, 40
        %v4011 = vpop.permute.xlu0 %4010
        %4012 = vrot.lane.b32.xlu0 %v3993, 40
        %v4013 = vpop.permute.xlu0 %4012
        %4014 = vrot.lane.b32.xlu0 %v3994, 40
        %v4015 = vpop.permute.xlu0 %4014
        %4016 = vrot.lane.b32.xlu0 %v3995, 40
        %v4017 = vpop.permute.xlu0 %4016
        %4018 = vrot.lane.b32.xlu0 %v3996, 40
        %v4019 = vpop.permute.xlu0 %4018
        %4020 = vrot.lane.b32.xlu0 %v3997, 40
        %v4021 = vpop.permute.xlu0 %4020
        %vm4030 = vcmask 392512
        %4031 = vst.msk [vmem:[#allocation5] sm:$0xff] %vm4030, %v4007
        %4032 = vst.msk [vmem:[#allocation5 + $0x8] sm:$0xff] %vm4030, %v4009
        %4033 = vst.msk [vmem:[#allocation5 + $0x10] sm:$0xff] %vm4030, %v4011
        %4034 = vst.msk [vmem:[#allocation5 + $0x18] sm:$0xff] %vm4030, %v4013
        %4035 = vst.msk [vmem:[#allocation5 + $0x20] sm:$0xff] %vm4030, %v4015
        %4036 = vst.msk [vmem:[#allocation5 + $0x28] sm:$0xff] %vm4030, %v4017
        %4037 = vst.msk [vmem:[#allocation5 + $0x30] sm:$0xff] %vm4030, %v4019
        %4038 = vst.msk [vmem:[#allocation5 + $0x38] sm:$0xff] %vm4030, %v4021
        %vm4039 = vmand %vm3634, %vm3642
        %vm4040 = vmand %vm3635, %vm3643
        %vm4041 = vmand %vm3636, %vm3644
        %vm4042 = vmand %vm3637, %vm3645
        %vm4043 = vmand %vm3638, %vm3646
        %vm4044 = vmand %vm3639, %vm3647
        %vm4045 = vmand %vm3640, %vm3648
        %vm4046 = vmand %vm3641, %vm3649
        %v4047 = vsel %vm4039, 1, 0
        %v4048 = vsel %vm4040, 1, 0
        %v4049 = vsel %vm4041, 1, 0
        %v4050 = vsel %vm4042, 1, 0
        %v4051 = vsel %vm4043, 1, 0
        %v4052 = vsel %vm4044, 1, 0
        %v4053 = vsel %vm4045, 1, 0
        %v4054 = vsel %vm4046, 1, 0
        %vm4055 = vcmp.eq.s32.totalorder %v4047, 1
        %vm4056 = vcmp.eq.s32.totalorder %v4048, 1
        %vm4057 = vcmp.eq.s32.totalorder %v4049, 1
        %vm4058 = vcmp.eq.s32.totalorder %v4050, 1
        %vm4059 = vcmp.eq.s32.totalorder %v4051, 1
        %vm4060 = vcmp.eq.s32.totalorder %v4052, 1
        %vm4061 = vcmp.eq.s32.totalorder %v4053, 1
        %vm4062 = vcmp.eq.s32.totalorder %v4054, 1
        %v4063 = vsel %vm4055, %v3672, 0.0
        %v4064 = vsel %vm4056, %v3671, 0.0
        %v4065 = vsel %vm4057, %v3670, 0.0
        %v4066 = vsel %vm4058, %v3669, 0.0
        %v4067 = vsel %vm4059, %v3668, 0.0
        %v4068 = vsel %vm4060, %v3667, 0.0
        %v4069 = vsel %vm4061, %v3666, 0.0
        %v4070 = vsel %vm4062, %v3673, 0.0
        %4079 = vrot.lane.b32.xlu0 %v4063, 48
        %v4080 = vpop.permute.xlu0 %4079
        %4081 = vrot.lane.b32.xlu0 %v4064, 48
        %v4082 = vpop.permute.xlu0 %4081
        %4083 = vrot.lane.b32.xlu0 %v4065, 48
        %v4084 = vpop.permute.xlu0 %4083
        %4085 = vrot.lane.b32.xlu0 %v4066, 48
        %v4086 = vpop.permute.xlu0 %4085
        %4087 = vrot.lane.b32.xlu0 %v4067, 48
        %v4088 = vpop.permute.xlu0 %4087
        %4089 = vrot.lane.b32.xlu0 %v4068, 48
        %v4090 = vpop.permute.xlu0 %4089
        %4091 = vrot.lane.b32.xlu0 %v4069, 48
        %v4092 = vpop.permute.xlu0 %4091
        %4093 = vrot.lane.b32.xlu0 %v4070, 48
        %v4094 = vpop.permute.xlu0 %4093
        %vm4103 = vcmask 458112
        %4104 = vst.msk [vmem:[#allocation5] sm:$0xff] %vm4103, %v4080
        %4105 = vst.msk [vmem:[#allocation5 + $0x8] sm:$0xff] %vm4103, %v4082
        %4106 = vst.msk [vmem:[#allocation5 + $0x10] sm:$0xff] %vm4103, %v4084
        %4107 = vst.msk [vmem:[#allocation5 + $0x18] sm:$0xff] %vm4103, %v4086
        %4108 = vst.msk [vmem:[#allocation5 + $0x20] sm:$0xff] %vm4103, %v4088
        %4109 = vst.msk [vmem:[#allocation5 + $0x28] sm:$0xff] %vm4103, %v4090
        %4110 = vst.msk [vmem:[#allocation5 + $0x30] sm:$0xff] %vm4103, %v4092
        %4111 = vst.msk [vmem:[#allocation5 + $0x38] sm:$0xff] %vm4103, %v4094
        %v4112 = vsel %vm3634, 1, 0
        %v4113 = vsel %vm3635, 1, 0
        %v4114 = vsel %vm3636, 1, 0
        %v4115 = vsel %vm3637, 1, 0
        %v4116 = vsel %vm3638, 1, 0
        %v4117 = vsel %vm3639, 1, 0
        %v4118 = vsel %vm3640, 1, 0
        %v4119 = vsel %vm3641, 1, 0
        %vm4120 = vcmp.eq.s32.totalorder %v4112, 1
        %vm4121 = vcmp.eq.s32.totalorder %v4113, 1
        %vm4122 = vcmp.eq.s32.totalorder %v4114, 1
        %vm4123 = vcmp.eq.s32.totalorder %v4115, 1
        %vm4124 = vcmp.eq.s32.totalorder %v4116, 1
        %vm4125 = vcmp.eq.s32.totalorder %v4117, 1
        %vm4126 = vcmp.eq.s32.totalorder %v4118, 1
        %vm4127 = vcmp.eq.s32.totalorder %v4119, 1
        %v4128 = vsel %vm4120, %v3603, 0.0
        %v4129 = vsel %vm4121, %v3604, 0.0
        %v4130 = vsel %vm4122, %v3605, 0.0
        %v4131 = vsel %vm4123, %v3606, 0.0
        %v4132 = vsel %vm4124, %v3607, 0.0
        %v4133 = vsel %vm4125, %v3608, 0.0
        %v4134 = vsel %vm4126, %v3609, 0.0
        %v4135 = vsel %vm4127, %v3602, 0.0
        %4144 = vrot.lane.b32.xlu0 %v4128, 56
        %v4145 = vpop.permute.xlu0 %4144
        %4146 = vrot.lane.b32.xlu0 %v4129, 56
        %v4147 = vpop.permute.xlu0 %4146
        %4148 = vrot.lane.b32.xlu0 %v4130, 56
        %v4149 = vpop.permute.xlu0 %4148
        %4150 = vrot.lane.b32.xlu0 %v4131, 56
        %v4151 = vpop.permute.xlu0 %4150
        %4152 = vrot.lane.b32.xlu0 %v4132, 56
        %v4153 = vpop.permute.xlu0 %4152
        %4154 = vrot.lane.b32.xlu0 %v4133, 56
        %v4155 = vpop.permute.xlu0 %4154
        %4156 = vrot.lane.b32.xlu0 %v4134, 56
        %v4157 = vpop.permute.xlu0 %4156
        %4158 = vrot.lane.b32.xlu0 %v4135, 56
        %v4159 = vpop.permute.xlu0 %4158
        %vm4168 = vcmask 523712
        %4169 = vst.msk [vmem:[#allocation5] sm:$0xff] %vm4168, %v4145
        %4170 = vst.msk [vmem:[#allocation5 + $0x8] sm:$0xff] %vm4168, %v4147
        %4171 = vst.msk [vmem:[#allocation5 + $0x10] sm:$0xff] %vm4168, %v4149
        %4172 = vst.msk [vmem:[#allocation5 + $0x18] sm:$0xff] %vm4168, %v4151
        %4173 = vst.msk [vmem:[#allocation5 + $0x20] sm:$0xff] %vm4168, %v4153
        %4174 = vst.msk [vmem:[#allocation5 + $0x28] sm:$0xff] %vm4168, %v4155
        %4175 = vst.msk [vmem:[#allocation5 + $0x30] sm:$0xff] %vm4168, %v4157
        %4176 = vst.msk [vmem:[#allocation5 + $0x38] sm:$0xff] %vm4168, %v4159
        %vm4177 = vmand %vm3634, %vm3650
        %vm4178 = vmand %vm3635, %vm3651
        %vm4179 = vmand %vm3636, %vm3652
        %vm4180 = vmand %vm3637, %vm3653
        %vm4181 = vmand %vm3638, %vm3654
        %vm4182 = vmand %vm3639, %vm3655
        %vm4183 = vmand %vm3640, %vm3656
        %vm4184 = vmand %vm3641, %vm3657
        %v4185 = vsel %vm4177, 1, 0
        %v4186 = vsel %vm4178, 1, 0
        %v4187 = vsel %vm4179, 1, 0
        %v4188 = vsel %vm4180, 1, 0
        %v4189 = vsel %vm4181, 1, 0
        %v4190 = vsel %vm4182, 1, 0
        %v4191 = vsel %vm4183, 1, 0
        %v4192 = vsel %vm4184, 1, 0
        %vm4193 = vcmp.eq.s32.totalorder %v4185, 1
        %vm4194 = vcmp.eq.s32.totalorder %v4186, 1
        %vm4195 = vcmp.eq.s32.totalorder %v4187, 1
        %vm4196 = vcmp.eq.s32.totalorder %v4188, 1
        %vm4197 = vcmp.eq.s32.totalorder %v4189, 1
        %vm4198 = vcmp.eq.s32.totalorder %v4190, 1
        %vm4199 = vcmp.eq.s32.totalorder %v4191, 1
        %vm4200 = vcmp.eq.s32.totalorder %v4192, 1
        %v4201 = vsel %vm4193, %v3792, 0.0
        %v4202 = vsel %vm4194, %v3791, 0.0
        %v4203 = vsel %vm4195, %v3790, 0.0
        %v4204 = vsel %vm4196, %v3789, 0.0
        %v4205 = vsel %vm4197, %v3788, 0.0
        %v4206 = vsel %vm4198, %v3787, 0.0
        %v4207 = vsel %vm4199, %v3794, 0.0
        %v4208 = vsel %vm4200, %v3793, 0.0
        %4217 = vrot.lane.b32.xlu0 %v4201, 64
        %v4218 = vpop.permute.xlu0 %4217
        %4219 = vrot.lane.b32.xlu0 %v4202, 64
        %v4220 = vpop.permute.xlu0 %4219
        %4221 = vrot.lane.b32.xlu0 %v4203, 64
        %v4222 = vpop.permute.xlu0 %4221
        %4223 = vrot.lane.b32.xlu0 %v4204, 64
        %v4224 = vpop.permute.xlu0 %4223
        %4225 = vrot.lane.b32.xlu0 %v4205, 64
        %v4226 = vpop.permute.xlu0 %4225
        %4227 = vrot.lane.b32.xlu0 %v4206, 64
        %v4228 = vpop.permute.xlu0 %4227
        %4229 = vrot.lane.b32.xlu0 %v4207, 64
        %v4230 = vpop.permute.xlu0 %4229
        %4231 = vrot.lane.b32.xlu0 %v4208, 64
        %v4232 = vpop.permute.xlu0 %4231
        %vm4241 = vcmask 589312
        %4242 = vst.msk [vmem:[#allocation5] sm:$0xff] %vm4241, %v4218
        %4243 = vst.msk [vmem:[#allocation5 + $0x8] sm:$0xff] %vm4241, %v4220
        %4244 = vst.msk [vmem:[#allocation5 + $0x10] sm:$0xff] %vm4241, %v4222
        %4245 = vst.msk [vmem:[#allocation5 + $0x18] sm:$0xff] %vm4241, %v4224
        %4246 = vst.msk [vmem:[#allocation5 + $0x20] sm:$0xff] %vm4241, %v4226
        %4247 = vst.msk [vmem:[#allocation5 + $0x28] sm:$0xff] %vm4241, %v4228
        %4248 = vst.msk [vmem:[#allocation5 + $0x30] sm:$0xff] %vm4241, %v4230
        %4249 = vst.msk [vmem:[#allocation5 + $0x38] sm:$0xff] %vm4241, %v4232
        %v4250 = vld [vmem:[#allocation5] sm:$0xff]
        %v4251 = vld [vmem:[#allocation5 + $0x8] sm:$0xff]
        %v4252 = vld [vmem:[#allocation5 + $0x10] sm:$0xff]
        %v4253 = vld [vmem:[#allocation5 + $0x18] sm:$0xff]
        %v4254 = vld [vmem:[#allocation5 + $0x20] sm:$0xff]
        %v4255 = vld [vmem:[#allocation5 + $0x28] sm:$0xff]
        %v4256 = vld [vmem:[#allocation5 + $0x30] sm:$0xff]
        %v4257 = vld [vmem:[#allocation5 + $0x38] sm:$0xff]
        %v4258 = vpack.c.bf16 %v4251, %v4250
        %v4259 = vpack.c.bf16 %v4253, %v4252
        %v4260 = vpack.c.bf16 %v4255, %v4254
        %v4261 = vpack.c.bf16 %v4257, %v4256
        %v4262 = vld [vmem:[%s3] sm:$0xf]
        %v4263 = vld [vmem:[%s3 + $0x4] sm:$0xf]
        %v4264 = vld [vmem:[%s3 + $0x8] sm:$0xf]
        %v4265 = vld [vmem:[%s3 + $0xc] sm:$0xf]
        %v4266 = vld [vmem:[%s3 + $0x10] sm:$0xf]
        %v4267 = vld [vmem:[%s3 + $0x14] sm:$0xf]
        %v4268 = vld [vmem:[%s3 + $0x18] sm:$0xf]
        %v4269 = vld [vmem:[%s3 + $0x1c] sm:$0xf]
        %v4270 = vld [vmem:[%s3 + $0x20] sm:$0xf]
        %v4271 = vld [vmem:[%s4] sm:$0x1]
        %v4273 = vlaneseq
        %v4274 = vshrl.u32 %v4273, 7
        %v4275 = vsub.s32 0, %v4274
        %v4276 = vrot.slane %v4271, %v4275
        %v4287 = vunpack.c.l.b16 %v4262
        %v4288 = vunpack.c.l.b16 %v4263
        %v4289 = vunpack.c.l.b16 %v4264
        %v4290 = vunpack.c.l.b16 %v4265
        %v4291 = vunpack.c.l.b16 %v4266
        %v4292 = vunpack.c.l.b16 %v4267
        %v4293 = vunpack.c.l.b16 %v4268
        %v4294 = vunpack.c.l.b16 %v4269
        %v4295 = vunpack.c.l.b16 %v4270
        %v4296 = vpack.c.b16 %v4288, %v4287
        %v4297 = vpack.c.b16 %v4290, %v4289
        %v4298 = vpack.c.b16 %v4292, %v4291
        %v4299 = vpack.c.b16 %v4294, %v4293
        %v4300 = vpack.c.b16 %v4295, %v4295
        %vm4305 = vcmask 588800
        %v4307 = vsel %vm4305, %v4258, 0
        %v4310 = vsel %vm4305, %v4259, 0
        %v4313 = vsel %vm4305, %v4260, 0
        %v4316 = vsel %vm4305, %v4261, 0
        %vm4318 = vcmask 1043456
        %v4320 = vsel %vm4318, %v4300, 0
        %4322 = vmatprep.subr.bf16.mxu0 0
        %4323 = vmatpush1.bf16.msra.mxu0 %v4296
        %4324 = vmatprep.subr.bf16.mxu0 0
        %4325 = vmatpush1.bf16.msra.mxu0 %v4297
        %4326 = vmatprep.subr.bf16.mxu0 0
        %4327 = vmatpush1.bf16.msra.mxu0 %v4298
        %4328 = vmatprep.subr.bf16.mxu0 0
        %4329 = vmatpush1.bf16.msra.mxu0 %v4299
        %4330 = vmatprep.subr.bf16.mxu0 0
        %4331 = vmatpush1.bf16.msra.mxu0 %v4320
        %4332 = vmatprep.subr.bf16.mxu0 0
        %4333 = vmatpush1.bf16.msra.mxu0 0
        %4334 = vmatprep.subr.bf16.mxu0 0
        %4335 = vmatpush1.bf16.msra.mxu0 0
        %4336 = vmatprep.subr.bf16.mxu0 0
        %4337 = vmatpush1.bf16.msra.mxu0 0
        %4338 = vmatprep.subr.bf16.mxu0 0
        %4339 = vmatpush1.bf16.msra.mxu0 0
        %4340 = vmatprep.subr.bf16.mxu0 0
        %4341 = vmatpush1.bf16.msra.mxu0 0
        %4342 = vmatprep.subr.bf16.mxu0 0
        %4343 = vmatpush1.bf16.msra.mxu0 0
        %4344 = vmatprep.subr.bf16.mxu0 0
        %4345 = vmatpush1.bf16.msra.mxu0 0
        %4346 = vmatprep.subr.bf16.mxu0 0
        %4347 = vmatpush1.bf16.msra.mxu0 0
        %4348 = vmatprep.subr.bf16.mxu0 0
        %4349 = vmatpush1.bf16.msra.mxu0 0
        %4350 = vmatprep.subr.bf16.mxu0 0
        %4351 = vmatpush1.bf16.msra.mxu0 0
        %4352 = vmatprep.subr.bf16.mxu0 0
        %4353 = vmatpush1.bf16.msra.mxu0 0
        %4354 = vmatprep.mubr.bf16.mxu0 0
        %4355 = vmatmul.mubr.bf16.gmra.mrb[0].mxu0 %v4307
        %v4356 = vpop.f32.mrb[0].mxu0
        %v4357 = vadd.f32 %v4276, %v4356
        %v4358 = vpop.f32.mrb[0].mxu0
        %v4359 = vpop.f32.mrb[0].mxu0
        %v4360 = vadd.f32 %v4276, %v4359
        %v4361 = vpop.f32.mrb[0].mxu0
        %4362 = vmatprep.mubr.bf16.mxu0 0
        %4363 = vmatmul.mubr.bf16.gmra.mrb[0].mxu0 %v4310
        %v4364 = vpop.f32.mrb[0].mxu0
        %v4365 = vadd.f32 %v4276, %v4364
        %v4366 = vpop.f32.mrb[0].mxu0
        %v4367 = vpop.f32.mrb[0].mxu0
        %v4368 = vadd.f32 %v4276, %v4367
        %v4369 = vpop.f32.mrb[0].mxu0
        %4370 = vmatprep.mubr.bf16.mxu0 0
        %4371 = vmatmul.mubr.bf16.gmra.mrb[0].mxu0 %v4313
        %v4372 = vpop.f32.mrb[0].mxu0
        %v4373 = vadd.f32 %v4276, %v4372
        %v4374 = vpop.f32.mrb[0].mxu0
        %v4375 = vpop.f32.mrb[0].mxu0
        %v4376 = vadd.f32 %v4276, %v4375
        %v4377 = vpop.f32.mrb[0].mxu0
        %4378 = vmatprep.mubr.bf16.mxu0 0
        %4379 = vmatmul.mubr.bf16.gmra.mrb[0].mxu0 %v4316
        %v4380 = vpop.f32.mrb[0].mxu0
        %v4381 = vadd.f32 %v4276, %v4380
        %v4382 = vpop.f32.mrb[0].mxu0
        %v4383 = vpop.f32.mrb[0].mxu0
        %v4384 = vadd.f32 %v4276, %v4383
        %v4385 = vpop.f32.mrb[0].mxu0
        %4386 = vdwg.mxu0
        %v4387 = vmax.f32 %v4357, 0.0
        %v4388 = vmax.f32 %v4360, 0.0
        %v4389 = vmax.f32 %v4365, 0.0
        %v4390 = vmax.f32 %v4368, 0.0
        %v4391 = vmax.f32 %v4373, 0.0
        %v4392 = vmax.f32 %v4376, 0.0
        %v4393 = vmax.f32 %v4381, 0.0
        %v4394 = vmax.f32 %v4384, 0.0
        %v4395 = vrot.slane %v4387, 1
        %v4396 = vrot.slane %v4388, 1
        %v4397 = vrot.slane %v4389, 1
        %v4398 = vrot.slane %v4390, 1
        %v4399 = vrot.slane %v4391, 1
        %v4400 = vrot.slane %v4392, 1
        %v4401 = vrot.slane %v4393, 1
        %v4402 = vrot.slane %v4394, 1
        %v4403 = vsel %vm1265, %v4401, %v4402
        %v4404 = vsel %vm1265, %v4400, %v4401
        %v4405 = vsel %vm1265, %v4399, %v4400
        %v4406 = vsel %vm1265, %v4398, %v4399
        %v4407 = vsel %vm1265, %v4397, %v4398
        %v4408 = vsel %vm1265, %v4396, %v4397
        %v4409 = vsel %vm1265, %v4395, %v4396
        %v4410 = vsel %vm1265, %v4402, %v4395
        %v4411 = vmax.f32 %v4387, %v4409
        %v4412 = vmax.f32 %v4388, %v4408
        %v4413 = vmax.f32 %v4389, %v4407
        %v4414 = vmax.f32 %v4390, %v4406
        %v4415 = vmax.f32 %v4391, %v4405
        %v4416 = vmax.f32 %v4392, %v4404
        %v4417 = vmax.f32 %v4393, %v4403
        %v4418 = vmax.f32 %v4394, %v4410
        %v4419 = vmax.f32 %v4411, %v4412
        %v4420 = vmax.f32 %v4412, %v4413
        %v4421 = vmax.f32 %v4413, %v4414
        %v4422 = vmax.f32 %v4414, %v4415
        %v4423 = vmax.f32 %v4415, %v4416
        %v4424 = vmax.f32 %v4416, %v4417
        %v4425 = vmax.f32 %v4417, %v4418
        %v4426 = vmax.f32 %v4418, %v4411
        %vm4427 = vcmask 130048
        %4428 = vst.msk [vmem:[#allocation6] sm:$0xff] %vm4427, %v4419
        %4429 = vst.msk [vmem:[#allocation6 + $0x8] sm:$0xff] %vm4427, %v4420
        %4430 = vst.msk [vmem:[#allocation6 + $0x10] sm:$0xff] %vm4427, %v4421
        %4431 = vst.msk [vmem:[#allocation6 + $0x18] sm:$0xff] %vm4427, %v4422
        %4432 = vst.msk [vmem:[#allocation6 + $0x20] sm:$0xff] %vm4427, %v4423
        %4433 = vst.msk [vmem:[#allocation6 + $0x28] sm:$0xff] %vm4427, %v4424
        %4434 = vst.msk [vmem:[#allocation6 + $0x30] sm:$0xff] %vm4427, %v4425
        %4435 = vst.msk [vmem:[#allocation6 + $0x38] sm:$0xff] %vm4427, %v4426
        %v4436 = vld [vmem:[#allocation6] ss:$2 sm:$0xf]
        %vm4437 = vcmask 125952
        %4438 = vst.msk [vmem:[#allocation7] sm:$0xf] %vm4437, %v4436
        %s4439 = scalar_lea.vmem [#allocation6], 16
        %v4440 = vld [vmem:[%s4439] ss:$2 sm:$0xf]
        %4441 = vst.msk [vmem:[#allocation7 + $0x4] sm:$0xf] %vm4437, %v4440
        %s4442 = scalar_lea.vmem [#allocation6], 32
        %v4443 = vld [vmem:[%s4442] ss:$2 sm:$0xf]
        %4444 = vst.msk [vmem:[#allocation7 + $0x8] sm:$0xf] %vm4437, %v4443
        %s4445 = scalar_lea.vmem [#allocation6], 48
        %v4446 = vld [vmem:[%s4445] ss:$2 sm:$0xf]
        %4447 = vst.msk [vmem:[#allocation7 + $0xc] sm:$0xf] %vm4437, %v4446
        %v4448 = vld [vmem:[#allocation7] sm:$0xff]
        %v4449 = vld [vmem:[#allocation7 + $0x8] sm:$0xff]
        %v4450 = vshra.s32 %v526, 2
        %v4451 = vshra.s32 %v527, 2
        %v4452 = vand.u32 %v526, 3
        %v4453 = vand.u32 %v527, 3
        %vm4454 = vcmp.ge.s32.totalorder %v4450, 1
        %vm4455 = vcmp.ge.s32.totalorder %v4451, 1
        %vm4456 = vcmp.lt.s32.totalorder %v4450, 3
        %vm4457 = vcmp.lt.s32.totalorder %v4451, 3
        %vm4458 = vcmp.ge.s32.totalorder %v4452, 1
        %vm4459 = vcmp.ge.s32.totalorder %v4453, 1
        %vm4460 = vcmp.lt.s32.totalorder %v4452, 3
        %vm4461 = vcmp.lt.s32.totalorder %v4453, 3
        %v4462 = vrot.slane %v4448, 3
        %v4463 = vrot.slane %v4449, 3
        %vm4464 = vcmp.lt.s32.totalorder %v526, 5
        %v4465 = vsel %vm4464, %v4462, %v4463
        %v4466 = vsel %vm4464, %v4463, %v4462
        %vm4467 = vmand %vm4454, %vm4458
        %vm4468 = vmand %vm4455, %vm4459
        %v4469 = vsel %vm4467, 1, 0
        %v4470 = vsel %vm4468, 1, 0
        %vm4471 = vcmp.eq.s32.totalorder %v4469, 1
        %vm4472 = vcmp.eq.s32.totalorder %v4470, 1
        %v4473 = vsel %vm4471, %v4466, 0.0
        %v4474 = vsel %vm4472, %v4465, 0.0
        %4475 = vst.msk [vmem:[#allocation8] sm:$0xff] %vm4427, %v4473
        %4476 = vst.msk [vmem:[#allocation8 + $0x10] sm:$0xff] %vm4427, %v4474
        %v4477 = vrot.slane %v4448, 4
        %v4478 = vrot.slane %v4449, 4
        %vm4479 = vcmp.lt.s32.totalorder %v526, 4
        %v4480 = vsel %vm4479, %v4477, %v4478
        %v4481 = vsel %vm4479, %v4478, %v4477
        %v4482 = vsel %vm4454, 1, 0
        %v4483 = vsel %vm4455, 1, 0
        %vm4484 = vcmp.eq.s32.totalorder %v4482, 1
        %vm4485 = vcmp.eq.s32.totalorder %v4483, 1
        %v4486 = vsel %vm4484, %v4481, 0.0
        %v4487 = vsel %vm4485, %v4480, 0.0
        %4490 = vrot.lane.b32.xlu0 %v4486, 16
        %v4491 = vpop.permute.xlu0 %4490
        %4492 = vrot.lane.b32.xlu0 %v4487, 16
        %v4493 = vpop.permute.xlu0 %4492
        %vm4496 = vcmask 261248
        %4497 = vst.msk [vmem:[#allocation8] sm:$0xff] %vm4496, %v4491
        %4498 = vst.msk [vmem:[#allocation8 + $0x10] sm:$0xff] %vm4496, %v4493
        %v4499 = vrot.slane %v4448, 5
        %v4500 = vrot.slane %v4449, 5
        %vm4501 = vcmp.lt.s32.totalorder %v526, 3
        %v4502 = vsel %vm4501, %v4499, %v4500
        %v4503 = vsel %vm4501, %v4500, %v4499
        %vm4504 = vmand %vm4454, %vm4460
        %vm4505 = vmand %vm4455, %vm4461
        %v4506 = vsel %vm4504, 1, 0
        %v4507 = vsel %vm4505, 1, 0
        %vm4508 = vcmp.eq.s32.totalorder %v4506, 1
        %vm4509 = vcmp.eq.s32.totalorder %v4507, 1
        %v4510 = vsel %vm4508, %v4503, 0.0
        %v4511 = vsel %vm4509, %v4502, 0.0
        %4514 = vrot.lane.b32.xlu0 %v4510, 32
        %v4515 = vpop.permute.xlu0 %4514
        %4516 = vrot.lane.b32.xlu0 %v4511, 32
        %v4517 = vpop.permute.xlu0 %4516
        %vm4520 = vcmask 392448
        %4521 = vst.msk [vmem:[#allocation8] sm:$0xff] %vm4520, %v4515
        %4522 = vst.msk [vmem:[#allocation8 + $0x10] sm:$0xff] %vm4520, %v4517
        %v4523 = vrot.slane %v4448, 7
        %v4524 = vrot.slane %v4449, 7
        %v4525 = vsel %vm782, %v4523, %v4524
        %v4526 = vsel %vm782, %v4524, %v4523
        %v4527 = vsel %vm4458, 1, 0
        %v4528 = vsel %vm4459, 1, 0
        %vm4529 = vcmp.eq.s32.totalorder %v4527, 1
        %vm4530 = vcmp.eq.s32.totalorder %v4528, 1
        %v4531 = vsel %vm4529, %v4526, 0.0
        %v4532 = vsel %vm4530, %v4525, 0.0
        %4535 = vrot.lane.b32.xlu0 %v4531, 48
        %v4536 = vpop.permute.xlu0 %4535
        %4537 = vrot.lane.b32.xlu0 %v4532, 48
        %v4538 = vpop.permute.xlu0 %4537
        %vm4541 = vcmask 523648
        %4542 = vst.msk [vmem:[#allocation8] sm:$0xff] %vm4541, %v4536
        %4543 = vst.msk [vmem:[#allocation8 + $0x10] sm:$0xff] %vm4541, %v4538
        %4546 = vrot.lane.b32.xlu0 %v4448, 64
        %v4547 = vpop.permute.xlu0 %4546
        %4548 = vrot.lane.b32.xlu0 %v4449, 64
        %v4549 = vpop.permute.xlu0 %4548
        %vm4552 = vcmask 654848
        %4553 = vst.msk [vmem:[#allocation8] sm:$0xff] %vm4552, %v4547
        %4554 = vst.msk [vmem:[#allocation8 + $0x10] sm:$0xff] %vm4552, %v4549
        %v4555 = vrot.slane %v4448, 1
        %v4556 = vrot.slane %v4449, 1
        %v4557 = vsel %vm1265, %v4555, %v4556
        %v4558 = vsel %vm1265, %v4556, %v4555
        %v4559 = vsel %vm4460, 1, 0
        %v4560 = vsel %vm4461, 1, 0
        %vm4561 = vcmp.eq.s32.totalorder %v4559, 1
        %vm4562 = vcmp.eq.s32.totalorder %v4560, 1
        %v4563 = vsel %vm4561, %v4557, 0.0
        %v4564 = vsel %vm4562, %v4558, 0.0
        %4567 = vrot.lane.b32.xlu0 %v4563, 80
        %v4568 = vpop.permute.xlu0 %4567
        %4569 = vrot.lane.b32.xlu0 %v4564, 80
        %v4570 = vpop.permute.xlu0 %4569
        %vm4573 = vcmask 786048
        %4574 = vst.msk [vmem:[#allocation8] sm:$0xff] %vm4573, %v4568
        %4575 = vst.msk [vmem:[#allocation8 + $0x10] sm:$0xff] %vm4573, %v4570
        %vm4576 = vmand %vm4456, %vm4458
        %vm4577 = vmand %vm4457, %vm4459
        %v4578 = vsel %vm4576, 1, 0
        %v4579 = vsel %vm4577, 1, 0
        %vm4580 = vcmp.eq.s32.totalorder %v4578, 1
        %vm4581 = vcmp.eq.s32.totalorder %v4579, 1
        %v4582 = vsel %vm4580, %v4465, 0.0
        %v4583 = vsel %vm4581, %v4466, 0.0
        %4586 = vrot.lane.b32.xlu0 %v4582, 96
        %v4587 = vpop.permute.xlu0 %4586
        %4588 = vrot.lane.b32.xlu0 %v4583, 96
        %v4589 = vpop.permute.xlu0 %4588
        %vm4592 = vcmask 917248
        %4593 = vst.msk [vmem:[#allocation8] sm:$0xff] %vm4592, %v4587
        %4594 = vst.msk [vmem:[#allocation8 + $0x10] sm:$0xff] %vm4592, %v4589
        %v4595 = vsel %vm4456, 1, 0
        %v4596 = vsel %vm4457, 1, 0
        %vm4597 = vcmp.eq.s32.totalorder %v4595, 1
        %vm4598 = vcmp.eq.s32.totalorder %v4596, 1
        %v4599 = vsel %vm4597, %v4480, 0.0
        %v4600 = vsel %vm4598, %v4481, 0.0
        %4603 = vrot.lane.b32.xlu0 %v4599, 112
        %v4604 = vpop.permute.xlu0 %4603
        %4605 = vrot.lane.b32.xlu0 %v4600, 112
        %v4606 = vpop.permute.xlu0 %4605
        %vm4609 = vcmask 1048448
        %4610 = vst.msk [vmem:[#allocation8] sm:$0xff] %vm4609, %v4604
        %4611 = vst.msk [vmem:[#allocation8 + $0x10] sm:$0xff] %vm4609, %v4606
        %vm4612 = vmand %vm4456, %vm4460
        %vm4613 = vmand %vm4457, %vm4461
        %v4614 = vsel %vm4612, 1, 0
        %v4615 = vsel %vm4613, 1, 0
        %vm4616 = vcmp.eq.s32.totalorder %v4614, 1
        %vm4617 = vcmp.eq.s32.totalorder %v4615, 1
        %v4618 = vsel %vm4616, %v4502, 0.0
        %v4619 = vsel %vm4617, %v4503, 0.0
        %4620 = vst.msk [vmem:[#allocation8 + $0x8] sm:$0xff] %vm4427, %v4618
        %4621 = vst.msk [vmem:[#allocation8 + $0x18] sm:$0xff] %vm4427, %v4619
        %v4622 = vld [vmem:[#allocation8] sm:$0xff]
        %v4623 = vld [vmem:[#allocation8 + $0x8] sm:$0xff]
        %v4624 = vld [vmem:[#allocation8 + $0x10] sm:$0xff]
        %v4625 = vld [vmem:[#allocation8 + $0x18] sm:$0xff]
        %v4626 = vpack.c.bf16 %v4624, %v4622
        %v4627 = vpack.c.bf16 %v4625, %v4623
        %v4628 = vld [vmem:[%s5] sm:$0xf]
        %v4629 = vld [vmem:[%s5 + $0x4] sm:$0xf]
        %v4630 = vld [vmem:[%s5 + $0x8] sm:$0xf]
        %v4631 = vld [vmem:[%s5 + $0xc] sm:$0xf]
        %v4632 = vld [vmem:[%s5 + $0x10] sm:$0xf]
        %v4633 = vld [vmem:[%s5 + $0x14] sm:$0xf]
        %v4634 = vld [vmem:[%s5 + $0x18] sm:$0xf]
        %v4635 = vld [vmem:[%s5 + $0x1c] sm:$0xf]
        %v4636 = vld [vmem:[%s5 + $0x20] sm:$0xf]
        %v4637 = vld [vmem:[%s5 + $0x24] sm:$0xf]
        %v4638 = vld [vmem:[%s5 + $0x28] sm:$0xf]
        %v4639 = vld [vmem:[%s5 + $0x2c] sm:$0xf]
        %v4640 = vld [vmem:[%s5 + $0x30] sm:$0xf]
        %v4641 = vld [vmem:[%s5 + $0x34] sm:$0xf]
        %v4642 = vld [vmem:[%s5 + $0x38] sm:$0xf]
        %v4643 = vld [vmem:[%s5 + $0x3c] sm:$0xf]
        %v4644 = vld [vmem:[%s5 + $0x40] sm:$0xf]
        %v4645 = vld [vmem:[%s5 + $0x44] sm:$0xf]
        %v4646 = vld [vmem:[%s6] sm:$0x1]
        %v4648 = vlaneseq
        %v4649 = vshrl.u32 %v4648, 7
        %v4650 = vsub.s32 0, %v4649
        %v4651 = vrot.slane %v4646, %v4650
        %v4671 = vunpack.c.l.b16 %v4628
        %v4672 = vunpack.c.l.b16 %v4629
        %v4673 = vunpack.c.l.b16 %v4630
        %v4674 = vunpack.c.l.b16 %v4631
        %v4675 = vunpack.c.l.b16 %v4632
        %v4676 = vunpack.c.l.b16 %v4633
        %v4677 = vunpack.c.l.b16 %v4634
        %v4678 = vunpack.c.l.b16 %v4635
        %v4679 = vunpack.c.l.b16 %v4636
        %v4680 = vunpack.c.l.b16 %v4637
        %v4681 = vunpack.c.l.b16 %v4638
        %v4682 = vunpack.c.l.b16 %v4639
        %v4683 = vunpack.c.l.b16 %v4640
        %v4684 = vunpack.c.l.b16 %v4641
        %v4685 = vunpack.c.l.b16 %v4642
        %v4686 = vunpack.c.l.b16 %v4643
        %v4687 = vunpack.c.l.b16 %v4644
        %v4688 = vunpack.c.l.b16 %v4645
        %v4689 = vpack.c.b16 %v4672, %v4671
        %v4690 = vpack.c.b16 %v4674, %v4673
        %v4691 = vpack.c.b16 %v4676, %v4675
        %v4692 = vpack.c.b16 %v4678, %v4677
        %v4693 = vpack.c.b16 %v4680, %v4679
        %v4694 = vpack.c.b16 %v4682, %v4681
        %v4695 = vpack.c.b16 %v4684, %v4683
        %v4696 = vpack.c.b16 %v4686, %v4685
        %v4697 = vpack.c.b16 %v4688, %v4687
        %v4708 = vsel %vm4427, %v4627, 0
        %4710 = vmatprep.subr.bf16.mxu0 0
        %4711 = vmatpush1.bf16.msra.mxu0 %v4689
        %4712 = vmatprep.subr.bf16.mxu0 0
        %4713 = vmatpush1.bf16.msra.mxu0 %v4690
        %4714 = vmatprep.subr.bf16.mxu0 0
        %4715 = vmatpush1.bf16.msra.mxu0 %v4691
        %4716 = vmatprep.subr.bf16.mxu0 0
        %4717 = vmatpush1.bf16.msra.mxu0 %v4692
        %4718 = vmatprep.subr.bf16.mxu0 0
        %4719 = vmatpush1.bf16.msra.mxu0 %v4693
        %4720 = vmatprep.subr.bf16.mxu0 0
        %4721 = vmatpush1.bf16.msra.mxu0 %v4694
        %4722 = vmatprep.subr.bf16.mxu0 0
        %4723 = vmatpush1.bf16.msra.mxu0 %v4695
        %4724 = vmatprep.subr.bf16.mxu0 0
        %4725 = vmatpush1.bf16.msra.mxu0 %v4696
        %4726 = vmatprep.subr.bf16.mxu0 0
        %4727 = vmatpush1.bf16.msra.mxu0 %v4697
        %4728 = vmatprep.subr.bf16.mxu0 0
        %4729 = vmatpush1.bf16.msra.mxu0 0
        %4730 = vmatprep.subr.bf16.mxu0 0
        %4731 = vmatpush1.bf16.msra.mxu0 0
        %4732 = vmatprep.subr.bf16.mxu0 0
        %4733 = vmatpush1.bf16.msra.mxu0 0
        %4734 = vmatprep.subr.bf16.mxu0 0
        %4735 = vmatpush1.bf16.msra.mxu0 0
        %4736 = vmatprep.subr.bf16.mxu0 0
        %4737 = vmatpush1.bf16.msra.mxu0 0
        %4738 = vmatprep.subr.bf16.mxu0 0
        %4739 = vmatpush1.bf16.msra.mxu0 0
        %4740 = vmatprep.subr.bf16.mxu0 0
        %4741 = vmatpush1.bf16.msra.mxu0 0
        %4742 = vmatprep.mubr.bf16.mxu0 %v4708
        %4743 = vmatmul.mubr.bf16.gmra.mrb[0].mxu0 %v4626
        %v4744 = vpop.f32.mrb[0].mxu0
        %v4745 = vadd.f32 %v4651, %v4744
        %v4746 = vpop.f32.mrb[0].mxu0
        %v4747 = vpop.f32.mrb[0].mxu0
        %v4748 = vadd.f32 %v4651, %v4747
        %v4749 = vpop.f32.mrb[0].mxu0
        %4750 = vdwg.mxu0
        %v4751 = vmax.f32 %v4745, 0.0
        %v4752 = vmax.f32 %v4748, 0.0
        %v4753 = vrot.slane %v4751, 1
        %v4754 = vrot.slane %v4752, 1
        %v4755 = vsel %vm1265, %v4753, %v4754
        %v4756 = vsel %vm1265, %v4754, %v4753
        %v4757 = vmax.f32 %v4751, %v4755
        %v4758 = vmax.f32 %v4752, %v4756
        %v4759 = vrot.slane %v4757, 4
        %v4760 = vrot.slane %v4758, 4
        %v4761 = vsel %vm4479, %v4759, %v4760
        %v4762 = vsel %vm4479, %v4760, %v4759
        %v4763 = vmax.f32 %v4757, %v4761
        %v4764 = vmax.f32 %v4758, %v4762
        %vm4765 = vcmask 261120
        %4766 = vst.msk [vmem:[#allocation9] sm:$0xff] %vm4765, %v4763
        %4767 = vst.msk [vmem:[#allocation9 + $0x8] sm:$0xff] %vm4765, %v4764
        %v4768 = vld [vmem:[#allocation9] ss:$2 sm:$0x3]
        %vm4769 = vcmask 254976
        %4770 = vst.msk [vmem:[#allocation10] sm:$0x3] %vm4769, %v4768
        %s4771 = scalar_lea.vmem [#allocation9], 8
        %v4772 = vld [vmem:[%s4771] ss:$2 sm:$0x3]
        %4773 = vst.msk [vmem:[#allocation10 + $0x2] sm:$0x3] %vm4769, %v4772
        %v4774 = vld [vmem:[#allocation10] sm:$0xf]
        %v4775 = vshra.s32 %v526, 1
        %v4776 = vand.u32 %v526, 1
        %vm4777 = vcmp.ge.s32.totalorder %v4775, 1
        %vm4778 = vcmp.lt.s32.totalorder %v4775, 1
        %vm4779 = vcmp.ge.s32.totalorder %v4776, 1
        %vm4780 = vcmp.lt.s32.totalorder %v4776, 1
        %vm4781 = vcmask 1047556
        %v4782 = vrot.slane %v4774, 4
        %v4783 = vsel %vm4781, %v4782, %v4774
        %v4784 = vrot.slane %v4783, 4
        %v4785 = vsel %vm4781, %v4784, %v4774
        %vm4786 = vmand %vm4777, %vm4779
        %v4787 = vsel %vm4786, 1, 0
        %vm4788 = vcmp.eq.s32.totalorder %v4787, 1
        %v4790 = vrot.slane %v4785, 1
        %v4792 = vsel %vm4788, %v4790, 0.0
        %vm4793 = vcmask 257024
        %4794 = vst.msk [vmem:[#allocation11] sm:$0xf] %vm4793, %v4792
        %v4795 = vsel %vm4777, 1, 0
        %vm4796 = vcmp.eq.s32.totalorder %v4795, 1
        %v4797 = vrot.slane %v4785, 2
        %v4799 = vsel %vm4796, %v4797, 0.0
        %4801 = vrot.lane.b32.xlu0 %v4799, 32
        %v4802 = vpop.permute.xlu0 %4801
        %vm4804 = vcmask 519424
        %4805 = vst.msk [vmem:[#allocation11] sm:$0xf] %vm4804, %v4802
        %vm4806 = vmand %vm4777, %vm4780
        %v4807 = vsel %vm4806, 1, 0
        %vm4808 = vcmp.eq.s32.totalorder %v4807, 1
        %v4809 = vrot.slane %v4785, 3
        %v4811 = vsel %vm4808, %v4809, 0.0
        %4813 = vrot.lane.b32.xlu0 %v4811, 64
        %v4814 = vpop.permute.xlu0 %4813
        %vm4816 = vcmask 781824
        %4817 = vst.msk [vmem:[#allocation11] sm:$0xf] %vm4816, %v4814
        %v4818 = vsel %vm4779, 1, 0
        %vm4819 = vcmp.eq.s32.totalorder %v4818, 1
        %v4820 = vsel %vm4819, %v4809, 0.0
        %4822 = vrot.lane.b32.xlu0 %v4820, 96
        %v4823 = vpop.permute.xlu0 %4822
        %vm4825 = vcmask 1044224
        %4826 = vst.msk [vmem:[#allocation11] sm:$0xf] %vm4825, %v4823
        %4827 = vst.msk [vmem:[#allocation11 + $0x4] sm:$0xf] %vm4793, %v4774
        %v4828 = vsel %vm4780, 1, 0
        %vm4829 = vcmp.eq.s32.totalorder %v4828, 1
        %v4830 = vsel %vm4829, %v4790, 0.0
        %4832 = vrot.lane.b32.xlu0 %v4830, 32
        %v4833 = vpop.permute.xlu0 %4832
        %4835 = vst.msk [vmem:[#allocation11 + $0x4] sm:$0xf] %vm4804, %v4833
        %vm4836 = vmand %vm4778, %vm4779
        %v4837 = vsel %vm4836, 1, 0
        %vm4838 = vcmp.eq.s32.totalorder %v4837, 1
        %v4839 = vsel %vm4838, %v4790, 0.0
        %4841 = vrot.lane.b32.xlu0 %v4839, 64
        %v4842 = vpop.permute.xlu0 %4841
        %4844 = vst.msk [vmem:[#allocation11 + $0x4] sm:$0xf] %vm4816, %v4842
        %v4845 = vsel %vm4778, 1, 0
        %vm4846 = vcmp.eq.s32.totalorder %v4845, 1
        %v4847 = vsel %vm4846, %v4797, 0.0
        %4849 = vrot.lane.b32.xlu0 %v4847, 96
        %v4850 = vpop.permute.xlu0 %4849
        %4852 = vst.msk [vmem:[#allocation11 + $0x4] sm:$0xf] %vm4825, %v4850
        %vm4853 = vmand %vm4778, %vm4780
        %v4854 = vsel %vm4853, 1, 0
        %vm4855 = vcmp.eq.s32.totalorder %v4854, 1
        %v4856 = vsel %vm4855, %v4809, 0.0
        %4857 = vst.msk [vmem:[#allocation11 + $0x8] sm:$0xf] %vm4793, %v4856
        %v4858 = vld [vmem:[#allocation11] sm:$0xff]
        %v4859 = vld [vmem:[#allocation11 + $0x8] sm:$0xf]
        %v4861 = vcombine.high %v4858, %v4858
        %v4863 = vpack.c.bf16 %v4858, %v4858
        %v4864 = vpack.c.bf16 %v4861, %v4861
        %v4865 = vpack.c.bf16 %v4859, %v4859
        %v4866 = vld [vmem:[%s7] sm:$0xf]
        %v4867 = vld [vmem:[%s7 + $0x4] sm:$0xf]
        %v4868 = vld [vmem:[%s7 + $0x8] sm:$0xf]
        %v4869 = vld [vmem:[%s7 + $0xc] sm:$0xf]
        %v4870 = vld [vmem:[%s7 + $0x10] sm:$0xf]
        %v4871 = vld [vmem:[%s7 + $0x14] sm:$0xf]
        %v4872 = vld [vmem:[%s7 + $0x18] sm:$0xf]
        %v4873 = vld [vmem:[%s7 + $0x1c] sm:$0xf]
        %v4874 = vld [vmem:[%s7 + $0x20] sm:$0xf]
        %v4875 = vld [vmem:[%s7 + $0x24] sm:$0xf]
        %v4876 = vld [vmem:[%s7 + $0x28] sm:$0xf]
        %v4877 = vld [vmem:[%s7 + $0x2c] sm:$0xf]
        %v4878 = vld [vmem:[%s7 + $0x30] sm:$0xf]
        %v4879 = vld [vmem:[%s7 + $0x34] sm:$0xf]
        %v4880 = vld [vmem:[%s7 + $0x38] sm:$0xf]
        %v4881 = vld [vmem:[%s7 + $0x3c] sm:$0xf]
        %v4882 = vld [vmem:[%s7 + $0x40] sm:$0xf]
        %v4883 = vld [vmem:[%s7 + $0x44] sm:$0xf]
        %v4884 = vld [vmem:[%s7 + $0x48] sm:$0xf]
        %v4885 = vld [vmem:[%s7 + $0x4c] sm:$0xf]
        %v4886 = vld [vmem:[%s7 + $0x50] sm:$0xf]
        %v4887 = vld [vmem:[%s7 + $0x54] sm:$0xf]
        %v4888 = vld [vmem:[%s7 + $0x58] sm:$0xf]
        %v4889 = vld [vmem:[%s7 + $0x5c] sm:$0xf]
        %v4890 = vld [vmem:[%s7 + $0x60] sm:$0xf]
        %v4891 = vld [vmem:[%s7 + $0x64] sm:$0xf]
        %v4892 = vld [vmem:[%s7 + $0x68] sm:$0xf]
        %v4893 = vld [vmem:[%s7 + $0x6c] sm:$0xf]
        %v4894 = vld [vmem:[%s7 + $0x70] sm:$0xf]
        %v4895 = vld [vmem:[%s7 + $0x74] sm:$0xf]
        %v4896 = vld [vmem:[%s7 + $0x78] sm:$0xf]
        %v4897 = vld [vmem:[%s7 + $0x7c] sm:$0xf]
        %v4898 = vld [vmem:[%s7 + $0x80] sm:$0xf]
        %v4899 = vld [vmem:[%s7 + $0x84] sm:$0xf]
        %v4900 = vld [vmem:[%s7 + $0x88] sm:$0xf]
        %v4901 = vld [vmem:[%s7 + $0x8c] sm:$0xf]
        %v4902 = vld [vmem:[%s8] sm:$0x1]
        %v4904 = vlaneseq
        %v4905 = vshrl.u32 %v4904, 7
        %v4906 = vsub.s32 0, %v4905
        %v4907 = vrot.slane %v4902, %v4906
        %v4945 = vunpack.c.l.b16 %v4866
        %v4946 = vunpack.c.l.b16 %v4867
        %v4947 = vunpack.c.l.b16 %v4868
        %v4948 = vunpack.c.l.b16 %v4869
        %v4949 = vunpack.c.l.b16 %v4870
        %v4950 = vunpack.c.l.b16 %v4871
        %v4951 = vunpack.c.l.b16 %v4872
        %v4952 = vunpack.c.l.b16 %v4873
        %v4953 = vunpack.c.l.b16 %v4874
        %v4954 = vunpack.c.l.b16 %v4875
        %v4955 = vunpack.c.l.b16 %v4876
        %v4956 = vunpack.c.l.b16 %v4877
        %v4957 = vunpack.c.l.b16 %v4878
        %v4958 = vunpack.c.l.b16 %v4879
        %v4959 = vunpack.c.l.b16 %v4880
        %v4960 = vunpack.c.l.b16 %v4881
        %v4961 = vunpack.c.l.b16 %v4882
        %v4962 = vunpack.c.l.b16 %v4883
        %v4963 = vunpack.c.l.b16 %v4884
        %v4964 = vunpack.c.l.b16 %v4885
        %v4965 = vunpack.c.l.b16 %v4886
        %v4966 = vunpack.c.l.b16 %v4887
        %v4967 = vunpack.c.l.b16 %v4888
        %v4968 = vunpack.c.l.b16 %v4889
        %v4969 = vunpack.c.l.b16 %v4890
        %v4970 = vunpack.c.l.b16 %v4891
        %v4971 = vunpack.c.l.b16 %v4892
        %v4972 = vunpack.c.l.b16 %v4893
        %v4973 = vunpack.c.l.b16 %v4894
        %v4974 = vunpack.c.l.b16 %v4895
        %v4975 = vunpack.c.l.b16 %v4896
        %v4976 = vunpack.c.l.b16 %v4897
        %v4977 = vunpack.c.l.b16 %v4898
        %v4978 = vunpack.c.l.b16 %v4899
        %v4979 = vunpack.c.l.b16 %v4900
        %v4980 = vunpack.c.l.b16 %v4901
        %v4981 = vpack.c.b16 %v4946, %v4945
        %v4982 = vpack.c.b16 %v4948, %v4947
        %v4983 = vpack.c.b16 %v4950, %v4949
        %v4984 = vpack.c.b16 %v4952, %v4951
        %v4985 = vpack.c.b16 %v4954, %v4953
        %v4986 = vpack.c.b16 %v4956, %v4955
        %v4987 = vpack.c.b16 %v4958, %v4957
        %v4988 = vpack.c.b16 %v4960, %v4959
        %v4989 = vpack.c.b16 %v4962, %v4961
        %v4990 = vpack.c.b16 %v4964, %v4963
        %v4991 = vpack.c.b16 %v4966, %v4965
        %v4992 = vpack.c.b16 %v4968, %v4967
        %v4993 = vpack.c.b16 %v4970, %v4969
        %v4994 = vpack.c.b16 %v4972, %v4971
        %v4995 = vpack.c.b16 %v4974, %v4973
        %v4996 = vpack.c.b16 %v4976, %v4975
        %v4997 = vpack.c.b16 %v4978, %v4977
        %v4998 = vpack.c.b16 %v4980, %v4979
        %v5018 = vsel %vm4765, %v4865, 0
        %5020 = vmatprep.subr.bf16.mxu0 0
        %5021 = vmatpush1.bf16.msra.mxu0 %v4981
        %5022 = vmatprep.subr.bf16.mxu0 0
        %5023 = vmatpush1.bf16.msra.mxu0 %v4982
        %5024 = vmatprep.subr.bf16.mxu0 0
        %5025 = vmatpush1.bf16.msra.mxu0 %v4983
        %5026 = vmatprep.subr.bf16.mxu0 0
        %5027 = vmatpush1.bf16.msra.mxu0 %v4984
        %5028 = vmatprep.subr.bf16.mxu0 0
        %5029 = vmatpush1.bf16.msra.mxu0 %v4985
        %5030 = vmatprep.subr.bf16.mxu0 0
        %5031 = vmatpush1.bf16.msra.mxu0 %v4986
        %5032 = vmatprep.subr.bf16.mxu0 0
        %5033 = vmatpush1.bf16.msra.mxu0 %v4987
        %5034 = vmatprep.subr.bf16.mxu0 0
        %5035 = vmatpush1.bf16.msra.mxu0 %v4988
        %5036 = vmatprep.subr.bf16.mxu0 0
        %5037 = vmatpush1.bf16.msra.mxu0 %v4989
        %5038 = vmatprep.subr.bf16.mxu0 0
        %5039 = vmatpush1.bf16.msra.mxu0 %v4990
        %5040 = vmatprep.subr.bf16.mxu0 0
        %5041 = vmatpush1.bf16.msra.mxu0 %v4991
        %5042 = vmatprep.subr.bf16.mxu0 0
        %5043 = vmatpush1.bf16.msra.mxu0 %v4992
        %5044 = vmatprep.subr.bf16.mxu0 0
        %5045 = vmatpush1.bf16.msra.mxu0 %v4993
        %5046 = vmatprep.subr.bf16.mxu0 0
        %5047 = vmatpush1.bf16.msra.mxu0 %v4994
        %5048 = vmatprep.subr.bf16.mxu0 0
        %5049 = vmatpush1.bf16.msra.mxu0 %v4995
        %5050 = vmatprep.subr.bf16.mxu0 0
        %5051 = vmatpush1.bf16.msra.mxu0 %v4996
        %5052 = vmatprep.mubr.bf16.mxu0 %v4864
        %5053 = vmatmul.mubr.bf16.gmra.mrb[0].mxu0 %v4863
        %v5054 = vpop.f32.mrb[0].mxu0
        %v5055 = vadd.f32 %v4907, %v5054
        %v5056 = vpop.f32.mrb[0].mxu0
        %v5057 = vpop.f32.mrb[0].mxu0
        %v5058 = vpop.f32.mrb[0].mxu0
        %5059 = vdwg.mxu0
        %5060 = vmatprep.subr.bf16.mxu0 0
        %5061 = vmatpush1.bf16.msra.mxu0 %v4997
        %5062 = vmatprep.subr.bf16.mxu0 0
        %5063 = vmatpush1.bf16.msra.mxu0 %v4998
        %5064 = vmatprep.subr.bf16.mxu0 0
        %5065 = vmatpush1.bf16.msra.mxu0 0
        %5066 = vmatprep.subr.bf16.mxu0 0
        %5067 = vmatpush1.bf16.msra.mxu0 0
        %5068 = vmatprep.subr.bf16.mxu0 0
        %5069 = vmatpush1.bf16.msra.mxu0 0
        %5070 = vmatprep.subr.bf16.mxu0 0
        %5071 = vmatpush1.bf16.msra.mxu0 0
        %5072 = vmatprep.subr.bf16.mxu0 0
        %5073 = vmatpush1.bf16.msra.mxu0 0
        %5074 = vmatprep.subr.bf16.mxu0 0
        %5075 = vmatpush1.bf16.msra.mxu0 0
        %5076 = vmatprep.subr.bf16.mxu0 0
        %5077 = vmatpush1.bf16.msra.mxu0 0
        %5078 = vmatprep.subr.bf16.mxu0 0
        %5079 = vmatpush1.bf16.msra.mxu0 0
        %5080 = vmatprep.subr.bf16.mxu0 0
        %5081 = vmatpush1.bf16.msra.mxu0 0
        %5082 = vmatprep.subr.bf16.mxu0 0
        %5083 = vmatpush1.bf16.msra.mxu0 0
        %5084 = vmatprep.subr.bf16.mxu0 0
        %5085 = vmatpush1.bf16.msra.mxu0 0
        %5086 = vmatprep.subr.bf16.mxu0 0
        %5087 = vmatpush1.bf16.msra.mxu0 0
        %5088 = vmatprep.subr.bf16.mxu0 0
        %5089 = vmatpush1.bf16.msra.mxu0 0
        %5090 = vmatprep.subr.bf16.mxu0 0
        %5091 = vmatpush1.bf16.msra.mxu0 0
        %5092 = vmatprep.mubr.bf16.mxu0 0
        %5093 = vmatmul.mubr.bf16.gmra.mrb[0].mxu0 %v5018
        %v5094 = vpop.f32.mrb[0].mxu0
        %v5095 = vadd.f32 %v5055, %v5094
        %v5096 = vpop.f32.mrb[0].mxu0
        %v5097 = vpop.f32.mrb[0].mxu0
        %v5098 = vpop.f32.mrb[0].mxu0
        %5099 = vdwg.mxu0
        %v5100 = vmax.f32 %v5095, 0.0
        %v5101 = vrot.slane %v5100, 4
        %v5102 = vsel %vm4781, %v5101, %v5100
        %v5103 = vrot.slane %v5102, 4
        %v5104 = vsel %vm4781, %v5103, %v5100
        %v5106 = vrot.slane %v5104, 1
        %v5108 = vmax.f32 %v5100, %v5106
        %v5109 = vrot.slane %v5108, 4
        %v5110 = vsel %vm4781, %v5109, %v5108
        %v5111 = vrot.slane %v5110, 4
        %v5112 = vsel %vm4781, %v5111, %v5108
        %v5114 = vrot.slane %v5112, 2
        %v5116 = vmax.f32 %v5108, %v5114
        %vm5117 = vcmask 519168
        %5118 = vst.msk [vmem:[#allocation12] sm:$0xf] %vm5117, %v5116
        %v5119 = vld [vmem:[#allocation12] sm:$0x1]
        %vm5120 = vcmask 516096
        %5121 = vst.msk [vmem:[#allocation13] sm:$0x1] %vm5120, %v5119
        %v5122 = vld [vmem:[#allocation13] sm:$0x1]
        %v5123 = vpack.c.bf16 %v5122, %v5122
        %v5124 = vld [vmem:[%s9] sm:$0xf]
        %v5125 = vld [vmem:[%s9 + $0x4] sm:$0xf]
        %v5126 = vld [vmem:[%s9 + $0x8] sm:$0xf]
        %v5127 = vld [vmem:[%s9 + $0xc] sm:$0xf]
        %v5128 = vld [vmem:[%s9 + $0x10] sm:$0xf]
        %v5129 = vld [vmem:[%s9 + $0x14] sm:$0xf]
        %v5130 = vld [vmem:[%s9 + $0x18] sm:$0xf]
        %v5131 = vld [vmem:[%s9 + $0x1c] sm:$0xf]
        %v5132 = vld [vmem:[%s10] sm:$0x1]
        %v5141 = vunpack.c.l.b16 %v5124
        %v5142 = vunpack.c.l.b16 %v5125
        %v5143 = vunpack.c.l.b16 %v5126
        %v5144 = vunpack.c.l.b16 %v5127
        %v5145 = vunpack.c.l.b16 %v5128
        %v5146 = vunpack.c.l.b16 %v5129
        %v5147 = vunpack.c.l.b16 %v5130
        %v5148 = vunpack.c.l.b16 %v5131
        %v5149 = vpack.c.b16 %v5142, %v5141
        %v5150 = vpack.c.b16 %v5144, %v5143
        %v5151 = vpack.c.b16 %v5146, %v5145
        %v5152 = vpack.c.b16 %v5148, %v5147
        %vm5157 = vcmask 523264
        %v5159 = vsel %vm5157, %v5123, 0
        %5161 = vmatprep.subr.bf16.mxu0 0
        %5162 = vmatpush1.bf16.msra.mxu0 %v5149
        %5163 = vmatprep.subr.bf16.mxu0 0
        %5164 = vmatpush1.bf16.msra.mxu0 %v5150
        %5165 = vmatprep.subr.bf16.mxu0 0
        %5166 = vmatpush1.bf16.msra.mxu0 %v5151
        %5167 = vmatprep.subr.bf16.mxu0 0
        %5168 = vmatpush1.bf16.msra.mxu0 %v5152
        %5169 = vmatprep.subr.bf16.mxu0 0
        %5170 = vmatpush1.bf16.msra.mxu0 0
        %5171 = vmatprep.subr.bf16.mxu0 0
        %5172 = vmatpush1.bf16.msra.mxu0 0
        %5173 = vmatprep.subr.bf16.mxu0 0
        %5174 = vmatpush1.bf16.msra.mxu0 0
        %5175 = vmatprep.subr.bf16.mxu0 0
        %5176 = vmatpush1.bf16.msra.mxu0 0
        %5177 = vmatprep.subr.bf16.mxu0 0
        %5178 = vmatpush1.bf16.msra.mxu0 0
        %5179 = vmatprep.subr.bf16.mxu0 0
        %5180 = vmatpush1.bf16.msra.mxu0 0
        %5181 = vmatprep.subr.bf16.mxu0 0
        %5182 = vmatpush1.bf16.msra.mxu0 0
        %5183 = vmatprep.subr.bf16.mxu0 0
        %5184 = vmatpush1.bf16.msra.mxu0 0
        %5185 = vmatprep.subr.bf16.mxu0 0
        %5186 = vmatpush1.bf16.msra.mxu0 0
        %5187 = vmatprep.subr.bf16.mxu0 0
        %5188 = vmatpush1.bf16.msra.mxu0 0
        %5189 = vmatprep.subr.bf16.mxu0 0
        %5190 = vmatpush1.bf16.msra.mxu0 0
        %5191 = vmatprep.subr.bf16.mxu0 0
        %5192 = vmatpush1.bf16.msra.mxu0 0
        %5193 = vmatprep.mubr.bf16.mxu0 0
        %5194 = vmatmul.mubr.bf16.gmra.mrb[0].mxu0 %v5159
        %v5195 = vpop.f32.mrb[0].mxu0
        %v5196 = vadd.f32 %v5132, %v5195
        %v5197 = vpop.f32.mrb[0].mxu0
        %v5198 = vpop.f32.mrb[0].mxu0
        %v5199 = vpop.f32.mrb[0].mxu0
        %5200 = vdwg.mxu0
        %v5201 = vmax.f32 %v5196, 0.0
        %v5202 = vpack.c.bf16 %v5201, %v5201
        %v5203 = vld [vmem:[%s11] sm:$0xf]
        %v5204 = vld [vmem:[%s11 + $0x4] sm:$0xf]
        %v5205 = vld [vmem:[%s11 + $0x8] sm:$0xf]
        %v5206 = vld [vmem:[%s11 + $0xc] sm:$0xf]
        %v5207 = vld [vmem:[%s12] sm:$0x1]
        %v5212 = vunpack.c.l.b16 %v5203
        %v5213 = vunpack.c.l.b16 %v5204
        %v5214 = vunpack.c.l.b16 %v5205
        %v5215 = vunpack.c.l.b16 %v5206
        %v5216 = vpack.c.b16 %v5213, %v5212
        %v5217 = vpack.c.b16 %v5215, %v5214
        %v5221 = vsel %vm4765, %v5202, 0
        %5223 = vmatprep.subr.bf16.mxu0 0
        %5224 = vmatpush1.bf16.msra.mxu0 %v5216
        %5225 = vmatprep.subr.bf16.mxu0 0
        %5226 = vmatpush1.bf16.msra.mxu0 %v5217
        %5227 = vmatprep.subr.bf16.mxu0 0
        %5228 = vmatpush1.bf16.msra.mxu0 0
        %5229 = vmatprep.subr.bf16.mxu0 0
        %5230 = vmatpush1.bf16.msra.mxu0 0
        %5231 = vmatprep.subr.bf16.mxu0 0
        %5232 = vmatpush1.bf16.msra.mxu0 0
        %5233 = vmatprep.subr.bf16.mxu0 0
        %5234 = vmatpush1.bf16.msra.mxu0 0
        %5235 = vmatprep.subr.bf16.mxu0 0
        %5236 = vmatpush1.bf16.msra.mxu0 0
        %5237 = vmatprep.subr.bf16.mxu0 0
        %5238 = vmatpush1.bf16.msra.mxu0 0
        %5239 = vmatprep.subr.bf16.mxu0 0
        %5240 = vmatpush1.bf16.msra.mxu0 0
        %5241 = vmatprep.subr.bf16.mxu0 0
        %5242 = vmatpush1.bf16.msra.mxu0 0
        %5243 = vmatprep.subr.bf16.mxu0 0
        %5244 = vmatpush1.bf16.msra.mxu0 0
        %5245 = vmatprep.subr.bf16.mxu0 0
        %5246 = vmatpush1.bf16.msra.mxu0 0
        %5247 = vmatprep.subr.bf16.mxu0 0
        %5248 = vmatpush1.bf16.msra.mxu0 0
        %5249 = vmatprep.subr.bf16.mxu0 0
        %5250 = vmatpush1.bf16.msra.mxu0 0
        %5251 = vmatprep.subr.bf16.mxu0 0
        %5252 = vmatpush1.bf16.msra.mxu0 0
        %5253 = vmatprep.subr.bf16.mxu0 0
        %5254 = vmatpush1.bf16.msra.mxu0 0
        %5255 = vmatprep.mubr.bf16.mxu0 0
        %5256 = vmatmul.mubr.bf16.gmra.mrb[0].mxu0 %v5221
        %v5257 = vpop.f32.mrb[0].mxu0
        %v5258 = vadd.f32 %v5207, %v5257
        %v5259 = vpop.f32.mrb[0].mxu0
        %v5260 = vpop.f32.mrb[0].mxu0
        %v5261 = vpop.f32.mrb[0].mxu0
        %5262 = vdwg.mxu0
        %v5263 = vmax.f32 %v5258, 0.0
        %v5264 = vpack.c.bf16 %v5263, %v5263
        %v5265 = vld [vmem:[%s13] sm:$0xf]
        %v5266 = vld [vmem:[%s13 + $0x4] sm:$0xf]
        %v5267 = vld [vmem:[%s14] sm:$0x1]
        %v5270 = vunpack.c.l.b16 %v5265
        %v5271 = vunpack.c.l.b16 %v5266
        %v5272 = vpack.c.b16 %v5271, %v5270
        %v5275 = vsel %vm4427, %v5264, 0
        %5277 = vmatprep.subr.bf16.mxu0 0
        %5278 = vmatpush1.bf16.msra.mxu0 %v5272
        %5279 = vmatprep.subr.bf16.mxu0 0
        %5280 = vmatpush1.bf16.msra.mxu0 0
        %5281 = vmatprep.subr.bf16.mxu0 0
        %5282 = vmatpush1.bf16.msra.mxu0 0
        %5283 = vmatprep.subr.bf16.mxu0 0
        %5284 = vmatpush1.bf16.msra.mxu0 0
        %5285 = vmatprep.subr.bf16.mxu0 0
        %5286 = vmatpush1.bf16.msra.mxu0 0
        %5287 = vmatprep.subr.bf16.mxu0 0
        %5288 = vmatpush1.bf16.msra.mxu0 0
        %5289 = vmatprep.subr.bf16.mxu0 0
        %5290 = vmatpush1.bf16.msra.mxu0 0
        %5291 = vmatprep.subr.bf16.mxu0 0
        %5292 = vmatpush1.bf16.msra.mxu0 0
        %5293 = vmatprep.subr.bf16.mxu0 0
        %5294 = vmatpush1.bf16.msra.mxu0 0
        %5295 = vmatprep.subr.bf16.mxu0 0
        %5296 = vmatpush1.bf16.msra.mxu0 0
        %5297 = vmatprep.subr.bf16.mxu0 0
        %5298 = vmatpush1.bf16.msra.mxu0 0
        %5299 = vmatprep.subr.bf16.mxu0 0
        %5300 = vmatpush1.bf16.msra.mxu0 0
        %5301 = vmatprep.subr.bf16.mxu0 0
        %5302 = vmatpush1.bf16.msra.mxu0 0
        %5303 = vmatprep.subr.bf16.mxu0 0
        %5304 = vmatpush1.bf16.msra.mxu0 0
        %5305 = vmatprep.subr.bf16.mxu0 0
        %5306 = vmatpush1.bf16.msra.mxu0 0
        %5307 = vmatprep.subr.bf16.mxu0 0
        %5308 = vmatpush1.bf16.msra.mxu0 0
        %5309 = vmatprep.mubr.bf16.mxu0 0
        %5310 = vmatmul.mubr.bf16.gmra.mrb[0].mxu0 %v5275
        %v5311 = vpop.f32.mrb[0].mxu0
        %v5312 = vadd.f32 %v5267, %v5311
        %v5313 = vpop.f32.mrb[0].mxu0
        %v5314 = vpop.f32.mrb[0].mxu0
        %v5315 = vpop.f32.mrb[0].mxu0
        %5316 = vdwg.mxu0
        %vm5317 = vcmask 73728
        %5318 = vst.msk [vmem:[%s486] sm:$0x1] %vm5317, %v5312
        %s5319 = sand.u32 %s357, 1
        %s5320 = scalar_lea.sflag [#allocation15], %s5319
        %s5321 = sand.u32 %s357, 1
        %s5322 = scalar_lea.vmem [#allocation14], %s5321
        // Predicated region
        $region81: #{cnn_forward.1} parent=79 // pred_check
          %p5323 = pneg %p367
        $region82: #{cnn_forward.1} parent=79 // pred_check_branch
          %5325 = sbr.rel (%p5323) target = $region84
        $region83: #{cnn_forward.1} parent=79 // pred_region
          %s5327 = ssub.s32 16, 16
          %5328 = vsyncadd %s5320, %s5327
          %s5329 = smul.addr %s29, 16
          %s5330 = scalar_lea.hbm %s15, %s5329
          %s5332 = sshll.u32 %s5322, 4
          %s5333 = int_to_ptr.vmem [resolvable:$true] %s5332
          %5335 = dma.vmem_to_hbm [thread:$0]  %s5333, 16, %s5330, %s5320
        $region84: #{cnn_forward.1} parent=79 // pred_fallthru
          _
      $region80: #{cnn_forward.1} parent=5 // pred_fallthru
        _
      %p5336 = scmp.le.s32.totalorder 2, %s24
      // Predicated region
      $region85: #{cnn_forward.1} parent=5 // pred_check
        %p5337 = pneg %p5336
      $region86: #{cnn_forward.1} parent=5 // pred_check_branch
        %5339 = sbr.rel (%p5337) target = $region88
      $region87: #{cnn_forward.1} parent=5 // pred_region
        %s5340 = ssub.s32 %s24, 2
        // Predicated region
        $region89: #{cnn_forward.1} parent=87 // pred_check
          %p5341 = pneg %p373
        $region90: #{cnn_forward.1} parent=87 // pred_check_branch
          %5343 = sbr.rel (%p5341) target = $region92
        $region91: #{cnn_forward.1} parent=87 // pred_region
          %s5344 = sand.u32 %s358, 1
          %s5345 = scalar_lea.sflag [#allocation15], %s5344
          %s5346 = sand.u32 %s358, 1
          %s5347 = scalar_lea.vmem [#allocation14], %s5346
          %5348 = dma.done %s5345, 16
        $region92: #{cnn_forward.1} parent=87 // pred_fallthru
          _
      $region88: #{cnn_forward.1} parent=5 // pred_fallthru
        _
    $region6: #{cnn_forward.1} parent=1 // loop_footer
      %s28 = sadd.s32 1, %s24
    $region7: #{cnn_forward.1} parent=1 // loop_footer_branch
      %23 = sbr.rel target = $region3
    $region8: #{cnn_forward.1} parent=1 // loop_exit
      _
    %5349 = vsyncpa [#allocation15], 1
    %s5350 = scalar_lea.sflag [#allocation15], 1
    %5351 = vsyncpa %s5350, 1

</llo_original>
